<compile_context>
chip_gen: v6e
topology: v6e:2x2x1
jax: 0.10.0
libtpu: 0.0.40
codegen_flags: <defaults>
</compile_context>

<pallas_src>
import functools

import jax
import jax.numpy as jnp
from jax import lax
from jax.experimental import pallas as pl
from jax.experimental.pallas import tpu as pltpu

_EPS = 1e-5


def _vmem_limit_bytes():
    """Per-generation scoped-VMEM budget: ~3/4 of physical, capped at 96 MiB."""
    try:
        cap = int(pltpu.get_tpu_info().vmem_capacity_bytes)  # 64 MiB v7x, 128 MiB v5e/v6e
    except Exception:
        cap = 64 * 1024 * 1024
    return int(min(96 * 1024 * 1024, cap - cap // 4))


# --------------------------------------------------------------------- in-kernel helpers
def _affine_relu(t, scale, shift):
    """max(t * scale + shift, 0) with per-channel (dim 1) scale/shift.

    t: (1, C, H, W) f32;  scale, shift: (1, C) f32 (folded BN affine)."""
    C = t.shape[1]
    y = t * scale.reshape(1, C, 1, 1) + shift.reshape(1, C, 1, 1)
    return jnp.maximum(y, 0.0)


def _chan_sum_sq(t):
    """Per-channel sum / sum-of-squares of a (1, C, H, W) block -> (1, 2, C)."""
    s = jnp.sum(jnp.sum(t, axis=3), axis=2)           # (1, C)
    sq = jnp.sum(jnp.sum(t * t, axis=3), axis=2)      # (1, C)
    return jnp.concatenate([s, sq], axis=0)[None]     # (1, 2, C)


def _conv3x3_flat(t, w_flat, bias_col, dil):
    """3x3 conv, padding=(1,0), dilation=(1,dil), as ONE MXU matmul with the
    weights as LHS so the result is natively (Co, H*Wo) — lane-dense spatial.

    t: (1, C, H, W) f32;  w_flat: (Co, 9*C), K ordered (kh, kw, c);
    bias_col: (Co, 1).  Returns (Co, H*Wo) f32 with Wo = W - 2*dil.
    """
    _, C, H, W = t.shape
    Wo = W - 2 * dil
    # Height pad by one zero row each side (BN+ReLU output, so must pad here).
    zrow = jnp.zeros((1, C, 1, W), t.dtype)
    tp = jnp.concatenate([zrow, t, zrow], axis=2)                    # (1, C, H+2, W)
    # im2col: contraction dim K = 9*C, tap-major / channel-minor (matches w_flat).
    # TODO(synk): for production widths (W >~ 512) add a W grid axis with a
    # 2*dil halo so this 9x slab stays bounded on v7x's 64 MiB VMEM.
    cols = jnp.concatenate(
        [tp[:, :, kh:kh + H, kw * dil:kw * dil + Wo]
         for kh in range(3) for kw in range(3)], axis=1)             # (1, 9C, H, Wo)
    rhs = cols.reshape(9 * C, H * Wo).astype(w_flat.dtype)           # bf16 on fast path
    out = jnp.dot(w_flat, rhs, preferred_element_type=jnp.float32)   # (Co, H*Wo)
    return out + bias_col


# --------------------------------------------------------------------------------- kernels
def _make_stats_kernel(pooled, stride_h=1):
    """Stage 1: [MaxPool over H] + per-sample BN1 partial statistics."""
    if pooled:
        def kernel(x5_ref, xp_ref, p_ref):
            x5 = x5_ref[...]                      # (1, s, Ci, Hp, W)
            xp = x5[:, 0]
            for k in range(1, stride_h):          # pool over an OUTER dim: cheap max
                xp = jnp.maximum(xp, x5[:, k])
            xp_ref[...] = xp                      # pooled x, reused by stages 2-3
            p_ref[...] = _chan_sum_sq(xp)
    else:
        def kernel(x_ref, p_ref):
            p_ref[...] = _chan_sum_sq(x_ref[...])
    return kernel


def _make_conv1_kernel(time_dilation):
    """Stage 2: BN1 affine + ReLU + 3x3 dilated conv + per-sample BN2 stats."""
    def kernel(xp_ref, sc1_ref, sh1_ref, w1_ref, b1_ref, t1_ref, p2_ref):
        y = _affine_relu(xp_ref[...], sc1_ref[...], sh1_ref[...])     # (1, Ci, Hp, W)
        Co = w1_ref.shape[0]
        Hp = y.shape[2]
        Wc = y.shape[3] - 2 * time_dilation
        t1 = _conv3x3_flat(y, w1_ref[...], b1_ref[...], time_dilation)
        t1 = t1.reshape(1, Co, Hp, Wc)                                # lane-dense (W last)
        t1_ref[...] = t1
        p2_ref[...] = _chan_sum_sq(t1)
    return kernel


def _make_conv2_kernel(has_proj):
    """Stage 3: BN2 affine + ReLU + 3x3 conv + projection + residual."""
    def kernel(*refs):
        if has_proj:
            (xpc_ref, t1_ref, sc2_ref, sh2_ref, w2_ref, b2_ref,
             wp_ref, o_ref) = refs
        else:
            (xpc_ref, t1_ref, sc2_ref, sh2_ref, w2_ref, b2_ref,
             o_ref) = refs

        z = _affine_relu(t1_ref[...], sc2_ref[...], sh2_ref[...])     # (1, Co, Hp, Wc)
        out = _conv3x3_flat(z, w2_ref[...], b2_ref[...], 1)           # (Co, Hp*Wo)

        xs = xpc_ref[...]                                             # (1, Ci, Hp, Wo)
        Ci, Hp, Wo = xs.shape[1], xs.shape[2], xs.shape[3]
        xs_flat = xs.reshape(Ci, Hp * Wo)
        if has_proj:
            proj = jnp.dot(wp_ref[...], xs_flat.astype(wp_ref.dtype),
                           preferred_element_type=jnp.float32)        # (Co, Hp*Wo)
        else:
            proj = xs_flat          # nn.Identity (Ci == Co): plain residual add

        # Lane-dense store: (1, Co, Hp*Wo); the wrapper's final reshape is free.
        o_ref[...] = (out + proj)[None].astype(o_ref.dtype)
    return kernel


# --------------------------------------------------------------------------------- wrapper
def _bn_affine(stats, gamma, beta, count):
    """Fold global batch stats + BN affine into per-channel scale/shift."""
    mean = stats[0] / count
    var = stats[1] / count - mean * mean        # biased variance (PyTorch training norm)
    scale = gamma * lax.rsqrt(var + _EPS)
    shift = beta - mean * scale
    return (scale.reshape(1, -1).astype(jnp.float32),
            shift.reshape(1, -1).astype(jnp.float32))


@functools.partial(jax.jit, static_argnames=("stride_h", "time_dilation", "use_bf16"))
def resblock_pallas(x_nchw, params, *, stride_h=1, time_dilation=1, use_bf16=False):
    N, Ci, H, W = x_nchw.shape
    Co = params['w1'].shape[0]
    assert H % stride_h == 0
    strip = 1 + time_dilation
    Hp = H // stride_h
    Wc = W - 2 * time_dilation          # width after the dilated conv1 (valid in W)
    Wo = W - 2 * strip                  # final width
    has_proj = Ci != Co
    cnt1 = float(N * Hp * W)            # BN1 per-channel element count
    cnt2 = float(N * Hp * Wc)           # BN2 per-channel element count

    f32 = jnp.float32
    mxu = jnp.bfloat16 if use_bf16 else f32     # bf16 MXU operands on v6e/v7x (~2x)
    x = x_nchw.astype(f32)

    # Weights as MXU LHS: (Co, 9*C), K ordered (kh, kw, c). Biases as (Co, 1).
    w1f = jnp.transpose(params['w1'], (0, 2, 3, 1)).reshape(Co, 9 * Ci).astype(mxu)
    w2f = jnp.transpose(params['w2'], (0, 2, 3, 1)).reshape(Co, 9 * Co).astype(mxu)
    b1 = params['b1'].reshape(Co, 1).astype(f32)
    b2 = params['b2'].reshape(Co, 1).astype(f32)

    cp = pltpu.CompilerParams(dimension_semantics=("parallel",),
                              vmem_limit_bytes=_vmem_limit_bytes())

    def full_spec(a):       # small fully-resident parameter block
        return pl.BlockSpec(a.shape, lambda i: (0,) * a.ndim)

    # ---- stage 1: MaxPool (once) + per-sample BN1 partial statistics ----------
    # TODO(synk): for large N, process several samples per grid step here.
    if stride_h != 1:
        # (N, Ci, H, W) -> (N, s, Ci, Hp, W): the pooling window becomes an OUTER
        # dim so the in-kernel max is a plain elementwise reduce (layout plumbing).
        x5 = x.reshape(N, Ci, Hp, stride_h, W).transpose(0, 3, 1, 2, 4)
        xp, part1 = pl.pallas_call(
            _make_stats_kernel(True, stride_h),
            out_shape=(jax.ShapeDtypeStruct((N, Ci, Hp, W), f32),
                       jax.ShapeDtypeStruct((N, 2, Ci), f32)),
            grid=(N,),
            in_specs=[pl.BlockSpec((1, stride_h, Ci, Hp, W),
                                   lambda i: (i, 0, 0, 0, 0))],
            out_specs=(pl.BlockSpec((1, Ci, Hp, W), lambda i: (i, 0, 0, 0)),
                       pl.BlockSpec((1, 2, Ci), lambda i: (i, 0, 0))),
            compiler_params=cp,
        )(x5)
    else:
        xp = x
        part1 = pl.pallas_call(
            _make_stats_kernel(False),
            out_shape=jax.ShapeDtypeStruct((N, 2, Ci), f32),
            grid=(N,),
            in_specs=[pl.BlockSpec((1, Ci, H, W), lambda i: (i, 0, 0, 0))],
            out_specs=pl.BlockSpec((1, 2, Ci), lambda i: (i, 0, 0)),
            compiler_params=cp,
        )(x)

    sc1, sh1 = _bn_affine(part1.sum(axis=0), params['bn1_g'].astype(f32),
                          params['bn1_b'].astype(f32), cnt1)

    # ---- stage 2: BN1 + ReLU + dilated 3x3 conv (flipped im2col matmul) + BN2 stats
    xp_spec = pl.BlockSpec((1, Ci, Hp, W), lambda i: (i, 0, 0, 0))
    t1, part2 = pl.pallas_call(
        _make_conv1_kernel(time_dilation),
        out_shape=(jax.ShapeDtypeStruct((N, Co, Hp, Wc), f32),
                   jax.ShapeDtypeStruct((N, 2, Co), f32)),
        grid=(N,),
        in_specs=[xp_spec, full_spec(sc1), full_spec(sh1),
                  full_spec(w1f), full_spec(b1)],
        out_specs=(pl.BlockSpec((1, Co, Hp, Wc), lambda i: (i, 0, 0, 0)),
                   pl.BlockSpec((1, 2, Co), lambda i: (i, 0, 0))),
        compiler_params=cp,
    )(xp, sc1, sh1, w1f, b1)

    sc2, sh2 = _bn_affine(part2.sum(axis=0), params['bn2_g'].astype(f32),
                          params['bn2_b'].astype(f32), cnt2)

    # ---- stage 3: BN2 + ReLU + 3x3 conv + projection + residual ----------------
    xpc = xp[:, :, :, strip:W - strip]     # crop in the wrapper (pool ∘ crop commute)
    ins = [xpc, t1, sc2, sh2, w2f, b2]
    in_specs = [pl.BlockSpec((1, Ci, Hp, Wo), lambda i: (i, 0, 0, 0)),
                pl.BlockSpec((1, Co, Hp, Wc), lambda i: (i, 0, 0, 0)),
                full_spec(sc2), full_spec(sh2), full_spec(w2f), full_spec(b2)]
    if has_proj:
        wp = params['wp'][:, :, 0, 0].astype(mxu)          # (Co, Ci), MXU LHS
        ins.append(wp)
        in_specs.append(full_spec(wp))

    out_flat = pl.pallas_call(
        _make_conv2_kernel(has_proj),
        out_shape=jax.ShapeDtypeStruct((N, Co, Hp * Wo), f32),
        grid=(N,),
        in_specs=in_specs,
        out_specs=pl.BlockSpec((1, Co, Hp * Wo), lambda i: (i, 0, 0)),
        compiler_params=cp,
    )(*ins)

    # Contiguous metadata reshape (free) — output is already NCHW-ordered.
    return out_flat.reshape(N, Co, Hp, Wo)


# --------------------------------------------------------------------------- test utils
def make_params(key, in_channels, out_channels):
    ks = jax.random.split(key, 9)
    p = {
        'bn1_g': 1.0 + 0.1 * jax.random.normal(ks[0], (in_channels,), jnp.float32),
        'bn1_b': 0.1 * jax.random.normal(ks[1], (in_channels,), jnp.float32),
        'w1': 0.2 * jax.random.normal(ks[2], (out_channels, in_channels, 3, 3), jnp.float32),
        'b1': 0.05 * jax.random.normal(ks[3], (out_channels,), jnp.float32),
        'bn2_g': 1.0 + 0.1 * jax.random.normal(ks[4], (out_channels,), jnp.float32),
        'bn2_b': 0.1 * jax.random.normal(ks[5], (out_channels,), jnp.float32),
        'w2': 0.2 * jax.random.normal(ks[6], (out_channels, out_channels, 3, 3), jnp.float32),
        'b2': 0.05 * jax.random.normal(ks[7], (out_channels,), jnp.float32),
    }
    if in_channels != out_channels:
        p['wp'] = 0.2 * jax.random.normal(ks[8], (out_channels, in_channels, 1, 1), jnp.float32)
    return p


def resblock_ref(x, p, *, stride_h=1, time_dilation=1):
    """Pure-JAX NCHW reference (mirrors the PyTorch module in training mode)."""
    strip = 1 + time_dilation
    dn = ('NCHW', 'OIHW', 'NCHW')

    def bn_relu(t, g, b):
        mean = jnp.mean(t, axis=(0, 2, 3), keepdims=True)
        var = jnp.mean((t - mean) ** 2, axis=(0, 2, 3), keepdims=True)
        y = (t - mean) * lax.rsqrt(var + _EPS) * g.reshape(1, -1, 1, 1) + b.reshape(1, -1, 1, 1)
        return jnp.maximum(y, 0.0)

    def maxpool_h(t, k):
        n, c, h, w = t.shape
        return t.reshape(n, c, h // k, k, w).max(axis=3)

    t = x
    if stride_h != 1:
        t = maxpool_h(t, stride_h)
    t = bn_relu(t, p['bn1_g'], p['bn1_b'])
    t = lax.conv_general_dilated(t, p['w1'], (1, 1), ((1, 1), (0, 0)),
                                 rhs_dilation=(1, time_dilation),
                                 dimension_numbers=dn) + p['b1'].reshape(1, -1, 1, 1)
    t = bn_relu(t, p['bn2_g'], p['bn2_b'])
    t = lax.conv_general_dilated(t, p['w2'], (1, 1), ((1, 1), (0, 0)),
                                 dimension_numbers=dn) + p['b2'].reshape(1, -1, 1, 1)
    xs = x[..., strip:-strip]
    if stride_h != 1:
        xs = maxpool_h(xs, stride_h)
    if 'wp' in p:
        xs = lax.conv_general_dilated(xs, p['wp'], (1, 1), 'VALID', dimension_numbers=dn)
    return t + xs


if __name__ == "__main__":
    key = jax.random.PRNGKey(0)
    kx, kp, kx2, kp2 = jax.random.split(key, 4)

    # Config A: MaxPool, dilation, channel-changing 1x1 projection.
    xA = jax.random.normal(kx, (2, 4, 16, 16), jnp.float32)           # NCHW, like PyTorch
    pA = make_params(kp, 4, 8)
    outA = jax.block_until_ready(resblock_pallas(xA, pA, stride_h=2, time_dilation=2))
    refA = resblock_ref(xA, pA, stride_h=2, time_dilation=2)
    assert outA.shape == refA.shape, (outA.shape, refA.shape)
    if not bool(jnp.allclose(outA, refA, atol=1e-4, rtol=1e-4)):
        raise AssertionError(
            f"config A mismatch, max abs err = {float(jnp.max(jnp.abs(outA - refA)))}")

    # Config B: no pooling, identity projection (projection matmul skipped).
    xB = jax.random.normal(kx2, (2, 8, 16, 16), jnp.float32)
    pB = make_params(kp2, 8, 8)
    outB = jax.block_until_ready(resblock_pallas(xB, pB, stride_h=1, time_dilation=1))
    refB = resblock_ref(xB, pB, stride_h=1, time_dilation=1)
    assert outB.shape == refB.shape, (outB.shape, refB.shape)
    if not bool(jnp.allclose(outB, refB, atol=1e-4, rtol=1e-4)):
        raise AssertionError(
            f"config B mismatch, max abs err = {float(jnp.max(jnp.abs(outB - refB)))}")

    # Config C: bf16 MXU operands (v6e/v7x fast path), f32 accumulate — looser check.
    outC = jax.block_until_ready(
        resblock_pallas(xA, pA, stride_h=2, time_dilation=2, use_bf16=True))
    if not bool(jnp.allclose(outC, refA, atol=0.15, rtol=0.05)):
        raise AssertionError(
            f"config C (bf16) mismatch, max abs err = {float(jnp.max(jnp.abs(outC - refA)))}")

    print("KERNEL_OK")
</pallas_src>

<mosaic_0001>
module attributes {stable_mosaic.version = 11 : i64} {
  func.func @kernel(%arg0: i32, %arg1: memref<1x2x4x8x16xf32, #tpu.memory_space<vmem>>, %arg2: memref<1x4x8x16xf32, #tpu.memory_space<vmem>>, %arg3: memref<1x2x4xf32, #tpu.memory_space<vmem>>) attributes {dimension_semantics = [#tpu.dimension_semantics<parallel>], iteration_bounds = array<i64: 2>, scalar_prefetch = 0 : i64, scratch_operands = 0 : i64, tpu.core_type = #tpu.core_type<tc>, window_params = [{transform_indices = @transform_0, window_bounds = array<i64: 1, 2, 4, 8, 16>}, {transform_indices = @transform_1, window_bounds = array<i64: 1, 4, 8, 16>}, {transform_indices = @transform_2, window_bounds = array<i64: 1, 2, 4>}]} {
    %c0 = arith.constant 0 : index
    %c0_0 = arith.constant 0 : index
    %c0_1 = arith.constant 0 : index
    %c0_2 = arith.constant 0 : index
    %c0_3 = arith.constant 0 : index
    %0 = vector.load %arg1[%c0, %c0_0, %c0_1, %c0_2, %c0_3] : memref<1x2x4x8x16xf32, #tpu.memory_space<vmem>>, vector<1x2x4x8x16xf32>
    %1 = vector.extract_strided_slice %0 {offsets = [0, 0, 0, 0, 0], sizes = [1, 1, 4, 8, 16], strides = [1, 1, 1, 1, 1]} : vector<1x2x4x8x16xf32> to vector<1x1x4x8x16xf32>
    %2 = vector.shape_cast %1 : vector<1x1x4x8x16xf32> to vector<1x4x8x16xf32>
    %3 = vector.extract_strided_slice %0 {offsets = [0, 1, 0, 0, 0], sizes = [1, 1, 4, 8, 16], strides = [1, 1, 1, 1, 1]} : vector<1x2x4x8x16xf32> to vector<1x1x4x8x16xf32>
    %4 = vector.shape_cast %3 : vector<1x1x4x8x16xf32> to vector<1x4x8x16xf32>
    %5 = arith.maximumf %2, %4 : vector<1x4x8x16xf32>
    %c0_4 = arith.constant 0 : index
    %c0_5 = arith.constant 0 : index
    %c0_6 = arith.constant 0 : index
    %c0_7 = arith.constant 0 : index
    %6 = vector.load %arg2[%c0_4, %c0_5, %c0_6, %c0_7] : memref<1x4x8x16xf32, #tpu.memory_space<vmem>>, vector<1x4x8x16xf32>
    tpu.vector_store %arg2[%c0_4, %c0_5, %c0_6, %c0_7], %5 {strides = array<i32>} : memref<1x4x8x16xf32, #tpu.memory_space<vmem>>, vector<1x4x8x16xf32>,
    %cst = arith.constant dense<0.000000e+00> : vector<1x4x8xf32>
    %7 = vector.multi_reduction <add>, %5, %cst [3] : vector<1x4x8x16xf32> to vector<1x4x8xf32>
    %cst_8 = arith.constant dense<0.000000e+00> : vector<1x4xf32>
    %8 = vector.multi_reduction <add>, %7, %cst_8 [2] : vector<1x4x8xf32> to vector<1x4xf32>
    %9 = arith.mulf %5, %5 : vector<1x4x8x16xf32>
    %cst_9 = arith.constant dense<0.000000e+00> : vector<1x4x8xf32>
    %10 = vector.multi_reduction <add>, %9, %cst_9 [3] : vector<1x4x8x16xf32> to vector<1x4x8xf32>
    %cst_10 = arith.constant dense<0.000000e+00> : vector<1x4xf32>
    %11 = vector.multi_reduction <add>, %10, %cst_10 [2] : vector<1x4x8xf32> to vector<1x4xf32>
    %12 = tpu.concatenate %8, %11 in 0 : vector<1x4xf32>, vector<1x4xf32> -> vector<2x4xf32>
    %13 = vector.shape_cast %12 : vector<2x4xf32> to vector<1x2x4xf32>
    %c0_11 = arith.constant 0 : index
    %c0_12 = arith.constant 0 : index
    %c0_13 = arith.constant 0 : index
    %14 = vector.load %arg3[%c0_11, %c0_12, %c0_13] : memref<1x2x4xf32, #tpu.memory_space<vmem>>, vector<1x2x4xf32>
    tpu.vector_store %arg3[%c0_11, %c0_12, %c0_13], %13 {strides = array<i32>} : memref<1x2x4xf32, #tpu.memory_space<vmem>>, vector<1x2x4xf32>,
    return
  }
  func.func @transform_0(%arg0: i32) -> (i32, i32, i32, i32, i32) {
    %c0_i32 = arith.constant 0 : i32
    %c0_i32_0 = arith.constant 0 : i32
    %c0_i32_1 = arith.constant 0 : i32
    %c0_i32_2 = arith.constant 0 : i32
    %c0_i32_3 = arith.constant 0 : i32
    return %arg0, %c0_i32, %c0_i32_0, %c0_i32_1, %c0_i32_2 : i32, i32, i32, i32, i32
  }
  func.func @transform_1(%arg0: i32) -> (i32, i32, i32, i32) {
    %c0_i32 = arith.constant 0 : i32
    %c0_i32_0 = arith.constant 0 : i32
    %c0_i32_1 = arith.constant 0 : i32
    %c0_i32_2 = arith.constant 0 : i32
    return %arg0, %c0_i32, %c0_i32_0, %c0_i32_1 : i32, i32, i32, i32
  }
  func.func @transform_2(%arg0: i32) -> (i32, i32, i32) {
    %c0_i32 = arith.constant 0 : i32
    %c0_i32_0 = arith.constant 0 : i32
    %c0_i32_1 = arith.constant 0 : i32
    return %arg0, %c0_i32, %c0_i32_0 : i32, i32, i32
  }
}

module attributes {stable_mosaic.version = 11 : i64} {
  func.func @kernel(%arg0: i32, %arg1: memref<1x4x8x16xf32, #tpu.memory_space<vmem>>, %arg2: memref<1x4xf32, #tpu.memory_space<vmem>>, %arg3: memref<1x4xf32, #tpu.memory_space<vmem>>, %arg4: memref<8x36xf32, #tpu.memory_space<vmem>>, %arg5: memref<8x1xf32, #tpu.memory_space<vmem>>, %arg6: memref<1x8x8x12xf32, #tpu.memory_space<vmem>>, %arg7: memref<1x2x8xf32, #tpu.memory_space<vmem>>) attributes {dimension_semantics = [#tpu.dimension_semantics<parallel>], iteration_bounds = array<i64: 2>, scalar_prefetch = 0 : i64, scratch_operands = 0 : i64, tpu.core_type = #tpu.core_type<tc>, window_params = [{transform_indices = @transform_0, window_bounds = array<i64: 1, 4, 8, 16>}, {pipeline_mode = #tpu.pipeline_mode<synchronous>, transform_indices = @transform_1, window_bounds = array<i64: 1, 4>}, {pipeline_mode = #tpu.pipeline_mode<synchronous>, transform_indices = @transform_2, window_bounds = array<i64: 1, 4>}, {pipeline_mode = #tpu.pipeline_mode<synchronous>, transform_indices = @transform_3, window_bounds = array<i64: 8, 36>}, {pipeline_mode = #tpu.pipeline_mode<synchronous>, transform_indices = @transform_4, window_bounds = array<i64: 8, 1>}, {transform_indices = @transform_5, window_bounds = array<i64: 1, 8, 8, 12>}, {transform_indices = @transform_6, window_bounds = array<i64: 1, 2, 8>}]} {
    %c0 = arith.constant 0 : index
    %c0_0 = arith.constant 0 : index
    %c0_1 = arith.constant 0 : index
    %c0_2 = arith.constant 0 : index
    %0 = vector.load %arg1[%c0, %c0_0, %c0_1, %c0_2] : memref<1x4x8x16xf32, #tpu.memory_space<vmem>>, vector<1x4x8x16xf32>
    %c0_3 = arith.constant 0 : index
    %c0_4 = arith.constant 0 : index
    %1 = vector.load %arg2[%c0_3, %c0_4] : memref<1x4xf32, #tpu.memory_space<vmem>>, vector<1x4xf32>
    %c0_5 = arith.constant 0 : index
    %c0_6 = arith.constant 0 : index
    %2 = vector.load %arg3[%c0_5, %c0_6] : memref<1x4xf32, #tpu.memory_space<vmem>>, vector<1x4xf32>
    %3 = vector.shape_cast %1 : vector<1x4xf32> to vector<1x4x1x1xf32>
    %4 = vector.broadcast %3 : vector<1x4x1x1xf32> to vector<1x4x8x16xf32>
    %5 = arith.mulf %0, %4 : vector<1x4x8x16xf32>
    %6 = vector.shape_cast %2 : vector<1x4xf32> to vector<1x4x1x1xf32>
    %7 = vector.broadcast %6 : vector<1x4x1x1xf32> to vector<1x4x8x16xf32>
    %8 = arith.addf %5, %7 : vector<1x4x8x16xf32>
    %cst = arith.constant 0.000000e+00 : f32
    %9 = vector.broadcast %cst : f32 to vector<1x4x8x16xf32>
    %10 = arith.maximumf %8, %9 : vector<1x4x8x16xf32>
    %c0_7 = arith.constant 0 : index
    %c0_8 = arith.constant 0 : index
    %11 = vector.load %arg4[%c0_7, %c0_8] : memref<8x36xf32, #tpu.memory_space<vmem>>, vector<8x36xf32>
    %c0_9 = arith.constant 0 : index
    %c0_10 = arith.constant 0 : index
    %12 = vector.load %arg5[%c0_9, %c0_10] : memref<8x1xf32, #tpu.memory_space<vmem>>, vector<8x1xf32>
    %cst_11 = arith.constant 0.000000e+00 : f32
    %13 = vector.broadcast %cst_11 : f32 to vector<1x4x1x16xf32>
    %14 = tpu.concatenate %13, %10, %13 in 2 : vector<1x4x1x16xf32>, vector<1x4x8x16xf32>, vector<1x4x1x16xf32> -> vector<1x4x10x16xf32>
    %15 = vector.extract_strided_slice %14 {offsets = [0, 0, 0, 0], sizes = [1, 4, 8, 12], strides = [1, 1, 1, 1]} : vector<1x4x10x16xf32> to vector<1x4x8x12xf32>
    %16 = vector.extract_strided_slice %14 {offsets = [0, 0, 0, 2], sizes = [1, 4, 8, 12], strides = [1, 1, 1, 1]} : vector<1x4x10x16xf32> to vector<1x4x8x12xf32>
    %17 = vector.extract_strided_slice %14 {offsets = [0, 0, 0, 4], sizes = [1, 4, 8, 12], strides = [1, 1, 1, 1]} : vector<1x4x10x16xf32> to vector<1x4x8x12xf32>
    %18 = vector.extract_strided_slice %14 {offsets = [0, 0, 1, 0], sizes = [1, 4, 8, 12], strides = [1, 1, 1, 1]} : vector<1x4x10x16xf32> to vector<1x4x8x12xf32>
    %19 = vector.extract_strided_slice %14 {offsets = [0, 0, 1, 2], sizes = [1, 4, 8, 12], strides = [1, 1, 1, 1]} : vector<1x4x10x16xf32> to vector<1x4x8x12xf32>
    %20 = vector.extract_strided_slice %14 {offsets = [0, 0, 1, 4], sizes = [1, 4, 8, 12], strides = [1, 1, 1, 1]} : vector<1x4x10x16xf32> to vector<1x4x8x12xf32>
    %21 = vector.extract_strided_slice %14 {offsets = [0, 0, 2, 0], sizes = [1, 4, 8, 12], strides = [1, 1, 1, 1]} : vector<1x4x10x16xf32> to vector<1x4x8x12xf32>
    %22 = vector.extract_strided_slice %14 {offsets = [0, 0, 2, 2], sizes = [1, 4, 8, 12], strides = [1, 1, 1, 1]} : vector<1x4x10x16xf32> to vector<1x4x8x12xf32>
    %23 = vector.extract_strided_slice %14 {offsets = [0, 0, 2, 4], sizes = [1, 4, 8, 12], strides = [1, 1, 1, 1]} : vector<1x4x10x16xf32> to vector<1x4x8x12xf32>
    %24 = tpu.concatenate %15, %16, %17, %18, %19, %20, %21, %22, %23 in 1 : vector<1x4x8x12xf32>, vector<1x4x8x12xf32>, vector<1x4x8x12xf32>, vector<1x4x8x12xf32>, vector<1x4x8x12xf32>, vector<1x4x8x12xf32>, vector<1x4x8x12xf32>, vector<1x4x8x12xf32>, vector<1x4x8x12xf32> -> vector<1x36x8x12xf32>
    %25 = vector.shape_cast %24 : vector<1x36x8x12xf32> to vector<36x96xf32>
    %cst_12 = arith.constant dense<0.000000e+00> : vector<8x96xf32>
    %26 = tpu.matmul %11, %25, %cst_12 {dimension_numbers = #tpu.dot_dimension_numbers<[1], [0], [0], [1], [0, 0, 1, 1], [], []>} : vector<8x36xf32>, vector<36x96xf32>, vector<8x96xf32> -> vector<8x96xf32>
    %27 = vector.broadcast %12 : vector<8x1xf32> to vector<8x96xf32>
    %28 = arith.addf %26, %27 : vector<8x96xf32>
    %29 = vector.shape_cast %28 : vector<8x96xf32> to vector<1x8x8x12xf32>
    %c0_13 = arith.constant 0 : index
    %c0_14 = arith.constant 0 : index
    %c0_15 = arith.constant 0 : index
    %c0_16 = arith.constant 0 : index
    %30 = vector.load %arg6[%c0_13, %c0_14, %c0_15, %c0_16] : memref<1x8x8x12xf32, #tpu.memory_space<vmem>>, vector<1x8x8x12xf32>
    tpu.vector_store %arg6[%c0_13, %c0_14, %c0_15, %c0_16], %29 {strides = array<i32>} : memref<1x8x8x12xf32, #tpu.memory_space<vmem>>, vector<1x8x8x12xf32>,
    %cst_17 = arith.constant dense<0.000000e+00> : vector<1x8x8xf32>
    %31 = vector.multi_reduction <add>, %29, %cst_17 [3] : vector<1x8x8x12xf32> to vector<1x8x8xf32>
    %cst_18 = arith.constant dense<0.000000e+00> : vector<1x8xf32>
    %32 = vector.multi_reduction <add>, %31, %cst_18 [2] : vector<1x8x8xf32> to vector<1x8xf32>
    %33 = arith.mulf %29, %29 : vector<1x8x8x12xf32>
    %cst_19 = arith.constant dense<0.000000e+00> : vector<1x8x8xf32>
    %34 = vector.multi_reduction <add>, %33, %cst_19 [3] : vector<1x8x8x12xf32> to vector<1x8x8xf32>
    %cst_20 = arith.constant dense<0.000000e+00> : vector<1x8xf32>
    %35 = vector.multi_reduction <add>, %34, %cst_20 [2] : vector<1x8x8xf32> to vector<1x8xf32>
    %36 = tpu.concatenate %32, %35 in 0 : vector<1x8xf32>, vector<1x8xf32> -> vector<2x8xf32>
    %37 = vector.shape_cast %36 : vector<2x8xf32> to vector<1x2x8xf32>
    %c0_21 = arith.constant 0 : index
    %c0_22 = arith.constant 0 : index
    %c0_23 = arith.constant 0 : index
    %38 = vector.load %arg7[%c0_21, %c0_22, %c0_23] : memref<1x2x8xf32, #tpu.memory_space<vmem>>, vector<1x2x8xf32>
    tpu.vector_store %arg7[%c0_21, %c0_22, %c0_23], %37 {strides = array<i32>} : memref<1x2x8xf32, #tpu.memory_space<vmem>>, vector<1x2x8xf32>,
    return
  }
  func.func @transform_0(%arg0: i32) -> (i32, i32, i32, i32) {
    %c0_i32 = arith.constant 0 : i32
    %c0_i32_0 = arith.constant 0 : i32
    %c0_i32_1 = arith.constant 0 : i32
    %c0_i32_2 = arith.constant 0 : i32
    return %arg0, %c0_i32, %c0_i32_0, %c0_i32_1 : i32, i32, i32, i32
  }
  func.func @transform_1(%arg0: i32) -> (i32, i32) {
    %c0_i32 = arith.constant 0 : i32
    %c0_i32_0 = arith.constant 0 : i32
    %c0_i32_1 = arith.constant 0 : i32
    return %c0_i32, %c0_i32_0 : i32, i32
  }
  func.func @transform_2(%arg0: i32) -> (i32, i32) {
    %c0_i32 = arith.constant 0 : i32
    %c0_i32_0 = arith.constant 0 : i32
    %c0_i32_1 = arith.constant 0 : i32
    return %c0_i32, %c0_i32_0 : i32, i32
  }
  func.func @transform_3(%arg0: i32) -> (i32, i32) {
    %c0_i32 = arith.constant 0 : i32
    %c0_i32_0 = arith.constant 0 : i32
    %c0_i32_1 = arith.constant 0 : i32
    return %c0_i32, %c0_i32_0 : i32, i32
  }
  func.func @transform_4(%arg0: i32) -> (i32, i32) {
    %c0_i32 = arith.constant 0 : i32
    %c0_i32_0 = arith.constant 0 : i32
    %c0_i32_1 = arith.constant 0 : i32
    return %c0_i32, %c0_i32_0 : i32, i32
  }
  func.func @transform_5(%arg0: i32) -> (i32, i32, i32, i32) {
    %c0_i32 = arith.constant 0 : i32
    %c0_i32_0 = arith.constant 0 : i32
    %c0_i32_1 = arith.constant 0 : i32
    %c0_i32_2 = arith.constant 0 : i32
    return %arg0, %c0_i32, %c0_i32_0, %c0_i32_1 : i32, i32, i32, i32
  }
  func.func @transform_6(%arg0: i32) -> (i32, i32, i32) {
    %c0_i32 = arith.constant 0 : i32
    %c0_i32_0 = arith.constant 0 : i32
    %c0_i32_1 = arith.constant 0 : i32
    return %arg0, %c0_i32, %c0_i32_0 : i32, i32, i32
  }
}

module attributes {stable_mosaic.version = 11 : i64} {
  func.func @kernel(%arg0: i32, %arg1: memref<1x4x8x10xf32, #tpu.memory_space<vmem>>, %arg2: memref<1x8x8x12xf32, #tpu.memory_space<vmem>>, %arg3: memref<1x8xf32, #tpu.memory_space<vmem>>, %arg4: memref<1x8xf32, #tpu.memory_space<vmem>>, %arg5: memref<8x72xf32, #tpu.memory_space<vmem>>, %arg6: memref<8x1xf32, #tpu.memory_space<vmem>>, %arg7: memref<8x4xf32, #tpu.memory_space<vmem>>, %arg8: memref<1x8x80xf32, #tpu.memory_space<vmem>>) attributes {dimension_semantics = [#tpu.dimension_semantics<parallel>], iteration_bounds = array<i64: 2>, scalar_prefetch = 0 : i64, scratch_operands = 0 : i64, tpu.core_type = #tpu.core_type<tc>, window_params = [{transform_indices = @transform_0, window_bounds = array<i64: 1, 4, 8, 10>}, {transform_indices = @transform_1, window_bounds = array<i64: 1, 8, 8, 12>}, {pipeline_mode = #tpu.pipeline_mode<synchronous>, transform_indices = @transform_2, window_bounds = array<i64: 1, 8>}, {pipeline_mode = #tpu.pipeline_mode<synchronous>, transform_indices = @transform_3, window_bounds = array<i64: 1, 8>}, {pipeline_mode = #tpu.pipeline_mode<synchronous>, transform_indices = @transform_4, window_bounds = array<i64: 8, 72>}, {pipeline_mode = #tpu.pipeline_mode<synchronous>, transform_indices = @transform_5, window_bounds = array<i64: 8, 1>}, {pipeline_mode = #tpu.pipeline_mode<synchronous>, transform_indices = @transform_6, window_bounds = array<i64: 8, 4>}, {transform_indices = @transform_7, window_bounds = array<i64: 1, 8, 80>}]} {
    %c0 = arith.constant 0 : index
    %c0_0 = arith.constant 0 : index
    %c0_1 = arith.constant 0 : index
    %c0_2 = arith.constant 0 : index
    %0 = vector.load %arg2[%c0, %c0_0, %c0_1, %c0_2] : memref<1x8x8x12xf32, #tpu.memory_space<vmem>>, vector<1x8x8x12xf32>
    %c0_3 = arith.constant 0 : index
    %c0_4 = arith.constant 0 : index
    %1 = vector.load %arg3[%c0_3, %c0_4] : memref<1x8xf32, #tpu.memory_space<vmem>>, vector<1x8xf32>
    %c0_5 = arith.constant 0 : index
    %c0_6 = arith.constant 0 : index
    %2 = vector.load %arg4[%c0_5, %c0_6] : memref<1x8xf32, #tpu.memory_space<vmem>>, vector<1x8xf32>
    %3 = vector.shape_cast %1 : vector<1x8xf32> to vector<1x8x1x1xf32>
    %4 = vector.broadcast %3 : vector<1x8x1x1xf32> to vector<1x8x8x12xf32>
    %5 = arith.mulf %0, %4 : vector<1x8x8x12xf32>
    %6 = vector.shape_cast %2 : vector<1x8xf32> to vector<1x8x1x1xf32>
    %7 = vector.broadcast %6 : vector<1x8x1x1xf32> to vector<1x8x8x12xf32>
    %8 = arith.addf %5, %7 : vector<1x8x8x12xf32>
    %cst = arith.constant 0.000000e+00 : f32
    %9 = vector.broadcast %cst : f32 to vector<1x8x8x12xf32>
    %10 = arith.maximumf %8, %9 : vector<1x8x8x12xf32>
    %c0_7 = arith.constant 0 : index
    %c0_8 = arith.constant 0 : index
    %11 = vector.load %arg5[%c0_7, %c0_8] : memref<8x72xf32, #tpu.memory_space<vmem>>, vector<8x72xf32>
    %c0_9 = arith.constant 0 : index
    %c0_10 = arith.constant 0 : index
    %12 = vector.load %arg6[%c0_9, %c0_10] : memref<8x1xf32, #tpu.memory_space<vmem>>, vector<8x1xf32>
    %cst_11 = arith.constant 0.000000e+00 : f32
    %13 = vector.broadcast %cst_11 : f32 to vector<1x8x1x12xf32>
    %14 = tpu.concatenate %13, %10, %13 in 2 : vector<1x8x1x12xf32>, vector<1x8x8x12xf32>, vector<1x8x1x12xf32> -> vector<1x8x10x12xf32>
    %15 = vector.extract_strided_slice %14 {offsets = [0, 0, 0, 0], sizes = [1, 8, 8, 10], strides = [1, 1, 1, 1]} : vector<1x8x10x12xf32> to vector<1x8x8x10xf32>
    %16 = vector.extract_strided_slice %14 {offsets = [0, 0, 0, 1], sizes = [1, 8, 8, 10], strides = [1, 1, 1, 1]} : vector<1x8x10x12xf32> to vector<1x8x8x10xf32>
    %17 = vector.extract_strided_slice %14 {offsets = [0, 0, 0, 2], sizes = [1, 8, 8, 10], strides = [1, 1, 1, 1]} : vector<1x8x10x12xf32> to vector<1x8x8x10xf32>
    %18 = vector.extract_strided_slice %14 {offsets = [0, 0, 1, 0], sizes = [1, 8, 8, 10], strides = [1, 1, 1, 1]} : vector<1x8x10x12xf32> to vector<1x8x8x10xf32>
    %19 = vector.extract_strided_slice %14 {offsets = [0, 0, 1, 1], sizes = [1, 8, 8, 10], strides = [1, 1, 1, 1]} : vector<1x8x10x12xf32> to vector<1x8x8x10xf32>
    %20 = vector.extract_strided_slice %14 {offsets = [0, 0, 1, 2], sizes = [1, 8, 8, 10], strides = [1, 1, 1, 1]} : vector<1x8x10x12xf32> to vector<1x8x8x10xf32>
    %21 = vector.extract_strided_slice %14 {offsets = [0, 0, 2, 0], sizes = [1, 8, 8, 10], strides = [1, 1, 1, 1]} : vector<1x8x10x12xf32> to vector<1x8x8x10xf32>
    %22 = vector.extract_strided_slice %14 {offsets = [0, 0, 2, 1], sizes = [1, 8, 8, 10], strides = [1, 1, 1, 1]} : vector<1x8x10x12xf32> to vector<1x8x8x10xf32>
    %23 = vector.extract_strided_slice %14 {offsets = [0, 0, 2, 2], sizes = [1, 8, 8, 10], strides = [1, 1, 1, 1]} : vector<1x8x10x12xf32> to vector<1x8x8x10xf32>
    %24 = tpu.concatenate %15, %16, %17, %18, %19, %20, %21, %22, %23 in 1 : vector<1x8x8x10xf32>, vector<1x8x8x10xf32>, vector<1x8x8x10xf32>, vector<1x8x8x10xf32>, vector<1x8x8x10xf32>, vector<1x8x8x10xf32>, vector<1x8x8x10xf32>, vector<1x8x8x10xf32>, vector<1x8x8x10xf32> -> vector<1x72x8x10xf32>
    %25 = vector.shape_cast %24 : vector<1x72x8x10xf32> to vector<72x80xf32>
    %cst_12 = arith.constant dense<0.000000e+00> : vector<8x80xf32>
    %26 = tpu.matmul %11, %25, %cst_12 {dimension_numbers = #tpu.dot_dimension_numbers<[1], [0], [0], [1], [0, 0, 1, 1], [], []>} : vector<8x72xf32>, vector<72x80xf32>, vector<8x80xf32> -> vector<8x80xf32>
    %27 = vector.broadcast %12 : vector<8x1xf32> to vector<8x80xf32>
    %28 = arith.addf %26, %27 : vector<8x80xf32>
    %c0_13 = arith.constant 0 : index
    %c0_14 = arith.constant 0 : index
    %c0_15 = arith.constant 0 : index
    %c0_16 = arith.constant 0 : index
    %29 = vector.load %arg1[%c0_13, %c0_14, %c0_15, %c0_16] : memref<1x4x8x10xf32, #tpu.memory_space<vmem>>, vector<1x4x8x10xf32>
    %30 = vector.shape_cast %29 : vector<1x4x8x10xf32> to vector<4x80xf32>
    %c0_17 = arith.constant 0 : index
    %c0_18 = arith.constant 0 : index
    %31 = vector.load %arg7[%c0_17, %c0_18] : memref<8x4xf32, #tpu.memory_space<vmem>>, vector<8x4xf32>
    %cst_19 = arith.constant dense<0.000000e+00> : vector<8x80xf32>
    %32 = tpu.matmul %31, %30, %cst_19 {dimension_numbers = #tpu.dot_dimension_numbers<[1], [0], [0], [1], [0, 0, 1, 1], [], []>} : vector<8x4xf32>, vector<4x80xf32>, vector<8x80xf32> -> vector<8x80xf32>
    %33 = arith.addf %28, %32 : vector<8x80xf32>
    %34 = vector.shape_cast %33 : vector<8x80xf32> to vector<1x8x80xf32>
    %c0_20 = arith.constant 0 : index
    %c0_21 = arith.constant 0 : index
    %c0_22 = arith.constant 0 : index
    %35 = vector.load %arg8[%c0_20, %c0_21, %c0_22] : memref<1x8x80xf32, #tpu.memory_space<vmem>>, vector<1x8x80xf32>
    tpu.vector_store %arg8[%c0_20, %c0_21, %c0_22], %34 {strides = array<i32>} : memref<1x8x80xf32, #tpu.memory_space<vmem>>, vector<1x8x80xf32>,
    return
  }
  func.func @transform_0(%arg0: i32) -> (i32, i32, i32, i32) {
    %c0_i32 = arith.constant 0 : i32
    %c0_i32_0 = arith.constant 0 : i32
    %c0_i32_1 = arith.constant 0 : i32
    %c0_i32_2 = arith.constant 0 : i32
    return %arg0, %c0_i32, %c0_i32_0, %c0_i32_1 : i32, i32, i32, i32
  }
  func.func @transform_1(%arg0: i32) -> (i32, i32, i32, i32) {
    %c0_i32 = arith.constant 0 : i32
    %c0_i32_0 = arith.constant 0 : i32
    %c0_i32_1 = arith.constant 0 : i32
    %c0_i32_2 = arith.constant 0 : i32
    return %arg0, %c0_i32, %c0_i32_0, %c0_i32_1 : i32, i32, i32, i32
  }
  func.func @transform_2(%arg0: i32) -> (i32, i32) {
    %c0_i32 = arith.constant 0 : i32
    %c0_i32_0 = arith.constant 0 : i32
    %c0_i32_1 = arith.constant 0 : i32
    return %c0_i32, %c0_i32_0 : i32, i32
  }
  func.func @transform_3(%arg0: i32) -> (i32, i32) {
    %c0_i32 = arith.constant 0 : i32
    %c0_i32_0 = arith.constant 0 : i32
    %c0_i32_1 = arith.constant 0 : i32
    return %c0_i32, %c0_i32_0 : i32, i32
  }
  func.func @transform_4(%arg0: i32) -> (i32, i32) {
    %c0_i32 = arith.constant 0 : i32
    %c0_i32_0 = arith.constant 0 : i32
    %c0_i32_1 = arith.constant 0 : i32
    return %c0_i32, %c0_i32_0 : i32, i32
  }
  func.func @transform_5(%arg0: i32) -> (i32, i32) {
    %c0_i32 = arith.constant 0 : i32
    %c0_i32_0 = arith.constant 0 : i32
    %c0_i32_1 = arith.constant 0 : i32
    return %c0_i32, %c0_i32_0 : i32, i32
  }
  func.func @transform_6(%arg0: i32) -> (i32, i32) {
    %c0_i32 = arith.constant 0 : i32
    %c0_i32_0 = arith.constant 0 : i32
    %c0_i32_1 = arith.constant 0 : i32
    return %c0_i32, %c0_i32_0 : i32, i32
  }
  func.func @transform_7(%arg0: i32) -> (i32, i32, i32) {
    %c0_i32 = arith.constant 0 : i32
    %c0_i32_0 = arith.constant 0 : i32
    %c0_i32_1 = arith.constant 0 : i32
    return %arg0, %c0_i32, %c0_i32_0 : i32, i32, i32
  }
}

</mosaic_0001>

<llo_original>
// kernel: resblock_pallas.3
$region0: #{resblock_pallas.3}
  #allocation0 [shape = 'u32[]', space=smem, size = 0x4, offset = 0x4, fixed_abs, tag = 'smem constant byte address 0x4 - core index']
  #allocation1 [shape = 'u32[144,128]{1,0:T(1,128)}', space=vmem, size = 0x12000, scoped, tag = 'internal scratch']
  %s0 = inlined_call_operand.vmem [shape: f32[2,2,4,8,16], index: 0, kind: input, shape index: {}]
  %s1 = inlined_call_operand.vmem [shape: f32[2,4,8,16], index: 1, kind: output, shape index: {0}]
  %s2 = inlined_call_operand.vmem [shape: f32[2,2,4], index: 2, kind: output, shape index: {1}]
  %3 = xla_tuple %s1, %s2
  %s4 = sld [smem:[#allocation0]]
  $region45: #{resblock_pallas.3} parent=0
    _
  %s6 = ssub.s32 1, %s4
  %s7 = scalar_select 0, %s6, %s4
  loop: start=0, step=1, limit=4
  $region2: #{resblock_pallas.3} parent=0 // loop_pre_header
    _
  $region3: #{resblock_pallas.3} parent=0 // loop_header
    %s9 = sphi 0, %s13
    %p10 = scmp.ge.s32.totalorder %s9, 4
    %s19 = sphi 0, %s21
    %s22 = sphi 0, %s19
    %s23 = sphi 0, %s22
    %s39 = sphi 0, %s23
    %s45 = sphi 0, %s47
    %s48 = sphi 0, %s45
    %s49 = sphi 0, %s48
    %s65 = sphi 0, %s49
    %s71 = sphi 0, %s73
    %s74 = sphi 0, %s71
    %s75 = sphi 0, %s74
    %s91 = sphi 0, %s75
  $region4: #{resblock_pallas.3} parent=0 // loop_header_branch
    %12 = sbr.rel (%p10) target = $region8
  $region5: #{resblock_pallas.3} parent=0 // loop_body
    %s14 = ssub.s32 %s9, 1
    %s15 = ssub.s32 %s9, 2
    %s16 = sadd.s32 %s9, 1
    %s17 = ssub.s32 %s9, %s16
    %p18 = scmp.eq.s32.totalorder %s17, 0
    %s20 = sadd.s32 %s19, 1
    %s21 = scalar_select %p18, %s19, %s20
    %p24 = pneg %p18
    %p25 = scmp.eq.s32.totalorder %s9, 1
    %p26 = por %p24, %p25
    %p27 = scmp.ne.s32.totalorder %s19, %s22
    %p28 = scmp.eq.s32.totalorder %s9, 0
    %p29 = por %p27, %p28
    %p30 = scmp.ne.s32.totalorder %s19, %s22
    %p31 = scmp.eq.s32.totalorder %s14, 1
    %p32 = por %p30, %p31
    %p33 = scmp.ne.s32.totalorder %s22, %s23
    %p34 = scmp.eq.s32.totalorder %s14, 0
    %p35 = por %p33, %p34
    %p36 = scmp.ne.s32.totalorder %s22, %s23
    %p37 = scmp.eq.s32.totalorder %s15, 1
    %p38 = por %p36, %p37
    %p40 = scmp.ne.s32.totalorder %s23, %s39
    %p41 = scmp.eq.s32.totalorder %s15, 0
    %p42 = por %p40, %p41
    %s43 = ssub.s32 %s9, %s16
    %p44 = scmp.eq.s32.totalorder %s43, 0
    %s46 = sadd.s32 %s45, 1
    %s47 = scalar_select %p44, %s45, %s46
    %p50 = pneg %p44
    %p51 = scmp.eq.s32.totalorder %s9, 1
    %p52 = por %p50, %p51
    %p53 = scmp.ne.s32.totalorder %s45, %s48
    %p54 = scmp.eq.s32.totalorder %s9, 0
    %p55 = por %p53, %p54
    %p56 = scmp.ne.s32.totalorder %s45, %s48
    %p57 = scmp.eq.s32.totalorder %s14, 1
    %p58 = por %p56, %p57
    %p59 = scmp.ne.s32.totalorder %s48, %s49
    %p60 = scmp.eq.s32.totalorder %s14, 0
    %p61 = por %p59, %p60
    %p62 = scmp.ne.s32.totalorder %s48, %s49
    %p63 = scmp.eq.s32.totalorder %s15, 1
    %p64 = por %p62, %p63
    %p66 = scmp.ne.s32.totalorder %s49, %s65
    %p67 = scmp.eq.s32.totalorder %s15, 0
    %p68 = por %p66, %p67
    %s69 = ssub.s32 %s9, %s16
    %p70 = scmp.eq.s32.totalorder %s69, 0
    %s72 = sadd.s32 %s71, 1
    %s73 = scalar_select %p70, %s71, %s72
    %p76 = pneg %p70
    %p77 = scmp.eq.s32.totalorder %s9, 1
    %p78 = por %p76, %p77
    %p79 = scmp.ne.s32.totalorder %s71, %s74
    %p80 = scmp.eq.s32.totalorder %s9, 0
    %p81 = por %p79, %p80
    %p82 = scmp.ne.s32.totalorder %s71, %s74
    %p83 = scmp.eq.s32.totalorder %s14, 1
    %p84 = por %p82, %p83
    %p85 = scmp.ne.s32.totalorder %s74, %s75
    %p86 = scmp.eq.s32.totalorder %s14, 0
    %p87 = por %p85, %p86
    %p88 = scmp.ne.s32.totalorder %s74, %s75
    %p89 = scmp.eq.s32.totalorder %s15, 1
    %p90 = por %p88, %p89
    %p92 = scmp.ne.s32.totalorder %s75, %s91
    %p93 = scmp.eq.s32.totalorder %s15, 0
    %p94 = por %p92, %p93
    %p95 = scmp.le.s32.totalorder 1, %s9
    %p96 = scmp.lt.s32.totalorder %s9, 3
    %p97 = pnand %p95, %p96
    %p98 = pneg %p97
    // Predicated region
    $region9: #{resblock_pallas.3} parent=5 // pred_check
      _
    $region10: #{resblock_pallas.3} parent=5 // pred_check_branch
      %100 = sbr.rel (%p97) target = $region12
    $region11: #{resblock_pallas.3} parent=5 // pred_region
      %s101 = ssub.s32 %s9, 1
    $region12: #{resblock_pallas.3} parent=5 // pred_fallthru
      _
    %p102 = scmp.lt.s32.totalorder %s9, 2
    // Predicated region
    $region13: #{resblock_pallas.3} parent=5 // pred_check
      %p103 = pneg %p102
    $region14: #{resblock_pallas.3} parent=5 // pred_check_branch
      %105 = sbr.rel (%p103) target = $region16
    $region15: #{resblock_pallas.3} parent=5 // pred_region
      // Predicated region
      $region17: #{resblock_pallas.3} parent=15 // pred_check
        %p106 = pneg %p29
      $region18: #{resblock_pallas.3} parent=15 // pred_check_branch
        %108 = sbr.rel (%p106) target = $region20
      $region19: #{resblock_pallas.3} parent=15 // pred_region
        %p109 = scmp.lt.s32.totalorder %s9, 1
        %s110 = scalar_select %p109, %s9, 1
        %s111 = smul.addr %s110, 8
        %s112 = smul.addr %s111, 8
        %s113 = scalar_lea.vmem %s0, %s112
      $region20: #{resblock_pallas.3} parent=15 // pred_fallthru
        _
    $region16: #{resblock_pallas.3} parent=5 // pred_fallthru
      _
    %p114 = scmp.le.s32.totalorder 1, %s9
    %p115 = scmp.lt.s32.totalorder %s9, 3
    %p116 = pnand %p114, %p115
    %p117 = pneg %p116
    // Predicated region
    $region21: #{resblock_pallas.3} parent=5 // pred_check
      _
    $region22: #{resblock_pallas.3} parent=5 // pred_check_branch
      %119 = sbr.rel (%p116) target = $region24
    $region23: #{resblock_pallas.3} parent=5 // pred_region
      %s120 = ssub.s32 %s9, 1
      %p121 = scmp.lt.s32.totalorder %s14, 1
      %s122 = scalar_select %p121, %s14, 1
      %s123 = smul.addr %s122, 8
      %s124 = smul.addr %s123, 8
      %s125 = scalar_lea.vmem %s0, %s124
      %p126 = pneg %p35
      %p127 = pneg %p32
      %p128 = pneg %p61
      %p129 = pneg %p58
      %p130 = scmp.lt.s32.totalorder %s14, 1
      %s131 = scalar_select %p130, %s14, 1
      %s132 = smul.addr %s131, 4
      %s133 = smul.addr %s132, 8
      %s134 = scalar_lea.vmem %s1, %s133
      %p135 = pneg %p87
      %p136 = pneg %p84
      %p137 = scmp.lt.s32.totalorder %s14, 1
      %s138 = scalar_select %p137, %s14, 1
      %s139 = smul.addr %s138, 2
      %s140 = scalar_lea.vmem %s2, %s139
      %p141 = scmp.lt.s32.totalorder %s14, 1
      %s142 = scalar_select %p141, %s14, 1
      %s143 = smul.addr %s142, 8
      %s144 = smul.addr %s143, 8
      %s145 = scalar_lea.vmem %s0, %s144
      %p146 = scmp.lt.s32.totalorder %s14, 1
      %s147 = scalar_select %p146, %s14, 1
      %s148 = smul.addr %s147, 4
      %s149 = smul.addr %s148, 8
      %s150 = scalar_lea.vmem %s1, %s149
      %p151 = scmp.lt.s32.totalorder %s14, 1
      %s152 = scalar_select %p151, %s14, 1
      %s153 = smul.addr %s152, 2
      %s154 = scalar_lea.vmem %s2, %s153
      %v155 = vld [vmem:[%s145] sm:$0xff]
      %v156 = vld [vmem:[%s145 + $0x8] sm:$0xff]
      %v157 = vld [vmem:[%s145 + $0x10] sm:$0xff]
      %v158 = vld [vmem:[%s145 + $0x18] sm:$0xff]
      %v159 = vld [vmem:[%s145 + $0x20] sm:$0xff]
      %v160 = vld [vmem:[%s145 + $0x28] sm:$0xff]
      %v161 = vld [vmem:[%s145 + $0x30] sm:$0xff]
      %v162 = vld [vmem:[%s145 + $0x38] sm:$0xff]
      %v163 = vmax.f32 %v155, %v159
      %v164 = vmax.f32 %v156, %v160
      %v165 = vmax.f32 %v157, %v161
      %v166 = vmax.f32 %v158, %v162
      %vm167 = vcmask 130048
      %168 = vst.msk [vmem:[%s150] sm:$0xff] %vm167, %v163
      %169 = vst.msk [vmem:[%s150 + $0x8] sm:$0xff] %vm167, %v164
      %170 = vst.msk [vmem:[%s150 + $0x10] sm:$0xff] %vm167, %v165
      %171 = vst.msk [vmem:[%s150 + $0x18] sm:$0xff] %vm167, %v166
      %v172 = vsel %vm167, %v163, 0.0
      %173 = vadd.xlane.f32.xlu0 %v172
      %v174 = vpop.xlane.xlu0 %173
      %v175 = vsel %vm167, %v164, 0.0
      %176 = vadd.xlane.f32.xlu0 %v175
      %v177 = vpop.xlane.xlu0 %176
      %v178 = vsel %vm167, %v165, 0.0
      %179 = vadd.xlane.f32.xlu0 %v178
      %v180 = vpop.xlane.xlu0 %179
      %v181 = vsel %vm167, %v166, 0.0
      %182 = vadd.xlane.f32.xlu0 %v181
      %v183 = vpop.xlane.xlu0 %182
      %v188 = vlaneseq
      %v189 = vand.u32 %v188, 127
      %v190 = vlaneseq
      %v191 = vshrl.u32 %v190, 7
      %v192 = vsub.s32 %v189, %v191
      %v193 = vrot.slane %v174, %v192
      %v194 = vlaneseq
      %v195 = vshrl.u32 %v194, 7
      %v196 = vsub.s32 %v189, %v195
      %v197 = vrot.slane %v177, %v196
      %v198 = vlaneseq
      %v199 = vshrl.u32 %v198, 7
      %v200 = vsub.s32 %v189, %v199
      %v201 = vrot.slane %v180, %v200
      %v202 = vlaneseq
      %v203 = vshrl.u32 %v202, 7
      %v204 = vsub.s32 %v189, %v203
      %v205 = vrot.slane %v183, %v204
      %vm206 = vcmask 1041409
      %v207 = vsel %vm206, %v197, %v193
      %vm208 = vcmask 1042434
      %v209 = vsel %vm208, %v201, %v207
      %vm210 = vcmask 1043459
      %v211 = vsel %vm210, %v205, %v209
      %vm213 = vcmask 60416
      %v214 = vsel %vm213, %v211, 0.0
      %215 = vadd.xlane.f32.xlu0 %v214
      %v216 = vpop.xlane.xlu0 %215
      %v217 = vmul.f32 %v163, %v163
      %v218 = vmul.f32 %v164, %v164
      %v219 = vmul.f32 %v165, %v165
      %v220 = vmul.f32 %v166, %v166
      %v221 = vsel %vm167, %v217, 0.0
      %222 = vadd.xlane.f32.xlu0 %v221
      %v223 = vpop.xlane.xlu0 %222
      %v224 = vsel %vm167, %v218, 0.0
      %225 = vadd.xlane.f32.xlu0 %v224
      %v226 = vpop.xlane.xlu0 %225
      %v227 = vsel %vm167, %v219, 0.0
      %228 = vadd.xlane.f32.xlu0 %v227
      %v229 = vpop.xlane.xlu0 %228
      %v230 = vsel %vm167, %v220, 0.0
      %231 = vadd.xlane.f32.xlu0 %v230
      %v232 = vpop.xlane.xlu0 %231
      %v237 = vlaneseq
      %v238 = vshrl.u32 %v237, 7
      %v239 = vsub.s32 %v189, %v238
      %v240 = vrot.slane %v223, %v239
      %v241 = vlaneseq
      %v242 = vshrl.u32 %v241, 7
      %v243 = vsub.s32 %v189, %v242
      %v244 = vrot.slane %v226, %v243
      %v245 = vlaneseq
      %v246 = vshrl.u32 %v245, 7
      %v247 = vsub.s32 %v189, %v246
      %v248 = vrot.slane %v229, %v247
      %v249 = vlaneseq
      %v250 = vshrl.u32 %v249, 7
      %v251 = vsub.s32 %v189, %v250
      %v252 = vrot.slane %v232, %v251
      %v253 = vsel %vm206, %v244, %v240
      %v254 = vsel %vm208, %v248, %v253
      %v255 = vsel %vm210, %v252, %v254
      %v257 = vsel %vm213, %v255, 0.0
      %258 = vadd.xlane.f32.xlu0 %v257
      %v259 = vpop.xlane.xlu0 %258
      %v261 = vlaneseq
      %v262 = vshrl.u32 %v261, 7
      %v263 = vsub.s32 %v189, %v262
      %v264 = vrot.slane %v216, %v263
      %v267 = vlaneseq
      %v268 = vshrl.u32 %v267, 7
      %v269 = vsub.s32 %v189, %v268
      %v270 = vrot.slane %v259, %v269
      %vm272 = vcmask 1040384
      %v273 = vsel %vm272, %v264, %v270
      %vm274 = vcmask 25600
      %275 = vst.msk [vmem:[%s154] sm:$0x3] %vm274, %v273
      %p276 = scmp.lt.s32.totalorder %s14, 1
      %s277 = scalar_select %p276, %s14, 1
      %s278 = smul.addr %s277, 4
      %s279 = smul.addr %s278, 8
      %s280 = scalar_lea.vmem %s1, %s279
      %p281 = scmp.lt.s32.totalorder %s14, 1
      %s282 = scalar_select %p281, %s14, 1
      %s283 = smul.addr %s282, 2
      %s284 = scalar_lea.vmem %s2, %s283
      // Predicated region
      $region25: #{resblock_pallas.3} parent=23 // pred_check
        %p285 = pneg %p58
      $region26: #{resblock_pallas.3} parent=23 // pred_check_branch
        %287 = sbr.rel (%p285) target = $region28
      $region27: #{resblock_pallas.3} parent=23 // pred_region
        _
      $region28: #{resblock_pallas.3} parent=23 // pred_fallthru
        _
      // Predicated region
      $region29: #{resblock_pallas.3} parent=23 // pred_check
        %p288 = pneg %p84
      $region30: #{resblock_pallas.3} parent=23 // pred_check_branch
        %290 = sbr.rel (%p288) target = $region32
      $region31: #{resblock_pallas.3} parent=23 // pred_region
        _
      $region32: #{resblock_pallas.3} parent=23 // pred_fallthru
        _
    $region24: #{resblock_pallas.3} parent=5 // pred_fallthru
      _
    %p291 = scmp.le.s32.totalorder 2, %s9
    // Predicated region
    $region33: #{resblock_pallas.3} parent=5 // pred_check
      %p292 = pneg %p291
    $region34: #{resblock_pallas.3} parent=5 // pred_check_branch
      %294 = sbr.rel (%p292) target = $region36
    $region35: #{resblock_pallas.3} parent=5 // pred_region
      %s295 = ssub.s32 %s9, 2
      // Predicated region
      $region37: #{resblock_pallas.3} parent=35 // pred_check
        %p296 = pneg %p64
      $region38: #{resblock_pallas.3} parent=35 // pred_check_branch
        %298 = sbr.rel (%p296) target = $region40
      $region39: #{resblock_pallas.3} parent=35 // pred_region
        %p299 = scmp.lt.s32.totalorder %s15, 1
        %s300 = scalar_select %p299, %s15, 1
        %s301 = smul.addr %s300, 4
        %s302 = smul.addr %s301, 8
        %s303 = scalar_lea.vmem %s1, %s302
      $region40: #{resblock_pallas.3} parent=35 // pred_fallthru
        _
      // Predicated region
      $region41: #{resblock_pallas.3} parent=35 // pred_check
        %p304 = pneg %p90
      $region42: #{resblock_pallas.3} parent=35 // pred_check_branch
        %306 = sbr.rel (%p304) target = $region44
      $region43: #{resblock_pallas.3} parent=35 // pred_region
        %p307 = scmp.lt.s32.totalorder %s15, 1
        %s308 = scalar_select %p307, %s15, 1
        %s309 = smul.addr %s308, 2
        %s310 = scalar_lea.vmem %s2, %s309
      $region44: #{resblock_pallas.3} parent=35 // pred_fallthru
        _
    $region36: #{resblock_pallas.3} parent=5 // pred_fallthru
      _
  $region6: #{resblock_pallas.3} parent=0 // loop_footer
    %s13 = sadd.s32 1, %s9
  $region7: #{resblock_pallas.3} parent=0 // loop_footer_branch
    %8 = sbr.rel target = $region3
  $region8: #{resblock_pallas.3} parent=0 // loop_exit
    _

// kernel: resblock_pallas.4
$region0: #{resblock_pallas.4}
  #allocation0 [shape = 'u32[]', space=smem, size = 0x4, offset = 0x4, fixed_abs, tag = 'smem constant byte address 0x4 - core index']
  #allocation1 [shape = 'u32[144,128]{1,0:T(1,128)}', space=vmem, size = 0x12000, scoped, tag = 'internal scratch']
  %s0 = inlined_call_operand.vmem [shape: f32[2,4,8,16], index: 0, kind: input, shape index: {}]
  %s1 = inlined_call_operand.vmem [shape: f32[1,4], index: 1, kind: input, shape index: {}]
  %s2 = inlined_call_operand.vmem [shape: f32[1,4], index: 2, kind: input, shape index: {}]
  %s3 = inlined_call_operand.vmem [shape: f32[8,36], index: 3, kind: input, shape index: {}]
  %s4 = inlined_call_operand.vmem [shape: f32[8,1], index: 4, kind: input, shape index: {}]
  %s5 = inlined_call_operand.vmem [shape: f32[2,8,8,12], index: 5, kind: output, shape index: {0}]
  %s6 = inlined_call_operand.vmem [shape: f32[2,2,8], index: 6, kind: output, shape index: {1}]
  %7 = xla_tuple %s5, %s6
  %s8 = sld [smem:[#allocation0]]
  $region61: #{resblock_pallas.4} parent=0
    _
  %s10 = ssub.s32 1, %s8
  %s11 = scalar_select 0, %s10, %s8
  loop: start=0, step=1, limit=4
  $region2: #{resblock_pallas.4} parent=0 // loop_pre_header
    _
  $region3: #{resblock_pallas.4} parent=0 // loop_header
    %s13 = sphi 0, %s17
    %p14 = scmp.ge.s32.totalorder %s13, 4
    %s23 = sphi 0, %s25
    %s26 = sphi 0, %s23
    %s27 = sphi 0, %s26
    %s43 = sphi 0, %s27
    %s47 = sphi 0, %s47
    %s49 = sphi 0, %s47
    %s50 = sphi 0, %s49
    %s64 = sphi 0, %s50
    %s68 = sphi 0, %s68
    %s70 = sphi 0, %s68
    %s71 = sphi 0, %s70
    %s85 = sphi 0, %s71
    %s89 = sphi 0, %s89
    %s91 = sphi 0, %s89
    %s92 = sphi 0, %s91
    %s106 = sphi 0, %s92
    %s110 = sphi 0, %s110
    %s112 = sphi 0, %s110
    %s113 = sphi 0, %s112
    %s127 = sphi 0, %s113
    %s133 = sphi 0, %s135
    %s136 = sphi 0, %s133
    %s137 = sphi 0, %s136
    %s153 = sphi 0, %s137
    %s159 = sphi 0, %s161
    %s162 = sphi 0, %s159
    %s163 = sphi 0, %s162
    %s179 = sphi 0, %s163
  $region4: #{resblock_pallas.4} parent=0 // loop_header_branch
    %16 = sbr.rel (%p14) target = $region8
  $region5: #{resblock_pallas.4} parent=0 // loop_body
    %s18 = ssub.s32 %s13, 1
    %s19 = ssub.s32 %s13, 2
    %s20 = sadd.s32 %s13, 1
    %s21 = ssub.s32 %s13, %s20
    %p22 = scmp.eq.s32.totalorder %s21, 0
    %s24 = sadd.s32 %s23, 1
    %s25 = scalar_select %p22, %s23, %s24
    %p28 = pneg %p22
    %p29 = scmp.eq.s32.totalorder %s13, 1
    %p30 = por %p28, %p29
    %p31 = scmp.ne.s32.totalorder %s23, %s26
    %p32 = scmp.eq.s32.totalorder %s13, 0
    %p33 = por %p31, %p32
    %p34 = scmp.ne.s32.totalorder %s23, %s26
    %p35 = scmp.eq.s32.totalorder %s18, 1
    %p36 = por %p34, %p35
    %p37 = scmp.ne.s32.totalorder %s26, %s27
    %p38 = scmp.eq.s32.totalorder %s18, 0
    %p39 = por %p37, %p38
    %p40 = scmp.ne.s32.totalorder %s26, %s27
    %p41 = scmp.eq.s32.totalorder %s19, 1
    %p42 = por %p40, %p41
    %p44 = scmp.ne.s32.totalorder %s27, %s43
    %p45 = scmp.eq.s32.totalorder %s19, 0
    %p46 = por %p44, %p45
    %s48 = sadd.s32 %s47, 1
    %p51 = scmp.eq.s32.totalorder %s13, 1
    %p52 = scmp.ne.s32.totalorder %s47, %s49
    %p53 = scmp.eq.s32.totalorder %s13, 0
    %p54 = por %p52, %p53
    %p55 = scmp.ne.s32.totalorder %s47, %s49
    %p56 = scmp.eq.s32.totalorder %s18, 1
    %p57 = por %p55, %p56
    %p58 = scmp.ne.s32.totalorder %s49, %s50
    %p59 = scmp.eq.s32.totalorder %s18, 0
    %p60 = por %p58, %p59
    %p61 = scmp.ne.s32.totalorder %s49, %s50
    %p62 = scmp.eq.s32.totalorder %s19, 1
    %p63 = por %p61, %p62
    %p65 = scmp.ne.s32.totalorder %s50, %s64
    %p66 = scmp.eq.s32.totalorder %s19, 0
    %p67 = por %p65, %p66
    %s69 = sadd.s32 %s68, 1
    %p72 = scmp.eq.s32.totalorder %s13, 1
    %p73 = scmp.ne.s32.totalorder %s68, %s70
    %p74 = scmp.eq.s32.totalorder %s13, 0
    %p75 = por %p73, %p74
    %p76 = scmp.ne.s32.totalorder %s68, %s70
    %p77 = scmp.eq.s32.totalorder %s18, 1
    %p78 = por %p76, %p77
    %p79 = scmp.ne.s32.totalorder %s70, %s71
    %p80 = scmp.eq.s32.totalorder %s18, 0
    %p81 = por %p79, %p80
    %p82 = scmp.ne.s32.totalorder %s70, %s71
    %p83 = scmp.eq.s32.totalorder %s19, 1
    %p84 = por %p82, %p83
    %p86 = scmp.ne.s32.totalorder %s71, %s85
    %p87 = scmp.eq.s32.totalorder %s19, 0
    %p88 = por %p86, %p87
    %s90 = sadd.s32 %s89, 1
    %p93 = scmp.eq.s32.totalorder %s13, 1
    %p94 = scmp.ne.s32.totalorder %s89, %s91
    %p95 = scmp.eq.s32.totalorder %s13, 0
    %p96 = por %p94, %p95
    %p97 = scmp.ne.s32.totalorder %s89, %s91
    %p98 = scmp.eq.s32.totalorder %s18, 1
    %p99 = por %p97, %p98
    %p100 = scmp.ne.s32.totalorder %s91, %s92
    %p101 = scmp.eq.s32.totalorder %s18, 0
    %p102 = por %p100, %p101
    %p103 = scmp.ne.s32.totalorder %s91, %s92
    %p104 = scmp.eq.s32.totalorder %s19, 1
    %p105 = por %p103, %p104
    %p107 = scmp.ne.s32.totalorder %s92, %s106
    %p108 = scmp.eq.s32.totalorder %s19, 0
    %p109 = por %p107, %p108
    %s111 = sadd.s32 %s110, 1
    %p114 = scmp.eq.s32.totalorder %s13, 1
    %p115 = scmp.ne.s32.totalorder %s110, %s112
    %p116 = scmp.eq.s32.totalorder %s13, 0
    %p117 = por %p115, %p116
    %p118 = scmp.ne.s32.totalorder %s110, %s112
    %p119 = scmp.eq.s32.totalorder %s18, 1
    %p120 = por %p118, %p119
    %p121 = scmp.ne.s32.totalorder %s112, %s113
    %p122 = scmp.eq.s32.totalorder %s18, 0
    %p123 = por %p121, %p122
    %p124 = scmp.ne.s32.totalorder %s112, %s113
    %p125 = scmp.eq.s32.totalorder %s19, 1
    %p126 = por %p124, %p125
    %p128 = scmp.ne.s32.totalorder %s113, %s127
    %p129 = scmp.eq.s32.totalorder %s19, 0
    %p130 = por %p128, %p129
    %s131 = ssub.s32 %s13, %s20
    %p132 = scmp.eq.s32.totalorder %s131, 0
    %s134 = sadd.s32 %s133, 1
    %s135 = scalar_select %p132, %s133, %s134
    %p138 = pneg %p132
    %p139 = scmp.eq.s32.totalorder %s13, 1
    %p140 = por %p138, %p139
    %p141 = scmp.ne.s32.totalorder %s133, %s136
    %p142 = scmp.eq.s32.totalorder %s13, 0
    %p143 = por %p141, %p142
    %p144 = scmp.ne.s32.totalorder %s133, %s136
    %p145 = scmp.eq.s32.totalorder %s18, 1
    %p146 = por %p144, %p145
    %p147 = scmp.ne.s32.totalorder %s136, %s137
    %p148 = scmp.eq.s32.totalorder %s18, 0
    %p149 = por %p147, %p148
    %p150 = scmp.ne.s32.totalorder %s136, %s137
    %p151 = scmp.eq.s32.totalorder %s19, 1
    %p152 = por %p150, %p151
    %p154 = scmp.ne.s32.totalorder %s137, %s153
    %p155 = scmp.eq.s32.totalorder %s19, 0
    %p156 = por %p154, %p155
    %s157 = ssub.s32 %s13, %s20
    %p158 = scmp.eq.s32.totalorder %s157, 0
    %s160 = sadd.s32 %s159, 1
    %s161 = scalar_select %p158, %s159, %s160
    %p164 = pneg %p158
    %p165 = scmp.eq.s32.totalorder %s13, 1
    %p166 = por %p164, %p165
    %p167 = scmp.ne.s32.totalorder %s159, %s162
    %p168 = scmp.eq.s32.totalorder %s13, 0
    %p169 = por %p167, %p168
    %p170 = scmp.ne.s32.totalorder %s159, %s162
    %p171 = scmp.eq.s32.totalorder %s18, 1
    %p172 = por %p170, %p171
    %p173 = scmp.ne.s32.totalorder %s162, %s163
    %p174 = scmp.eq.s32.totalorder %s18, 0
    %p175 = por %p173, %p174
    %p176 = scmp.ne.s32.totalorder %s162, %s163
    %p177 = scmp.eq.s32.totalorder %s19, 1
    %p178 = por %p176, %p177
    %p180 = scmp.ne.s32.totalorder %s163, %s179
    %p181 = scmp.eq.s32.totalorder %s19, 0
    %p182 = por %p180, %p181
    %p183 = scmp.le.s32.totalorder 1, %s13
    %p184 = scmp.lt.s32.totalorder %s13, 3
    %p185 = pnand %p183, %p184
    %p186 = pneg %p185
    // Predicated region
    $region9: #{resblock_pallas.4} parent=5 // pred_check
      _
    $region10: #{resblock_pallas.4} parent=5 // pred_check_branch
      %188 = sbr.rel (%p185) target = $region12
    $region11: #{resblock_pallas.4} parent=5 // pred_region
      %s189 = ssub.s32 %s13, 1
      // Predicated region
      $region13: #{resblock_pallas.4} parent=11 // pred_check
        %p190 = pneg %p60
      $region14: #{resblock_pallas.4} parent=11 // pred_check_branch
        %192 = sbr.rel (%p190) target = $region16
      $region15: #{resblock_pallas.4} parent=11 // pred_region
        _
      $region16: #{resblock_pallas.4} parent=11 // pred_fallthru
        _
      // Predicated region
      $region17: #{resblock_pallas.4} parent=11 // pred_check
        %p193 = pneg %p81
      $region18: #{resblock_pallas.4} parent=11 // pred_check_branch
        %195 = sbr.rel (%p193) target = $region20
      $region19: #{resblock_pallas.4} parent=11 // pred_region
        _
      $region20: #{resblock_pallas.4} parent=11 // pred_fallthru
        _
      // Predicated region
      $region21: #{resblock_pallas.4} parent=11 // pred_check
        %p196 = pneg %p102
      $region22: #{resblock_pallas.4} parent=11 // pred_check_branch
        %198 = sbr.rel (%p196) target = $region24
      $region23: #{resblock_pallas.4} parent=11 // pred_region
        _
      $region24: #{resblock_pallas.4} parent=11 // pred_fallthru
        _
      // Predicated region
      $region25: #{resblock_pallas.4} parent=11 // pred_check
        %p199 = pneg %p123
      $region26: #{resblock_pallas.4} parent=11 // pred_check_branch
        %201 = sbr.rel (%p199) target = $region28
      $region27: #{resblock_pallas.4} parent=11 // pred_region
        _
      $region28: #{resblock_pallas.4} parent=11 // pred_fallthru
        _
    $region12: #{resblock_pallas.4} parent=5 // pred_fallthru
      _
    %p202 = scmp.lt.s32.totalorder %s13, 2
    // Predicated region
    $region29: #{resblock_pallas.4} parent=5 // pred_check
      %p203 = pneg %p202
    $region30: #{resblock_pallas.4} parent=5 // pred_check_branch
      %205 = sbr.rel (%p203) target = $region32
    $region31: #{resblock_pallas.4} parent=5 // pred_region
      // Predicated region
      $region33: #{resblock_pallas.4} parent=31 // pred_check
        %p206 = pneg %p33
      $region34: #{resblock_pallas.4} parent=31 // pred_check_branch
        %208 = sbr.rel (%p206) target = $region36
      $region35: #{resblock_pallas.4} parent=31 // pred_region
        %p209 = scmp.lt.s32.totalorder %s13, 1
        %s210 = scalar_select %p209, %s13, 1
        %s211 = smul.addr %s210, 4
        %s212 = smul.addr %s211, 8
        %s213 = scalar_lea.vmem %s0, %s212
      $region36: #{resblock_pallas.4} parent=31 // pred_fallthru
        _
    $region32: #{resblock_pallas.4} parent=5 // pred_fallthru
      _
    %p214 = scmp.le.s32.totalorder 1, %s13
    %p215 = scmp.lt.s32.totalorder %s13, 3
    %p216 = pnand %p214, %p215
    %p217 = pneg %p216
    // Predicated region
    $region37: #{resblock_pallas.4} parent=5 // pred_check
      _
    $region38: #{resblock_pallas.4} parent=5 // pred_check_branch
      %219 = sbr.rel (%p216) target = $region40
    $region39: #{resblock_pallas.4} parent=5 // pred_region
      %s220 = ssub.s32 %s13, 1
      %p221 = scmp.lt.s32.totalorder %s18, 1
      %s222 = scalar_select %p221, %s18, 1
      %s223 = smul.addr %s222, 4
      %s224 = smul.addr %s223, 8
      %s225 = scalar_lea.vmem %s0, %s224
      %p226 = pneg %p39
      %p227 = pneg %p36
      %p228 = pneg %p60
      %p229 = pneg %p57
      %p230 = pneg %p81
      %p231 = pneg %p78
      %p232 = pneg %p102
      %p233 = pneg %p99
      %p234 = pneg %p123
      %p235 = pneg %p120
      %p236 = pneg %p149
      %p237 = pneg %p146
      %p238 = scmp.lt.s32.totalorder %s18, 1
      %s239 = scalar_select %p238, %s18, 1
      %s240 = smul.addr %s239, 8
      %s241 = smul.addr %s240, 8
      %s242 = scalar_lea.vmem %s5, %s241
      %p243 = pneg %p175
      %p244 = pneg %p172
      %p245 = scmp.lt.s32.totalorder %s18, 1
      %s246 = scalar_select %p245, %s18, 1
      %s247 = smul.addr %s246, 2
      %s248 = scalar_lea.vmem %s6, %s247
      %p249 = scmp.lt.s32.totalorder %s18, 1
      %s250 = scalar_select %p249, %s18, 1
      %s251 = smul.addr %s250, 4
      %s252 = smul.addr %s251, 8
      %s253 = scalar_lea.vmem %s0, %s252
      %p254 = scmp.lt.s32.totalorder %s18, 1
      %s255 = scalar_select %p254, %s18, 1
      %s256 = smul.addr %s255, 8
      %s257 = smul.addr %s256, 8
      %s258 = scalar_lea.vmem %s5, %s257
      %p259 = scmp.lt.s32.totalorder %s18, 1
      %s260 = scalar_select %p259, %s18, 1
      %s261 = smul.addr %s260, 2
      %s262 = scalar_lea.vmem %s6, %s261
      %v263 = vld [vmem:[%s253] sm:$0xff]
      %v264 = vld [vmem:[%s253 + $0x8] sm:$0xff]
      %v265 = vld [vmem:[%s253 + $0x10] sm:$0xff]
      %v266 = vld [vmem:[%s253 + $0x18] sm:$0xff]
      %v267 = vld [vmem:[%s1] sm:$0x1]
      %v268 = vld [vmem:[%s2] sm:$0x1]
      %v269 = vlaneseq
      %v270 = vshrl.u32 %v269, 7
      %v271 = vsub.s32 0, %v270
      %v272 = vrot.slane %v267, %v271
      %274 = vbcast.lane.b32.xlu0 %v272, 256
      %v275 = vpop.permute.xlu0 %274
      %v276 = vlaneseq
      %v277 = vshrl.u32 %v276, 7
      %v278 = vsub.s32 0, %v277
      %v279 = vrot.slane %v275, %v278
      %v280 = vlaneseq
      %v281 = vshrl.u32 %v280, 7
      %v282 = vsub.s32 1, %v281
      %v283 = vrot.slane %v275, %v282
      %v284 = vlaneseq
      %v285 = vshrl.u32 %v284, 7
      %v286 = vsub.s32 2, %v285
      %v287 = vrot.slane %v275, %v286
      %v288 = vlaneseq
      %v289 = vshrl.u32 %v288, 7
      %v290 = vsub.s32 3, %v289
      %v291 = vrot.slane %v275, %v290
      %v292 = vmul.f32 %v263, %v279
      %v293 = vmul.f32 %v264, %v283
      %v294 = vmul.f32 %v265, %v287
      %v295 = vmul.f32 %v266, %v291
      %v296 = vlaneseq
      %v297 = vshrl.u32 %v296, 7
      %v298 = vsub.s32 0, %v297
      %v299 = vrot.slane %v268, %v298
      %301 = vbcast.lane.b32.xlu0 %v299, 256
      %v302 = vpop.permute.xlu0 %301
      %v303 = vlaneseq
      %v304 = vshrl.u32 %v303, 7
      %v305 = vsub.s32 0, %v304
      %v306 = vrot.slane %v302, %v305
      %v307 = vlaneseq
      %v308 = vshrl.u32 %v307, 7
      %v309 = vsub.s32 1, %v308
      %v310 = vrot.slane %v302, %v309
      %v311 = vlaneseq
      %v312 = vshrl.u32 %v311, 7
      %v313 = vsub.s32 2, %v312
      %v314 = vrot.slane %v302, %v313
      %v315 = vlaneseq
      %v316 = vshrl.u32 %v315, 7
      %v317 = vsub.s32 3, %v316
      %v318 = vrot.slane %v302, %v317
      %v319 = vadd.f32 %v292, %v306
      %v320 = vadd.f32 %v293, %v310
      %v321 = vadd.f32 %v294, %v314
      %v322 = vadd.f32 %v295, %v318
      %v323 = vmax.f32 %v319, 0.0
      %v324 = vmax.f32 %v320, 0.0
      %v325 = vmax.f32 %v321, 0.0
      %v326 = vmax.f32 %v322, 0.0
      %v327 = vld [vmem:[%s3] sm:$0xff]
      %v328 = vld [vmem:[%s4] sm:$0xff]
      %v333 = vrot.slane %v323, 7
      %v334 = vrot.slane %v324, 7
      %v335 = vrot.slane %v325, 7
      %v336 = vrot.slane %v326, 7
      %vm341 = vcmask 1040384
      %v342 = vsel %vm341, 0.0, %v333
      %v343 = vsel %vm341, 0.0, %v334
      %v344 = vsel %vm341, 0.0, %v335
      %v345 = vsel %vm341, 0.0, %v336
      %v346 = vsel %vm341, %v333, 0.0
      %v347 = vsel %vm341, %v334, 0.0
      %v348 = vsel %vm341, %v335, 0.0
      %v349 = vsel %vm341, %v336, 0.0
      %354 = vrot.lane.b32.xlu0 %v342, 126
      %v355 = vpop.permute.xlu0 %354
      %356 = vrot.lane.b32.xlu0 %v343, 126
      %v357 = vpop.permute.xlu0 %356
      %358 = vrot.lane.b32.xlu0 %v344, 126
      %v359 = vpop.permute.xlu0 %358
      %360 = vrot.lane.b32.xlu0 %v345, 126
      %v361 = vpop.permute.xlu0 %360
      %366 = vrot.lane.b32.xlu0 %v342, 124
      %v367 = vpop.permute.xlu0 %366
      %368 = vrot.lane.b32.xlu0 %v343, 124
      %v369 = vpop.permute.xlu0 %368
      %370 = vrot.lane.b32.xlu0 %v344, 124
      %v371 = vpop.permute.xlu0 %370
      %372 = vrot.lane.b32.xlu0 %v345, 124
      %v373 = vpop.permute.xlu0 %372
      %vm382 = vcmask 1046528
      %v383 = vrot.slane %v342, 1
      %v384 = vrot.slane %v346, 1
      %v385 = vsel %vm382, %v383, %v384
      %v386 = vrot.slane %v343, 1
      %v387 = vrot.slane %v347, 1
      %v388 = vsel %vm382, %v386, %v387
      %v389 = vrot.slane %v344, 1
      %v390 = vrot.slane %v348, 1
      %v391 = vsel %vm382, %v389, %v390
      %v392 = vrot.slane %v345, 1
      %v393 = vrot.slane %v349, 1
      %v394 = vsel %vm382, %v392, %v393
      %399 = vrot.lane.b32.xlu0 %v385, 126
      %v400 = vpop.permute.xlu0 %399
      %401 = vrot.lane.b32.xlu0 %v388, 126
      %v402 = vpop.permute.xlu0 %401
      %403 = vrot.lane.b32.xlu0 %v391, 126
      %v404 = vpop.permute.xlu0 %403
      %405 = vrot.lane.b32.xlu0 %v394, 126
      %v406 = vpop.permute.xlu0 %405
      %411 = vrot.lane.b32.xlu0 %v385, 124
      %v412 = vpop.permute.xlu0 %411
      %413 = vrot.lane.b32.xlu0 %v388, 124
      %v414 = vpop.permute.xlu0 %413
      %415 = vrot.lane.b32.xlu0 %v391, 124
      %v416 = vpop.permute.xlu0 %415
      %417 = vrot.lane.b32.xlu0 %v394, 124
      %v418 = vpop.permute.xlu0 %417
      %vm423 = vcmask 1045504
      %v424 = vrot.slane %v342, 2
      %v425 = vrot.slane %v346, 2
      %v426 = vsel %vm423, %v424, %v425
      %v427 = vrot.slane %v343, 2
      %v428 = vrot.slane %v347, 2
      %v429 = vsel %vm423, %v427, %v428
      %v430 = vrot.slane %v344, 2
      %v431 = vrot.slane %v348, 2
      %v432 = vsel %vm423, %v430, %v431
      %v433 = vrot.slane %v345, 2
      %v434 = vrot.slane %v349, 2
      %v435 = vsel %vm423, %v433, %v434
      %440 = vrot.lane.b32.xlu0 %v426, 126
      %v441 = vpop.permute.xlu0 %440
      %442 = vrot.lane.b32.xlu0 %v429, 126
      %v443 = vpop.permute.xlu0 %442
      %444 = vrot.lane.b32.xlu0 %v432, 126
      %v445 = vpop.permute.xlu0 %444
      %446 = vrot.lane.b32.xlu0 %v435, 126
      %v447 = vpop.permute.xlu0 %446
      %452 = vrot.lane.b32.xlu0 %v426, 124
      %v453 = vpop.permute.xlu0 %452
      %454 = vrot.lane.b32.xlu0 %v429, 124
      %v455 = vpop.permute.xlu0 %454
      %456 = vrot.lane.b32.xlu0 %v432, 124
      %v457 = vpop.permute.xlu0 %456
      %458 = vrot.lane.b32.xlu0 %v435, 124
      %v459 = vpop.permute.xlu0 %458
      %v464 = vcombine.low %v342, %v344
      %v465 = vcombine.high %v342, %v344
      %v467 = vunpack.c.l.s4 1983009808
      %v468 = vunpack.c.0.s8 %v467
      %v469 = vlaneseq
      %v470 = vshrl.u32 %v469, 7
      %v471 = vsub.s32 %v468, %v470
      %v472 = vrot.slane %v464, %v471
      %v474 = vunpack.c.l.s4 1983009808
      %v475 = vunpack.c.0.s8 %v474
      %v476 = vlaneseq
      %v477 = vshrl.u32 %v476, 7
      %v478 = vsub.s32 %v475, %v477
      %v479 = vrot.slane %v465, %v478
      %v480 = vcombine.low %v343, %v345
      %v481 = vcombine.high %v343, %v345
      %v483 = vunpack.c.l.s4 1983009808
      %v484 = vunpack.c.0.s8 %v483
      %v485 = vlaneseq
      %v486 = vshrl.u32 %v485, 7
      %v487 = vsub.s32 %v484, %v486
      %v488 = vrot.slane %v480, %v487
      %v490 = vunpack.c.l.s4 1983009808
      %v491 = vunpack.c.0.s8 %v490
      %v492 = vlaneseq
      %v493 = vshrl.u32 %v492, 7
      %v494 = vsub.s32 %v491, %v493
      %v495 = vrot.slane %v481, %v494
      %v496 = vcombine.low %v355, %v359
      %v497 = vcombine.high %v355, %v359
      %v499 = vunpack.c.l.s4 1983009808
      %v500 = vunpack.c.0.s8 %v499
      %v501 = vlaneseq
      %v502 = vshrl.u32 %v501, 7
      %v503 = vsub.s32 %v500, %v502
      %v504 = vrot.slane %v496, %v503
      %v506 = vunpack.c.l.s4 1983009808
      %v507 = vunpack.c.0.s8 %v506
      %v508 = vlaneseq
      %v509 = vshrl.u32 %v508, 7
      %v510 = vsub.s32 %v507, %v509
      %v511 = vrot.slane %v497, %v510
      %v512 = vcombine.low %v357, %v361
      %v513 = vcombine.high %v357, %v361
      %v515 = vunpack.c.l.s4 1983009808
      %v516 = vunpack.c.0.s8 %v515
      %v517 = vlaneseq
      %v518 = vshrl.u32 %v517, 7
      %v519 = vsub.s32 %v516, %v518
      %v520 = vrot.slane %v512, %v519
      %v522 = vunpack.c.l.s4 1983009808
      %v523 = vunpack.c.0.s8 %v522
      %v524 = vlaneseq
      %v525 = vshrl.u32 %v524, 7
      %v526 = vsub.s32 %v523, %v525
      %v527 = vrot.slane %v513, %v526
      %v528 = vcombine.low %v472, %v488
      %v529 = vcombine.high %v472, %v488
      %v531 = vunpack.c.l.s4 1934713408
      %v532 = vunpack.c.0.s8 %v531
      %v533 = vlaneseq
      %v534 = vshrl.u32 %v533, 7
      %v535 = vsub.s32 %v532, %v534
      %v536 = vrot.slane %v528, %v535
      %v538 = vunpack.c.l.s4 1934713408
      %v539 = vunpack.c.0.s8 %v538
      %v540 = vlaneseq
      %v541 = vshrl.u32 %v540, 7
      %v542 = vsub.s32 %v539, %v541
      %v543 = vrot.slane %v529, %v542
      %v544 = vcombine.low %v479, %v495
      %v545 = vcombine.high %v479, %v495
      %v547 = vunpack.c.l.s4 1934713408
      %v548 = vunpack.c.0.s8 %v547
      %v549 = vlaneseq
      %v550 = vshrl.u32 %v549, 7
      %v551 = vsub.s32 %v548, %v550
      %v552 = vrot.slane %v544, %v551
      %v554 = vunpack.c.l.s4 1934713408
      %v555 = vunpack.c.0.s8 %v554
      %v556 = vlaneseq
      %v557 = vshrl.u32 %v556, 7
      %v558 = vsub.s32 %v555, %v557
      %v559 = vrot.slane %v545, %v558
      %v560 = vcombine.low %v504, %v520
      %v561 = vcombine.high %v504, %v520
      %v563 = vunpack.c.l.s4 1934713408
      %v564 = vunpack.c.0.s8 %v563
      %v565 = vlaneseq
      %v566 = vshrl.u32 %v565, 7
      %v567 = vsub.s32 %v564, %v566
      %v568 = vrot.slane %v560, %v567
      %v570 = vunpack.c.l.s4 1934713408
      %v571 = vunpack.c.0.s8 %v570
      %v572 = vlaneseq
      %v573 = vshrl.u32 %v572, 7
      %v574 = vsub.s32 %v571, %v573
      %v575 = vrot.slane %v561, %v574
      %v576 = vcombine.low %v511, %v527
      %v577 = vcombine.high %v511, %v527
      %v579 = vunpack.c.l.s4 1934713408
      %v580 = vunpack.c.0.s8 %v579
      %v581 = vlaneseq
      %v582 = vshrl.u32 %v581, 7
      %v583 = vsub.s32 %v580, %v582
      %v584 = vrot.slane %v576, %v583
      %v586 = vunpack.c.l.s4 1934713408
      %v587 = vunpack.c.0.s8 %v586
      %v588 = vlaneseq
      %v589 = vshrl.u32 %v588, 7
      %v590 = vsub.s32 %v587, %v589
      %v591 = vrot.slane %v577, %v590
      %v592 = vcombine.low %v536, %v568
      %v593 = vcombine.high %v536, %v568
      %v594 = vcombine.low %v543, %v575
      %v595 = vcombine.high %v543, %v575
      %v596 = vcombine.low %v552, %v584
      %v597 = vcombine.high %v552, %v584
      %v598 = vcombine.low %v559, %v591
      %v599 = vcombine.high %v559, %v591
      %v600 = vcombine.low %v367, %v371
      %v601 = vcombine.high %v367, %v371
      %v603 = vunpack.c.l.s4 1983009808
      %v604 = vunpack.c.0.s8 %v603
      %v605 = vlaneseq
      %v606 = vshrl.u32 %v605, 7
      %v607 = vsub.s32 %v604, %v606
      %v608 = vrot.slane %v600, %v607
      %v610 = vunpack.c.l.s4 1983009808
      %v611 = vunpack.c.0.s8 %v610
      %v612 = vlaneseq
      %v613 = vshrl.u32 %v612, 7
      %v614 = vsub.s32 %v611, %v613
      %v615 = vrot.slane %v601, %v614
      %v616 = vcombine.low %v369, %v373
      %v617 = vcombine.high %v369, %v373
      %v619 = vunpack.c.l.s4 1983009808
      %v620 = vunpack.c.0.s8 %v619
      %v621 = vlaneseq
      %v622 = vshrl.u32 %v621, 7
      %v623 = vsub.s32 %v620, %v622
      %v624 = vrot.slane %v616, %v623
      %v626 = vunpack.c.l.s4 1983009808
      %v627 = vunpack.c.0.s8 %v626
      %v628 = vlaneseq
      %v629 = vshrl.u32 %v628, 7
      %v630 = vsub.s32 %v627, %v629
      %v631 = vrot.slane %v617, %v630
      %v632 = vcombine.low %v385, %v391
      %v633 = vcombine.high %v385, %v391
      %v635 = vunpack.c.l.s4 1983009808
      %v636 = vunpack.c.0.s8 %v635
      %v637 = vlaneseq
      %v638 = vshrl.u32 %v637, 7
      %v639 = vsub.s32 %v636, %v638
      %v640 = vrot.slane %v632, %v639
      %v642 = vunpack.c.l.s4 1983009808
      %v643 = vunpack.c.0.s8 %v642
      %v644 = vlaneseq
      %v645 = vshrl.u32 %v644, 7
      %v646 = vsub.s32 %v643, %v645
      %v647 = vrot.slane %v633, %v646
      %v648 = vcombine.low %v388, %v394
      %v649 = vcombine.high %v388, %v394
      %v651 = vunpack.c.l.s4 1983009808
      %v652 = vunpack.c.0.s8 %v651
      %v653 = vlaneseq
      %v654 = vshrl.u32 %v653, 7
      %v655 = vsub.s32 %v652, %v654
      %v656 = vrot.slane %v648, %v655
      %v658 = vunpack.c.l.s4 1983009808
      %v659 = vunpack.c.0.s8 %v658
      %v660 = vlaneseq
      %v661 = vshrl.u32 %v660, 7
      %v662 = vsub.s32 %v659, %v661
      %v663 = vrot.slane %v649, %v662
      %v664 = vcombine.low %v608, %v624
      %v665 = vcombine.high %v608, %v624
      %v667 = vunpack.c.l.s4 1934713408
      %v668 = vunpack.c.0.s8 %v667
      %v669 = vlaneseq
      %v670 = vshrl.u32 %v669, 7
      %v671 = vsub.s32 %v668, %v670
      %v672 = vrot.slane %v664, %v671
      %v674 = vunpack.c.l.s4 1934713408
      %v675 = vunpack.c.0.s8 %v674
      %v676 = vlaneseq
      %v677 = vshrl.u32 %v676, 7
      %v678 = vsub.s32 %v675, %v677
      %v679 = vrot.slane %v665, %v678
      %v680 = vcombine.low %v615, %v631
      %v681 = vcombine.high %v615, %v631
      %v683 = vunpack.c.l.s4 1934713408
      %v684 = vunpack.c.0.s8 %v683
      %v685 = vlaneseq
      %v686 = vshrl.u32 %v685, 7
      %v687 = vsub.s32 %v684, %v686
      %v688 = vrot.slane %v680, %v687
      %v690 = vunpack.c.l.s4 1934713408
      %v691 = vunpack.c.0.s8 %v690
      %v692 = vlaneseq
      %v693 = vshrl.u32 %v692, 7
      %v694 = vsub.s32 %v691, %v693
      %v695 = vrot.slane %v681, %v694
      %v696 = vcombine.low %v640, %v656
      %v697 = vcombine.high %v640, %v656
      %v699 = vunpack.c.l.s4 1934713408
      %v700 = vunpack.c.0.s8 %v699
      %v701 = vlaneseq
      %v702 = vshrl.u32 %v701, 7
      %v703 = vsub.s32 %v700, %v702
      %v704 = vrot.slane %v696, %v703
      %v706 = vunpack.c.l.s4 1934713408
      %v707 = vunpack.c.0.s8 %v706
      %v708 = vlaneseq
      %v709 = vshrl.u32 %v708, 7
      %v710 = vsub.s32 %v707, %v709
      %v711 = vrot.slane %v697, %v710
      %v712 = vcombine.low %v647, %v663
      %v713 = vcombine.high %v647, %v663
      %v715 = vunpack.c.l.s4 1934713408
      %v716 = vunpack.c.0.s8 %v715
      %v717 = vlaneseq
      %v718 = vshrl.u32 %v717, 7
      %v719 = vsub.s32 %v716, %v718
      %v720 = vrot.slane %v712, %v719
      %v722 = vunpack.c.l.s4 1934713408
      %v723 = vunpack.c.0.s8 %v722
      %v724 = vlaneseq
      %v725 = vshrl.u32 %v724, 7
      %v726 = vsub.s32 %v723, %v725
      %v727 = vrot.slane %v713, %v726
      %v728 = vcombine.low %v672, %v704
      %v729 = vcombine.high %v672, %v704
      %v730 = vcombine.low %v679, %v711
      %v731 = vcombine.high %v679, %v711
      %v732 = vcombine.low %v688, %v720
      %v733 = vcombine.high %v688, %v720
      %v734 = vcombine.low %v695, %v727
      %v735 = vcombine.high %v695, %v727
      %v736 = vcombine.low %v400, %v404
      %v737 = vcombine.high %v400, %v404
      %v739 = vunpack.c.l.s4 1983009808
      %v740 = vunpack.c.0.s8 %v739
      %v741 = vlaneseq
      %v742 = vshrl.u32 %v741, 7
      %v743 = vsub.s32 %v740, %v742
      %v744 = vrot.slane %v736, %v743
      %v746 = vunpack.c.l.s4 1983009808
      %v747 = vunpack.c.0.s8 %v746
      %v748 = vlaneseq
      %v749 = vshrl.u32 %v748, 7
      %v750 = vsub.s32 %v747, %v749
      %v751 = vrot.slane %v737, %v750
      %v752 = vcombine.low %v402, %v406
      %v753 = vcombine.high %v402, %v406
      %v755 = vunpack.c.l.s4 1983009808
      %v756 = vunpack.c.0.s8 %v755
      %v757 = vlaneseq
      %v758 = vshrl.u32 %v757, 7
      %v759 = vsub.s32 %v756, %v758
      %v760 = vrot.slane %v752, %v759
      %v762 = vunpack.c.l.s4 1983009808
      %v763 = vunpack.c.0.s8 %v762
      %v764 = vlaneseq
      %v765 = vshrl.u32 %v764, 7
      %v766 = vsub.s32 %v763, %v765
      %v767 = vrot.slane %v753, %v766
      %v768 = vcombine.low %v412, %v416
      %v769 = vcombine.high %v412, %v416
      %v771 = vunpack.c.l.s4 1983009808
      %v772 = vunpack.c.0.s8 %v771
      %v773 = vlaneseq
      %v774 = vshrl.u32 %v773, 7
      %v775 = vsub.s32 %v772, %v774
      %v776 = vrot.slane %v768, %v775
      %v778 = vunpack.c.l.s4 1983009808
      %v779 = vunpack.c.0.s8 %v778
      %v780 = vlaneseq
      %v781 = vshrl.u32 %v780, 7
      %v782 = vsub.s32 %v779, %v781
      %v783 = vrot.slane %v769, %v782
      %v784 = vcombine.low %v414, %v418
      %v785 = vcombine.high %v414, %v418
      %v787 = vunpack.c.l.s4 1983009808
      %v788 = vunpack.c.0.s8 %v787
      %v789 = vlaneseq
      %v790 = vshrl.u32 %v789, 7
      %v791 = vsub.s32 %v788, %v790
      %v792 = vrot.slane %v784, %v791
      %v794 = vunpack.c.l.s4 1983009808
      %v795 = vunpack.c.0.s8 %v794
      %v796 = vlaneseq
      %v797 = vshrl.u32 %v796, 7
      %v798 = vsub.s32 %v795, %v797
      %v799 = vrot.slane %v785, %v798
      %v800 = vcombine.low %v744, %v760
      %v801 = vcombine.high %v744, %v760
      %v803 = vunpack.c.l.s4 1934713408
      %v804 = vunpack.c.0.s8 %v803
      %v805 = vlaneseq
      %v806 = vshrl.u32 %v805, 7
      %v807 = vsub.s32 %v804, %v806
      %v808 = vrot.slane %v800, %v807
      %v810 = vunpack.c.l.s4 1934713408
      %v811 = vunpack.c.0.s8 %v810
      %v812 = vlaneseq
      %v813 = vshrl.u32 %v812, 7
      %v814 = vsub.s32 %v811, %v813
      %v815 = vrot.slane %v801, %v814
      %v816 = vcombine.low %v751, %v767
      %v817 = vcombine.high %v751, %v767
      %v819 = vunpack.c.l.s4 1934713408
      %v820 = vunpack.c.0.s8 %v819
      %v821 = vlaneseq
      %v822 = vshrl.u32 %v821, 7
      %v823 = vsub.s32 %v820, %v822
      %v824 = vrot.slane %v816, %v823
      %v826 = vunpack.c.l.s4 1934713408
      %v827 = vunpack.c.0.s8 %v826
      %v828 = vlaneseq
      %v829 = vshrl.u32 %v828, 7
      %v830 = vsub.s32 %v827, %v829
      %v831 = vrot.slane %v817, %v830
      %v832 = vcombine.low %v776, %v792
      %v833 = vcombine.high %v776, %v792
      %v835 = vunpack.c.l.s4 1934713408
      %v836 = vunpack.c.0.s8 %v835
      %v837 = vlaneseq
      %v838 = vshrl.u32 %v837, 7
      %v839 = vsub.s32 %v836, %v838
      %v840 = vrot.slane %v832, %v839
      %v842 = vunpack.c.l.s4 1934713408
      %v843 = vunpack.c.0.s8 %v842
      %v844 = vlaneseq
      %v845 = vshrl.u32 %v844, 7
      %v846 = vsub.s32 %v843, %v845
      %v847 = vrot.slane %v833, %v846
      %v848 = vcombine.low %v783, %v799
      %v849 = vcombine.high %v783, %v799
      %v851 = vunpack.c.l.s4 1934713408
      %v852 = vunpack.c.0.s8 %v851
      %v853 = vlaneseq
      %v854 = vshrl.u32 %v853, 7
      %v855 = vsub.s32 %v852, %v854
      %v856 = vrot.slane %v848, %v855
      %v858 = vunpack.c.l.s4 1934713408
      %v859 = vunpack.c.0.s8 %v858
      %v860 = vlaneseq
      %v861 = vshrl.u32 %v860, 7
      %v862 = vsub.s32 %v859, %v861
      %v863 = vrot.slane %v849, %v862
      %v864 = vcombine.low %v808, %v840
      %v865 = vcombine.high %v808, %v840
      %v866 = vcombine.low %v815, %v847
      %v867 = vcombine.high %v815, %v847
      %v868 = vcombine.low %v824, %v856
      %v869 = vcombine.high %v824, %v856
      %v870 = vcombine.low %v831, %v863
      %v871 = vcombine.high %v831, %v863
      %v872 = vcombine.low %v426, %v432
      %v873 = vcombine.high %v426, %v432
      %v875 = vunpack.c.l.s4 1983009808
      %v876 = vunpack.c.0.s8 %v875
      %v877 = vlaneseq
      %v878 = vshrl.u32 %v877, 7
      %v879 = vsub.s32 %v876, %v878
      %v880 = vrot.slane %v872, %v879
      %v882 = vunpack.c.l.s4 1983009808
      %v883 = vunpack.c.0.s8 %v882
      %v884 = vlaneseq
      %v885 = vshrl.u32 %v884, 7
      %v886 = vsub.s32 %v883, %v885
      %v887 = vrot.slane %v873, %v886
      %v888 = vcombine.low %v429, %v435
      %v889 = vcombine.high %v429, %v435
      %v891 = vunpack.c.l.s4 1983009808
      %v892 = vunpack.c.0.s8 %v891
      %v893 = vlaneseq
      %v894 = vshrl.u32 %v893, 7
      %v895 = vsub.s32 %v892, %v894
      %v896 = vrot.slane %v888, %v895
      %v898 = vunpack.c.l.s4 1983009808
      %v899 = vunpack.c.0.s8 %v898
      %v900 = vlaneseq
      %v901 = vshrl.u32 %v900, 7
      %v902 = vsub.s32 %v899, %v901
      %v903 = vrot.slane %v889, %v902
      %v904 = vcombine.low %v441, %v445
      %v905 = vcombine.high %v441, %v445
      %v907 = vunpack.c.l.s4 1983009808
      %v908 = vunpack.c.0.s8 %v907
      %v909 = vlaneseq
      %v910 = vshrl.u32 %v909, 7
      %v911 = vsub.s32 %v908, %v910
      %v912 = vrot.slane %v904, %v911
      %v914 = vunpack.c.l.s4 1983009808
      %v915 = vunpack.c.0.s8 %v914
      %v916 = vlaneseq
      %v917 = vshrl.u32 %v916, 7
      %v918 = vsub.s32 %v915, %v917
      %v919 = vrot.slane %v905, %v918
      %v920 = vcombine.low %v443, %v447
      %v921 = vcombine.high %v443, %v447
      %v923 = vunpack.c.l.s4 1983009808
      %v924 = vunpack.c.0.s8 %v923
      %v925 = vlaneseq
      %v926 = vshrl.u32 %v925, 7
      %v927 = vsub.s32 %v924, %v926
      %v928 = vrot.slane %v920, %v927
      %v930 = vunpack.c.l.s4 1983009808
      %v931 = vunpack.c.0.s8 %v930
      %v932 = vlaneseq
      %v933 = vshrl.u32 %v932, 7
      %v934 = vsub.s32 %v931, %v933
      %v935 = vrot.slane %v921, %v934
      %v936 = vcombine.low %v880, %v896
      %v937 = vcombine.high %v880, %v896
      %v939 = vunpack.c.l.s4 1934713408
      %v940 = vunpack.c.0.s8 %v939
      %v941 = vlaneseq
      %v942 = vshrl.u32 %v941, 7
      %v943 = vsub.s32 %v940, %v942
      %v944 = vrot.slane %v936, %v943
      %v946 = vunpack.c.l.s4 1934713408
      %v947 = vunpack.c.0.s8 %v946
      %v948 = vlaneseq
      %v949 = vshrl.u32 %v948, 7
      %v950 = vsub.s32 %v947, %v949
      %v951 = vrot.slane %v937, %v950
      %v952 = vcombine.low %v887, %v903
      %v953 = vcombine.high %v887, %v903
      %v955 = vunpack.c.l.s4 1934713408
      %v956 = vunpack.c.0.s8 %v955
      %v957 = vlaneseq
      %v958 = vshrl.u32 %v957, 7
      %v959 = vsub.s32 %v956, %v958
      %v960 = vrot.slane %v952, %v959
      %v962 = vunpack.c.l.s4 1934713408
      %v963 = vunpack.c.0.s8 %v962
      %v964 = vlaneseq
      %v965 = vshrl.u32 %v964, 7
      %v966 = vsub.s32 %v963, %v965
      %v967 = vrot.slane %v953, %v966
      %v968 = vcombine.low %v912, %v928
      %v969 = vcombine.high %v912, %v928
      %v971 = vunpack.c.l.s4 1934713408
      %v972 = vunpack.c.0.s8 %v971
      %v973 = vlaneseq
      %v974 = vshrl.u32 %v973, 7
      %v975 = vsub.s32 %v972, %v974
      %v976 = vrot.slane %v968, %v975
      %v978 = vunpack.c.l.s4 1934713408
      %v979 = vunpack.c.0.s8 %v978
      %v980 = vlaneseq
      %v981 = vshrl.u32 %v980, 7
      %v982 = vsub.s32 %v979, %v981
      %v983 = vrot.slane %v969, %v982
      %v984 = vcombine.low %v919, %v935
      %v985 = vcombine.high %v919, %v935
      %v987 = vunpack.c.l.s4 1934713408
      %v988 = vunpack.c.0.s8 %v987
      %v989 = vlaneseq
      %v990 = vshrl.u32 %v989, 7
      %v991 = vsub.s32 %v988, %v990
      %v992 = vrot.slane %v984, %v991
      %v994 = vunpack.c.l.s4 1934713408
      %v995 = vunpack.c.0.s8 %v994
      %v996 = vlaneseq
      %v997 = vshrl.u32 %v996, 7
      %v998 = vsub.s32 %v995, %v997
      %v999 = vrot.slane %v985, %v998
      %v1000 = vcombine.low %v944, %v976
      %v1001 = vcombine.high %v944, %v976
      %v1002 = vcombine.low %v951, %v983
      %v1003 = vcombine.high %v951, %v983
      %v1004 = vcombine.low %v960, %v992
      %v1005 = vcombine.high %v960, %v992
      %v1006 = vcombine.low %v967, %v999
      %v1007 = vcombine.high %v967, %v999
      %v1008 = vcombine.low %v453, %v457
      %v1009 = vcombine.high %v453, %v457
      %v1011 = vunpack.c.l.s4 1983009808
      %v1012 = vunpack.c.0.s8 %v1011
      %v1013 = vlaneseq
      %v1014 = vshrl.u32 %v1013, 7
      %v1015 = vsub.s32 %v1012, %v1014
      %v1016 = vrot.slane %v1008, %v1015
      %v1018 = vunpack.c.l.s4 1983009808
      %v1019 = vunpack.c.0.s8 %v1018
      %v1020 = vlaneseq
      %v1021 = vshrl.u32 %v1020, 7
      %v1022 = vsub.s32 %v1019, %v1021
      %v1023 = vrot.slane %v1009, %v1022
      %v1024 = vcombine.low %v455, %v459
      %v1025 = vcombine.high %v455, %v459
      %v1027 = vunpack.c.l.s4 1983009808
      %v1028 = vunpack.c.0.s8 %v1027
      %v1029 = vlaneseq
      %v1030 = vshrl.u32 %v1029, 7
      %v1031 = vsub.s32 %v1028, %v1030
      %v1032 = vrot.slane %v1024, %v1031
      %v1034 = vunpack.c.l.s4 1983009808
      %v1035 = vunpack.c.0.s8 %v1034
      %v1036 = vlaneseq
      %v1037 = vshrl.u32 %v1036, 7
      %v1038 = vsub.s32 %v1035, %v1037
      %v1039 = vrot.slane %v1025, %v1038
      %v1040 = vcombine.low %v1016, %v1032
      %v1041 = vcombine.high %v1016, %v1032
      %v1043 = vunpack.c.l.s4 1934713408
      %v1044 = vunpack.c.0.s8 %v1043
      %v1045 = vlaneseq
      %v1046 = vshrl.u32 %v1045, 7
      %v1047 = vsub.s32 %v1044, %v1046
      %v1048 = vrot.slane %v1040, %v1047
      %v1050 = vunpack.c.l.s4 1934713408
      %v1051 = vunpack.c.0.s8 %v1050
      %v1052 = vlaneseq
      %v1053 = vshrl.u32 %v1052, 7
      %v1054 = vsub.s32 %v1051, %v1053
      %v1055 = vrot.slane %v1041, %v1054
      %v1056 = vcombine.low %v1023, %v1039
      %v1057 = vcombine.high %v1023, %v1039
      %v1059 = vunpack.c.l.s4 1934713408
      %v1060 = vunpack.c.0.s8 %v1059
      %v1061 = vlaneseq
      %v1062 = vshrl.u32 %v1061, 7
      %v1063 = vsub.s32 %v1060, %v1062
      %v1064 = vrot.slane %v1056, %v1063
      %v1066 = vunpack.c.l.s4 1934713408
      %v1067 = vunpack.c.0.s8 %v1066
      %v1068 = vlaneseq
      %v1069 = vshrl.u32 %v1068, 7
      %v1070 = vsub.s32 %v1067, %v1069
      %v1071 = vrot.slane %v1057, %v1070
      %v1072 = vcombine.high %v1048, 0.0
      %v1073 = vcombine.high %v1055, 0.0
      %v1074 = vcombine.high %v1064, 0.0
      %v1075 = vcombine.high %v1071, 0.0
      %1081 = vrot.lane.b32.xlu0 %v593, 12
      %v1082 = vpop.permute.xlu0 %1081
      %1083 = vrot.lane.b32.xlu0 %v729, 12
      %v1084 = vpop.permute.xlu0 %1083
      %1085 = vrot.lane.b32.xlu0 %v865, 12
      %v1086 = vpop.permute.xlu0 %1085
      %1087 = vrot.lane.b32.xlu0 %v1001, 12
      %v1088 = vpop.permute.xlu0 %1087
      %1089 = vrot.lane.b32.xlu0 %v1072, 12
      %v1090 = vpop.permute.xlu0 %1089
      %1101 = vrot.lane.b32.xlu0 %v594, 24
      %v1102 = vpop.permute.xlu0 %1101
      %1103 = vrot.lane.b32.xlu0 %v730, 24
      %v1104 = vpop.permute.xlu0 %1103
      %1105 = vrot.lane.b32.xlu0 %v866, 24
      %v1106 = vpop.permute.xlu0 %1105
      %1107 = vrot.lane.b32.xlu0 %v1002, 24
      %v1108 = vpop.permute.xlu0 %1107
      %1109 = vrot.lane.b32.xlu0 %v1055, 24
      %v1110 = vpop.permute.xlu0 %1109
      %1121 = vrot.lane.b32.xlu0 %v595, 36
      %v1122 = vpop.permute.xlu0 %1121
      %1123 = vrot.lane.b32.xlu0 %v731, 36
      %v1124 = vpop.permute.xlu0 %1123
      %1125 = vrot.lane.b32.xlu0 %v867, 36
      %v1126 = vpop.permute.xlu0 %1125
      %1127 = vrot.lane.b32.xlu0 %v1003, 36
      %v1128 = vpop.permute.xlu0 %1127
      %1129 = vrot.lane.b32.xlu0 %v1073, 36
      %v1130 = vpop.permute.xlu0 %1129
      %1141 = vrot.lane.b32.xlu0 %v596, 48
      %v1142 = vpop.permute.xlu0 %1141
      %1143 = vrot.lane.b32.xlu0 %v732, 48
      %v1144 = vpop.permute.xlu0 %1143
      %1145 = vrot.lane.b32.xlu0 %v868, 48
      %v1146 = vpop.permute.xlu0 %1145
      %1147 = vrot.lane.b32.xlu0 %v1004, 48
      %v1148 = vpop.permute.xlu0 %1147
      %1149 = vrot.lane.b32.xlu0 %v1064, 48
      %v1150 = vpop.permute.xlu0 %1149
      %1161 = vrot.lane.b32.xlu0 %v597, 60
      %v1162 = vpop.permute.xlu0 %1161
      %1163 = vrot.lane.b32.xlu0 %v733, 60
      %v1164 = vpop.permute.xlu0 %1163
      %1165 = vrot.lane.b32.xlu0 %v869, 60
      %v1166 = vpop.permute.xlu0 %1165
      %1167 = vrot.lane.b32.xlu0 %v1005, 60
      %v1168 = vpop.permute.xlu0 %1167
      %1169 = vrot.lane.b32.xlu0 %v1074, 60
      %v1170 = vpop.permute.xlu0 %1169
      %1181 = vrot.lane.b32.xlu0 %v598, 72
      %v1182 = vpop.permute.xlu0 %1181
      %1183 = vrot.lane.b32.xlu0 %v734, 72
      %v1184 = vpop.permute.xlu0 %1183
      %1185 = vrot.lane.b32.xlu0 %v870, 72
      %v1186 = vpop.permute.xlu0 %1185
      %1187 = vrot.lane.b32.xlu0 %v1006, 72
      %v1188 = vpop.permute.xlu0 %1187
      %1189 = vrot.lane.b32.xlu0 %v1071, 72
      %v1190 = vpop.permute.xlu0 %1189
      %1201 = vrot.lane.b32.xlu0 %v599, 84
      %v1202 = vpop.permute.xlu0 %1201
      %1203 = vrot.lane.b32.xlu0 %v735, 84
      %v1204 = vpop.permute.xlu0 %1203
      %1205 = vrot.lane.b32.xlu0 %v871, 84
      %v1206 = vpop.permute.xlu0 %1205
      %1207 = vrot.lane.b32.xlu0 %v1007, 84
      %v1208 = vpop.permute.xlu0 %1207
      %1209 = vrot.lane.b32.xlu0 %v1075, 84
      %v1210 = vpop.permute.xlu0 %1209
      %vm1216 = vcmask 97280
      %v1217 = vsel %vm1216, %v592, %v1082
      %v1218 = vsel %vm1216, %v728, %v1084
      %v1219 = vsel %vm1216, %v864, %v1086
      %v1220 = vsel %vm1216, %v1000, %v1088
      %v1221 = vsel %vm1216, %v1048, %v1090
      %vm1222 = vcmask 195584
      %v1223 = vsel %vm1222, %v1217, %v1102
      %v1224 = vsel %vm1222, %v1218, %v1104
      %v1225 = vsel %vm1222, %v1219, %v1106
      %v1226 = vsel %vm1222, %v1220, %v1108
      %v1227 = vsel %vm1222, %v1221, %v1110
      %vm1228 = vcmask 293888
      %v1229 = vsel %vm1228, %v1223, %v1122
      %v1230 = vsel %vm1228, %v1224, %v1124
      %v1231 = vsel %vm1228, %v1225, %v1126
      %v1232 = vsel %vm1228, %v1226, %v1128
      %v1233 = vsel %vm1228, %v1227, %v1130
      %vm1234 = vcmask 392192
      %v1235 = vsel %vm1234, %v1229, %v1142
      %v1236 = vsel %vm1234, %v1230, %v1144
      %v1237 = vsel %vm1234, %v1231, %v1146
      %v1238 = vsel %vm1234, %v1232, %v1148
      %v1239 = vsel %vm1234, %v1233, %v1150
      %vm1240 = vcmask 490496
      %v1241 = vsel %vm1240, %v1235, %v1162
      %v1242 = vsel %vm1240, %v1236, %v1164
      %v1243 = vsel %vm1240, %v1237, %v1166
      %v1244 = vsel %vm1240, %v1238, %v1168
      %v1245 = vsel %vm1240, %v1239, %v1170
      %vm1246 = vcmask 588800
      %v1247 = vsel %vm1246, %v1241, %v1182
      %v1248 = vsel %vm1246, %v1242, %v1184
      %v1249 = vsel %vm1246, %v1243, %v1186
      %v1250 = vsel %vm1246, %v1244, %v1188
      %v1251 = vsel %vm1246, %v1245, %v1190
      %vm1252 = vcmask 687104
      %v1253 = vsel %vm1252, %v1247, %v1202
      %v1254 = vsel %vm1252, %v1248, %v1204
      %v1255 = vsel %vm1252, %v1249, %v1206
      %v1256 = vsel %vm1252, %v1250, %v1208
      %v1257 = vsel %vm1252, %v1251, %v1210
      %1259 = vset.pattern.permute.xlu0 0
      %1260 = vperm.xlu0 %1259, %v328
      %v1261 = vpop.permute.xlu0 %1260
      %v1264 = vsel %vm1228, %v327, 0
      %vm1266 = vcmask 1043456
      %v1268 = vsel %vm1266, %v1257, 0
      %1270 = vmatprep.subr.mxu0 0.0
      %1271 = vmatpush1.msra.mxu0 0.0
      %1272 = vmatprep.subr.mxu0 0.0
      %1273 = vmatpush1.msra.mxu0 0.0
      %1274 = vmatprep.subr.mxu0 0.0
      %1275 = vmatpush1.msra.mxu0 0.0
      %1276 = vmatprep.subr.mxu0 0.0
      %1277 = vmatpush1.msra.mxu0 0.0
      %1278 = vmatprep.subr.mxu0 0.0
      %1279 = vmatpush1.msra.mxu0 0.0
      %1280 = vmatprep.subr.mxu0 0.0
      %1281 = vmatpush1.msra.mxu0 0.0
      %1282 = vmatprep.subr.mxu0 0.0
      %1283 = vmatpush1.msra.mxu0 0.0
      %1284 = vmatprep.subr.mxu0 0.0
      %1285 = vmatpush1.msra.mxu0 0.0
      %1286 = vmatprep.subr.mxu0 0.0
      %1287 = vmatpush1.msra.mxu0 0.0
      %1288 = vmatprep.subr.mxu0 0.0
      %1289 = vmatpush1.msra.mxu0 0.0
      %1290 = vmatprep.subr.mxu0 0.0
      %1291 = vmatpush1.msra.mxu0 0.0
      %1292 = vmatprep.subr.mxu0 0.0
      %1293 = vmatpush1.msra.mxu0 %v1268
      %1294 = vmatprep.subr.mxu0 0.0
      %1295 = vmatpush1.msra.mxu0 %v1256
      %1296 = vmatprep.subr.mxu0 0.0
      %1297 = vmatpush1.msra.mxu0 %v1255
      %1298 = vmatprep.subr.mxu0 0.0
      %1299 = vmatpush1.msra.mxu0 %v1254
      %1300 = vmatprep.subr.mxu0 0.0
      %1301 = vmatpush1.msra.mxu0 %v1253
      %1302 = vmatprep.subr.mxu0 0.0
      %1303 = vmatpush2.msra.mxu0 0.0
      %1304 = vmatprep.subr.mxu0 0.0
      %1305 = vmatpush2.msra.mxu0 0.0
      %1306 = vmatprep.subr.mxu0 0.0
      %1307 = vmatpush2.msra.mxu0 0.0
      %1308 = vmatprep.subr.mxu0 0.0
      %1309 = vmatpush2.msra.mxu0 0.0
      %1310 = vmatprep.subr.mxu0 0.0
      %1311 = vmatpush2.msra.mxu0 0.0
      %1312 = vmatprep.subr.mxu0 0.0
      %1313 = vmatpush2.msra.mxu0 0.0
      %1314 = vmatprep.subr.mxu0 0.0
      %1315 = vmatpush2.msra.mxu0 0.0
      %1316 = vmatprep.subr.mxu0 0.0
      %1317 = vmatpush2.msra.mxu0 0.0
      %1318 = vmatprep.subr.mxu0 0.0
      %1319 = vmatpush2.msra.mxu0 0.0
      %1320 = vmatprep.subr.mxu0 0.0
      %1321 = vmatpush2.msra.mxu0 0.0
      %1322 = vmatprep.subr.mxu0 0.0
      %1323 = vmatpush2.msra.mxu0 0.0
      %1324 = vmatprep.subr.mxu0 0.0
      %1325 = vmatpush2.msra.mxu0 0.0
      %1326 = vmatprep.subr.mxu0 0.0
      %1327 = vmatpush2.msra.mxu0 0.0
      %1328 = vmatprep.subr.mxu0 0.0
      %1329 = vmatpush2.msra.mxu0 0.0
      %1330 = vmatprep.subr.mxu0 0.0
      %1331 = vmatpush2.msra.mxu0 0.0
      %1332 = vmatprep.subr.mxu0 0.0
      %1333 = vmatpush2.msra.mxu0 0.0
      %1334 = vmatprep.mubr.f32.mxu0 0.0
      %1335 = vmatmul.mubr.f32.gmra.mxu0 %v1264
      %v1336 = vpop.f32.mrf.mxu0
      %v1337 = vadd.f32 %v1261, %v1336
      %v1338 = vpop.f32.mrf.mxu0
      %1339 = vdwg.mxu0
      %1341 = vrot.lane.b32.xlu0 %v1337, 116
      %v1342 = vpop.permute.xlu0 %1341
      %1344 = vrot.lane.b32.xlu0 %v1337, 104
      %v1345 = vpop.permute.xlu0 %1344
      %1347 = vrot.lane.b32.xlu0 %v1337, 92
      %v1348 = vpop.permute.xlu0 %1347
      %1350 = vrot.lane.b32.xlu0 %v1337, 80
      %v1351 = vpop.permute.xlu0 %1350
      %1353 = vrot.lane.b32.xlu0 %v1337, 68
      %v1354 = vpop.permute.xlu0 %1353
      %1356 = vrot.lane.b32.xlu0 %v1337, 56
      %v1357 = vpop.permute.xlu0 %1356
      %1359 = vrot.lane.b32.xlu0 %v1337, 44
      %v1360 = vpop.permute.xlu0 %1359
      %v1362 = vcombine.low %v1337, %v1345
      %v1363 = vcombine.high %v1337, %v1345
      %v1365 = vunpack.c.l.s4 1983009808
      %v1366 = vunpack.c.0.s8 %v1365
      %v1367 = vlaneseq
      %v1368 = vshrl.u32 %v1367, 7
      %v1369 = vsub.s32 %v1366, %v1368
      %v1370 = vrot.slane %v1362, %v1369
      %v1372 = vunpack.c.l.s4 1983009808
      %v1373 = vunpack.c.0.s8 %v1372
      %v1374 = vlaneseq
      %v1375 = vshrl.u32 %v1374, 7
      %v1376 = vsub.s32 %v1373, %v1375
      %v1377 = vrot.slane %v1363, %v1376
      %v1378 = vcombine.low %v1342, %v1348
      %v1379 = vcombine.high %v1342, %v1348
      %v1381 = vunpack.c.l.s4 1983009808
      %v1382 = vunpack.c.0.s8 %v1381
      %v1383 = vlaneseq
      %v1384 = vshrl.u32 %v1383, 7
      %v1385 = vsub.s32 %v1382, %v1384
      %v1386 = vrot.slane %v1378, %v1385
      %v1388 = vunpack.c.l.s4 1983009808
      %v1389 = vunpack.c.0.s8 %v1388
      %v1390 = vlaneseq
      %v1391 = vshrl.u32 %v1390, 7
      %v1392 = vsub.s32 %v1389, %v1391
      %v1393 = vrot.slane %v1379, %v1392
      %v1394 = vcombine.low %v1351, %v1357
      %v1395 = vcombine.high %v1351, %v1357
      %v1397 = vunpack.c.l.s4 1983009808
      %v1398 = vunpack.c.0.s8 %v1397
      %v1399 = vlaneseq
      %v1400 = vshrl.u32 %v1399, 7
      %v1401 = vsub.s32 %v1398, %v1400
      %v1402 = vrot.slane %v1394, %v1401
      %v1404 = vunpack.c.l.s4 1983009808
      %v1405 = vunpack.c.0.s8 %v1404
      %v1406 = vlaneseq
      %v1407 = vshrl.u32 %v1406, 7
      %v1408 = vsub.s32 %v1405, %v1407
      %v1409 = vrot.slane %v1395, %v1408
      %v1410 = vcombine.low %v1354, %v1360
      %v1411 = vcombine.high %v1354, %v1360
      %v1413 = vunpack.c.l.s4 1983009808
      %v1414 = vunpack.c.0.s8 %v1413
      %v1415 = vlaneseq
      %v1416 = vshrl.u32 %v1415, 7
      %v1417 = vsub.s32 %v1414, %v1416
      %v1418 = vrot.slane %v1410, %v1417
      %v1420 = vunpack.c.l.s4 1983009808
      %v1421 = vunpack.c.0.s8 %v1420
      %v1422 = vlaneseq
      %v1423 = vshrl.u32 %v1422, 7
      %v1424 = vsub.s32 %v1421, %v1423
      %v1425 = vrot.slane %v1411, %v1424
      %v1426 = vcombine.low %v1370, %v1386
      %v1427 = vcombine.high %v1370, %v1386
      %v1429 = vunpack.c.l.s4 1934713408
      %v1430 = vunpack.c.0.s8 %v1429
      %v1431 = vlaneseq
      %v1432 = vshrl.u32 %v1431, 7
      %v1433 = vsub.s32 %v1430, %v1432
      %v1434 = vrot.slane %v1426, %v1433
      %v1436 = vunpack.c.l.s4 1934713408
      %v1437 = vunpack.c.0.s8 %v1436
      %v1438 = vlaneseq
      %v1439 = vshrl.u32 %v1438, 7
      %v1440 = vsub.s32 %v1437, %v1439
      %v1441 = vrot.slane %v1427, %v1440
      %v1442 = vcombine.low %v1377, %v1393
      %v1443 = vcombine.high %v1377, %v1393
      %v1445 = vunpack.c.l.s4 1934713408
      %v1446 = vunpack.c.0.s8 %v1445
      %v1447 = vlaneseq
      %v1448 = vshrl.u32 %v1447, 7
      %v1449 = vsub.s32 %v1446, %v1448
      %v1450 = vrot.slane %v1442, %v1449
      %v1452 = vunpack.c.l.s4 1934713408
      %v1453 = vunpack.c.0.s8 %v1452
      %v1454 = vlaneseq
      %v1455 = vshrl.u32 %v1454, 7
      %v1456 = vsub.s32 %v1453, %v1455
      %v1457 = vrot.slane %v1443, %v1456
      %v1458 = vcombine.low %v1402, %v1418
      %v1459 = vcombine.high %v1402, %v1418
      %v1461 = vunpack.c.l.s4 1934713408
      %v1462 = vunpack.c.0.s8 %v1461
      %v1463 = vlaneseq
      %v1464 = vshrl.u32 %v1463, 7
      %v1465 = vsub.s32 %v1462, %v1464
      %v1466 = vrot.slane %v1458, %v1465
      %v1468 = vunpack.c.l.s4 1934713408
      %v1469 = vunpack.c.0.s8 %v1468
      %v1470 = vlaneseq
      %v1471 = vshrl.u32 %v1470, 7
      %v1472 = vsub.s32 %v1469, %v1471
      %v1473 = vrot.slane %v1459, %v1472
      %v1474 = vcombine.low %v1409, %v1425
      %v1475 = vcombine.high %v1409, %v1425
      %v1477 = vunpack.c.l.s4 1934713408
      %v1478 = vunpack.c.0.s8 %v1477
      %v1479 = vlaneseq
      %v1480 = vshrl.u32 %v1479, 7
      %v1481 = vsub.s32 %v1478, %v1480
      %v1482 = vrot.slane %v1474, %v1481
      %v1484 = vunpack.c.l.s4 1934713408
      %v1485 = vunpack.c.0.s8 %v1484
      %v1486 = vlaneseq
      %v1487 = vshrl.u32 %v1486, 7
      %v1488 = vsub.s32 %v1485, %v1487
      %v1489 = vrot.slane %v1475, %v1488
      %v1490 = vcombine.low %v1434, %v1466
      %v1491 = vcombine.high %v1434, %v1466
      %v1492 = vcombine.low %v1441, %v1473
      %v1493 = vcombine.high %v1441, %v1473
      %v1494 = vcombine.low %v1450, %v1482
      %v1495 = vcombine.high %v1450, %v1482
      %v1496 = vcombine.low %v1457, %v1489
      %v1497 = vcombine.high %v1457, %v1489
      %1498 = vst.msk [vmem:[%s258] sm:$0xff] %vm1216, %v1490
      %1499 = vst.msk [vmem:[%s258 + $0x8] sm:$0xff] %vm1216, %v1491
      %1500 = vst.msk [vmem:[%s258 + $0x10] sm:$0xff] %vm1216, %v1492
      %1501 = vst.msk [vmem:[%s258 + $0x18] sm:$0xff] %vm1216, %v1493
      %1502 = vst.msk [vmem:[%s258 + $0x20] sm:$0xff] %vm1216, %v1494
      %1503 = vst.msk [vmem:[%s258 + $0x28] sm:$0xff] %vm1216, %v1495
      %1504 = vst.msk [vmem:[%s258 + $0x30] sm:$0xff] %vm1216, %v1496
      %1505 = vst.msk [vmem:[%s258 + $0x38] sm:$0xff] %vm1216, %v1497
      %v1506 = vsel %vm1216, %v1490, 0.0
      %1507 = vadd.xlane.f32.xlu0 %v1506
      %v1508 = vpop.xlane.xlu0 %1507
      %v1509 = vsel %vm1216, %v1491, 0.0
      %1510 = vadd.xlane.f32.xlu0 %v1509
      %v1511 = vpop.xlane.xlu0 %1510
      %v1512 = vsel %vm1216, %v1492, 0.0
      %1513 = vadd.xlane.f32.xlu0 %v1512
      %v1514 = vpop.xlane.xlu0 %1513
      %v1515 = vsel %vm1216, %v1493, 0.0
      %1516 = vadd.xlane.f32.xlu0 %v1515
      %v1517 = vpop.xlane.xlu0 %1516
      %v1518 = vsel %vm1216, %v1494, 0.0
      %1519 = vadd.xlane.f32.xlu0 %v1518
      %v1520 = vpop.xlane.xlu0 %1519
      %v1521 = vsel %vm1216, %v1495, 0.0
      %1522 = vadd.xlane.f32.xlu0 %v1521
      %v1523 = vpop.xlane.xlu0 %1522
      %v1524 = vsel %vm1216, %v1496, 0.0
      %1525 = vadd.xlane.f32.xlu0 %v1524
      %v1526 = vpop.xlane.xlu0 %1525
      %v1527 = vsel %vm1216, %v1497, 0.0
      %1528 = vadd.xlane.f32.xlu0 %v1527
      %v1529 = vpop.xlane.xlu0 %1528
      %v1538 = vlaneseq
      %v1539 = vand.u32 %v1538, 127
      %v1540 = vlaneseq
      %v1541 = vshrl.u32 %v1540, 7
      %v1542 = vsub.s32 %v1539, %v1541
      %v1543 = vrot.slane %v1508, %v1542
      %v1544 = vlaneseq
      %v1545 = vshrl.u32 %v1544, 7
      %v1546 = vsub.s32 %v1539, %v1545
      %v1547 = vrot.slane %v1511, %v1546
      %v1548 = vlaneseq
      %v1549 = vshrl.u32 %v1548, 7
      %v1550 = vsub.s32 %v1539, %v1549
      %v1551 = vrot.slane %v1514, %v1550
      %v1552 = vlaneseq
      %v1553 = vshrl.u32 %v1552, 7
      %v1554 = vsub.s32 %v1539, %v1553
      %v1555 = vrot.slane %v1517, %v1554
      %v1556 = vlaneseq
      %v1557 = vshrl.u32 %v1556, 7
      %v1558 = vsub.s32 %v1539, %v1557
      %v1559 = vrot.slane %v1520, %v1558
      %v1560 = vlaneseq
      %v1561 = vshrl.u32 %v1560, 7
      %v1562 = vsub.s32 %v1539, %v1561
      %v1563 = vrot.slane %v1523, %v1562
      %v1564 = vlaneseq
      %v1565 = vshrl.u32 %v1564, 7
      %v1566 = vsub.s32 %v1539, %v1565
      %v1567 = vrot.slane %v1526, %v1566
      %v1568 = vlaneseq
      %v1569 = vshrl.u32 %v1568, 7
      %v1570 = vsub.s32 %v1539, %v1569
      %v1571 = vrot.slane %v1529, %v1570
      %vm1572 = vcmask 1041409
      %v1573 = vsel %vm1572, %v1547, %v1543
      %vm1574 = vcmask 1042434
      %v1575 = vsel %vm1574, %v1551, %v1573
      %vm1576 = vcmask 1043459
      %v1577 = vsel %vm1576, %v1555, %v1575
      %vm1578 = vcmask 1044484
      %v1579 = vsel %vm1578, %v1559, %v1577
      %vm1580 = vcmask 1045509
      %v1581 = vsel %vm1580, %v1563, %v1579
      %vm1582 = vcmask 1046534
      %v1583 = vsel %vm1582, %v1567, %v1581
      %vm1584 = vcmask 1047559
      %v1585 = vsel %vm1584, %v1571, %v1583
      %vm1587 = vcmask 64512
      %v1588 = vsel %vm1587, %v1585, 0.0
      %1589 = vadd.xlane.f32.xlu0 %v1588
      %v1590 = vpop.xlane.xlu0 %1589
      %v1591 = vmul.f32 %v1490, %v1490
      %v1592 = vmul.f32 %v1491, %v1491
      %v1593 = vmul.f32 %v1492, %v1492
      %v1594 = vmul.f32 %v1493, %v1493
      %v1595 = vmul.f32 %v1494, %v1494
      %v1596 = vmul.f32 %v1495, %v1495
      %v1597 = vmul.f32 %v1496, %v1496
      %v1598 = vmul.f32 %v1497, %v1497
      %v1599 = vsel %vm1216, %v1591, 0.0
      %1600 = vadd.xlane.f32.xlu0 %v1599
      %v1601 = vpop.xlane.xlu0 %1600
      %v1602 = vsel %vm1216, %v1592, 0.0
      %1603 = vadd.xlane.f32.xlu0 %v1602
      %v1604 = vpop.xlane.xlu0 %1603
      %v1605 = vsel %vm1216, %v1593, 0.0
      %1606 = vadd.xlane.f32.xlu0 %v1605
      %v1607 = vpop.xlane.xlu0 %1606
      %v1608 = vsel %vm1216, %v1594, 0.0
      %1609 = vadd.xlane.f32.xlu0 %v1608
      %v1610 = vpop.xlane.xlu0 %1609
      %v1611 = vsel %vm1216, %v1595, 0.0
      %1612 = vadd.xlane.f32.xlu0 %v1611
      %v1613 = vpop.xlane.xlu0 %1612
      %v1614 = vsel %vm1216, %v1596, 0.0
      %1615 = vadd.xlane.f32.xlu0 %v1614
      %v1616 = vpop.xlane.xlu0 %1615
      %v1617 = vsel %vm1216, %v1597, 0.0
      %1618 = vadd.xlane.f32.xlu0 %v1617
      %v1619 = vpop.xlane.xlu0 %1618
      %v1620 = vsel %vm1216, %v1598, 0.0
      %1621 = vadd.xlane.f32.xlu0 %v1620
      %v1622 = vpop.xlane.xlu0 %1621
      %v1631 = vlaneseq
      %v1632 = vshrl.u32 %v1631, 7
      %v1633 = vsub.s32 %v1539, %v1632
      %v1634 = vrot.slane %v1601, %v1633
      %v1635 = vlaneseq
      %v1636 = vshrl.u32 %v1635, 7
      %v1637 = vsub.s32 %v1539, %v1636
      %v1638 = vrot.slane %v1604, %v1637
      %v1639 = vlaneseq
      %v1640 = vshrl.u32 %v1639, 7
      %v1641 = vsub.s32 %v1539, %v1640
      %v1642 = vrot.slane %v1607, %v1641
      %v1643 = vlaneseq
      %v1644 = vshrl.u32 %v1643, 7
      %v1645 = vsub.s32 %v1539, %v1644
      %v1646 = vrot.slane %v1610, %v1645
      %v1647 = vlaneseq
      %v1648 = vshrl.u32 %v1647, 7
      %v1649 = vsub.s32 %v1539, %v1648
      %v1650 = vrot.slane %v1613, %v1649
      %v1651 = vlaneseq
      %v1652 = vshrl.u32 %v1651, 7
      %v1653 = vsub.s32 %v1539, %v1652
      %v1654 = vrot.slane %v1616, %v1653
      %v1655 = vlaneseq
      %v1656 = vshrl.u32 %v1655, 7
      %v1657 = vsub.s32 %v1539, %v1656
      %v1658 = vrot.slane %v1619, %v1657
      %v1659 = vlaneseq
      %v1660 = vshrl.u32 %v1659, 7
      %v1661 = vsub.s32 %v1539, %v1660
      %v1662 = vrot.slane %v1622, %v1661
      %v1663 = vsel %vm1572, %v1638, %v1634
      %v1664 = vsel %vm1574, %v1642, %v1663
      %v1665 = vsel %vm1576, %v1646, %v1664
      %v1666 = vsel %vm1578, %v1650, %v1665
      %v1667 = vsel %vm1580, %v1654, %v1666
      %v1668 = vsel %vm1582, %v1658, %v1667
      %v1669 = vsel %vm1584, %v1662, %v1668
      %v1671 = vsel %vm1587, %v1669, 0.0
      %1672 = vadd.xlane.f32.xlu0 %v1671
      %v1673 = vpop.xlane.xlu0 %1672
      %v1675 = vlaneseq
      %v1676 = vshrl.u32 %v1675, 7
      %v1677 = vsub.s32 %v1539, %v1676
      %v1678 = vrot.slane %v1590, %v1677
      %v1681 = vlaneseq
      %v1682 = vshrl.u32 %v1681, 7
      %v1683 = vsub.s32 %v1539, %v1682
      %v1684 = vrot.slane %v1673, %v1683
      %v1686 = vsel %vm341, %v1678, %v1684
      %vm1687 = vcmask 58368
      %1688 = vst.msk [vmem:[%s262] sm:$0x3] %vm1687, %v1686
      %p1689 = scmp.lt.s32.totalorder %s18, 1
      %s1690 = scalar_select %p1689, %s18, 1
      %s1691 = smul.addr %s1690, 8
      %s1692 = smul.addr %s1691, 8
      %s1693 = scalar_lea.vmem %s5, %s1692
      %p1694 = scmp.lt.s32.totalorder %s18, 1
      %s1695 = scalar_select %p1694, %s18, 1
      %s1696 = smul.addr %s1695, 2
      %s1697 = scalar_lea.vmem %s6, %s1696
      // Predicated region
      $region41: #{resblock_pallas.4} parent=39 // pred_check
        %p1698 = pneg %p146
      $region42: #{resblock_pallas.4} parent=39 // pred_check_branch
        %1700 = sbr.rel (%p1698) target = $region44
      $region43: #{resblock_pallas.4} parent=39 // pred_region
        _
      $region44: #{resblock_pallas.4} parent=39 // pred_fallthru
        _
      // Predicated region
      $region45: #{resblock_pallas.4} parent=39 // pred_check
        %p1701 = pneg %p172
      $region46: #{resblock_pallas.4} parent=39 // pred_check_branch
        %1703 = sbr.rel (%p1701) target = $region48
      $region47: #{resblock_pallas.4} parent=39 // pred_region
        _
      $region48: #{resblock_pallas.4} parent=39 // pred_fallthru
        _
    $region40: #{resblock_pallas.4} parent=5 // pred_fallthru
      _
    %p1704 = scmp.le.s32.totalorder 2, %s13
    // Predicated region
    $region49: #{resblock_pallas.4} parent=5 // pred_check
      %p1705 = pneg %p1704
    $region50: #{resblock_pallas.4} parent=5 // pred_check_branch
      %1707 = sbr.rel (%p1705) target = $region52
    $region51: #{resblock_pallas.4} parent=5 // pred_region
      %s1708 = ssub.s32 %s13, 2
      // Predicated region
      $region53: #{resblock_pallas.4} parent=51 // pred_check
        %p1709 = pneg %p152
      $region54: #{resblock_pallas.4} parent=51 // pred_check_branch
        %1711 = sbr.rel (%p1709) target = $region56
      $region55: #{resblock_pallas.4} parent=51 // pred_region
        %p1712 = scmp.lt.s32.totalorder %s19, 1
        %s1713 = scalar_select %p1712, %s19, 1
        %s1714 = smul.addr %s1713, 8
        %s1715 = smul.addr %s1714, 8
        %s1716 = scalar_lea.vmem %s5, %s1715
      $region56: #{resblock_pallas.4} parent=51 // pred_fallthru
        _
      // Predicated region
      $region57: #{resblock_pallas.4} parent=51 // pred_check
        %p1717 = pneg %p178
      $region58: #{resblock_pallas.4} parent=51 // pred_check_branch
        %1719 = sbr.rel (%p1717) target = $region60
      $region59: #{resblock_pallas.4} parent=51 // pred_region
        %p1720 = scmp.lt.s32.totalorder %s19, 1
        %s1721 = scalar_select %p1720, %s19, 1
        %s1722 = smul.addr %s1721, 2
        %s1723 = scalar_lea.vmem %s6, %s1722
      $region60: #{resblock_pallas.4} parent=51 // pred_fallthru
        _
    $region52: #{resblock_pallas.4} parent=5 // pred_fallthru
      _
  $region6: #{resblock_pallas.4} parent=0 // loop_footer
    %s17 = sadd.s32 1, %s13
  $region7: #{resblock_pallas.4} parent=0 // loop_footer_branch
    %12 = sbr.rel target = $region3
  $region8: #{resblock_pallas.4} parent=0 // loop_exit
    _

// kernel: resblock_pallas.5
$region0: #{resblock_pallas.5}
  #allocation0 [shape = 'u32[]', space=smem, size = 0x4, offset = 0x4, fixed_abs, tag = 'smem constant byte address 0x4 - core index']
  #allocation1 [shape = 'u32[144,128]{1,0:T(1,128)}', space=vmem, size = 0x12000, scoped, tag = 'internal scratch']
  %s0 = inlined_call_operand.vmem [shape: f32[2,4,8,10], index: 0, kind: input, shape index: {}]
  %s1 = inlined_call_operand.vmem [shape: f32[2,8,8,12], index: 1, kind: input, shape index: {}]
  %s2 = inlined_call_operand.vmem [shape: f32[1,8], index: 2, kind: input, shape index: {}]
  %s3 = inlined_call_operand.vmem [shape: f32[1,8], index: 3, kind: input, shape index: {}]
  %s4 = inlined_call_operand.vmem [shape: f32[8,72], index: 4, kind: input, shape index: {}]
  %s5 = inlined_call_operand.vmem [shape: f32[8,1], index: 5, kind: input, shape index: {}]
  %s6 = inlined_call_operand.vmem [shape: f32[8,4], index: 6, kind: input, shape index: {}]
  %s7 = inlined_call_operand.vmem [shape: f32[2,8,80], index: 7, kind: output, shape index: {}]
  %s8 = sld [smem:[#allocation0]]
  $region61: #{resblock_pallas.5} parent=0
    _
  %s10 = ssub.s32 1, %s8
  %s11 = scalar_select 0, %s10, %s8
  loop: start=0, step=1, limit=4
  $region2: #{resblock_pallas.5} parent=0 // loop_pre_header
    _
  $region3: #{resblock_pallas.5} parent=0 // loop_header
    %s13 = sphi 0, %s17
    %p14 = scmp.ge.s32.totalorder %s13, 4
    %s23 = sphi 0, %s25
    %s26 = sphi 0, %s23
    %s27 = sphi 0, %s26
    %s43 = sphi 0, %s27
    %s49 = sphi 0, %s51
    %s52 = sphi 0, %s49
    %s53 = sphi 0, %s52
    %s69 = sphi 0, %s53
    %s73 = sphi 0, %s73
    %s75 = sphi 0, %s73
    %s76 = sphi 0, %s75
    %s90 = sphi 0, %s76
    %s94 = sphi 0, %s94
    %s96 = sphi 0, %s94
    %s97 = sphi 0, %s96
    %s111 = sphi 0, %s97
    %s115 = sphi 0, %s115
    %s117 = sphi 0, %s115
    %s118 = sphi 0, %s117
    %s132 = sphi 0, %s118
    %s136 = sphi 0, %s136
    %s138 = sphi 0, %s136
    %s139 = sphi 0, %s138
    %s153 = sphi 0, %s139
    %s157 = sphi 0, %s157
    %s159 = sphi 0, %s157
    %s160 = sphi 0, %s159
    %s174 = sphi 0, %s160
    %s180 = sphi 0, %s182
    %s183 = sphi 0, %s180
    %s184 = sphi 0, %s183
    %s200 = sphi 0, %s184
  $region4: #{resblock_pallas.5} parent=0 // loop_header_branch
    %16 = sbr.rel (%p14) target = $region8
  $region5: #{resblock_pallas.5} parent=0 // loop_body
    %s18 = ssub.s32 %s13, 1
    %s19 = ssub.s32 %s13, 2
    %s20 = sadd.s32 %s13, 1
    %s21 = ssub.s32 %s13, %s20
    %p22 = scmp.eq.s32.totalorder %s21, 0
    %s24 = sadd.s32 %s23, 1
    %s25 = scalar_select %p22, %s23, %s24
    %p28 = pneg %p22
    %p29 = scmp.eq.s32.totalorder %s13, 1
    %p30 = por %p28, %p29
    %p31 = scmp.ne.s32.totalorder %s23, %s26
    %p32 = scmp.eq.s32.totalorder %s13, 0
    %p33 = por %p31, %p32
    %p34 = scmp.ne.s32.totalorder %s23, %s26
    %p35 = scmp.eq.s32.totalorder %s18, 1
    %p36 = por %p34, %p35
    %p37 = scmp.ne.s32.totalorder %s26, %s27
    %p38 = scmp.eq.s32.totalorder %s18, 0
    %p39 = por %p37, %p38
    %p40 = scmp.ne.s32.totalorder %s26, %s27
    %p41 = scmp.eq.s32.totalorder %s19, 1
    %p42 = por %p40, %p41
    %p44 = scmp.ne.s32.totalorder %s27, %s43
    %p45 = scmp.eq.s32.totalorder %s19, 0
    %p46 = por %p44, %p45
    %s47 = ssub.s32 %s13, %s20
    %p48 = scmp.eq.s32.totalorder %s47, 0
    %s50 = sadd.s32 %s49, 1
    %s51 = scalar_select %p48, %s49, %s50
    %p54 = pneg %p48
    %p55 = scmp.eq.s32.totalorder %s13, 1
    %p56 = por %p54, %p55
    %p57 = scmp.ne.s32.totalorder %s49, %s52
    %p58 = scmp.eq.s32.totalorder %s13, 0
    %p59 = por %p57, %p58
    %p60 = scmp.ne.s32.totalorder %s49, %s52
    %p61 = scmp.eq.s32.totalorder %s18, 1
    %p62 = por %p60, %p61
    %p63 = scmp.ne.s32.totalorder %s52, %s53
    %p64 = scmp.eq.s32.totalorder %s18, 0
    %p65 = por %p63, %p64
    %p66 = scmp.ne.s32.totalorder %s52, %s53
    %p67 = scmp.eq.s32.totalorder %s19, 1
    %p68 = por %p66, %p67
    %p70 = scmp.ne.s32.totalorder %s53, %s69
    %p71 = scmp.eq.s32.totalorder %s19, 0
    %p72 = por %p70, %p71
    %s74 = sadd.s32 %s73, 1
    %p77 = scmp.eq.s32.totalorder %s13, 1
    %p78 = scmp.ne.s32.totalorder %s73, %s75
    %p79 = scmp.eq.s32.totalorder %s13, 0
    %p80 = por %p78, %p79
    %p81 = scmp.ne.s32.totalorder %s73, %s75
    %p82 = scmp.eq.s32.totalorder %s18, 1
    %p83 = por %p81, %p82
    %p84 = scmp.ne.s32.totalorder %s75, %s76
    %p85 = scmp.eq.s32.totalorder %s18, 0
    %p86 = por %p84, %p85
    %p87 = scmp.ne.s32.totalorder %s75, %s76
    %p88 = scmp.eq.s32.totalorder %s19, 1
    %p89 = por %p87, %p88
    %p91 = scmp.ne.s32.totalorder %s76, %s90
    %p92 = scmp.eq.s32.totalorder %s19, 0
    %p93 = por %p91, %p92
    %s95 = sadd.s32 %s94, 1
    %p98 = scmp.eq.s32.totalorder %s13, 1
    %p99 = scmp.ne.s32.totalorder %s94, %s96
    %p100 = scmp.eq.s32.totalorder %s13, 0
    %p101 = por %p99, %p100
    %p102 = scmp.ne.s32.totalorder %s94, %s96
    %p103 = scmp.eq.s32.totalorder %s18, 1
    %p104 = por %p102, %p103
    %p105 = scmp.ne.s32.totalorder %s96, %s97
    %p106 = scmp.eq.s32.totalorder %s18, 0
    %p107 = por %p105, %p106
    %p108 = scmp.ne.s32.totalorder %s96, %s97
    %p109 = scmp.eq.s32.totalorder %s19, 1
    %p110 = por %p108, %p109
    %p112 = scmp.ne.s32.totalorder %s97, %s111
    %p113 = scmp.eq.s32.totalorder %s19, 0
    %p114 = por %p112, %p113
    %s116 = sadd.s32 %s115, 1
    %p119 = scmp.eq.s32.totalorder %s13, 1
    %p120 = scmp.ne.s32.totalorder %s115, %s117
    %p121 = scmp.eq.s32.totalorder %s13, 0
    %p122 = por %p120, %p121
    %p123 = scmp.ne.s32.totalorder %s115, %s117
    %p124 = scmp.eq.s32.totalorder %s18, 1
    %p125 = por %p123, %p124
    %p126 = scmp.ne.s32.totalorder %s117, %s118
    %p127 = scmp.eq.s32.totalorder %s18, 0
    %p128 = por %p126, %p127
    %p129 = scmp.ne.s32.totalorder %s117, %s118
    %p130 = scmp.eq.s32.totalorder %s19, 1
    %p131 = por %p129, %p130
    %p133 = scmp.ne.s32.totalorder %s118, %s132
    %p134 = scmp.eq.s32.totalorder %s19, 0
    %p135 = por %p133, %p134
    %s137 = sadd.s32 %s136, 1
    %p140 = scmp.eq.s32.totalorder %s13, 1
    %p141 = scmp.ne.s32.totalorder %s136, %s138
    %p142 = scmp.eq.s32.totalorder %s13, 0
    %p143 = por %p141, %p142
    %p144 = scmp.ne.s32.totalorder %s136, %s138
    %p145 = scmp.eq.s32.totalorder %s18, 1
    %p146 = por %p144, %p145
    %p147 = scmp.ne.s32.totalorder %s138, %s139
    %p148 = scmp.eq.s32.totalorder %s18, 0
    %p149 = por %p147, %p148
    %p150 = scmp.ne.s32.totalorder %s138, %s139
    %p151 = scmp.eq.s32.totalorder %s19, 1
    %p152 = por %p150, %p151
    %p154 = scmp.ne.s32.totalorder %s139, %s153
    %p155 = scmp.eq.s32.totalorder %s19, 0
    %p156 = por %p154, %p155
    %s158 = sadd.s32 %s157, 1
    %p161 = scmp.eq.s32.totalorder %s13, 1
    %p162 = scmp.ne.s32.totalorder %s157, %s159
    %p163 = scmp.eq.s32.totalorder %s13, 0
    %p164 = por %p162, %p163
    %p165 = scmp.ne.s32.totalorder %s157, %s159
    %p166 = scmp.eq.s32.totalorder %s18, 1
    %p167 = por %p165, %p166
    %p168 = scmp.ne.s32.totalorder %s159, %s160
    %p169 = scmp.eq.s32.totalorder %s18, 0
    %p170 = por %p168, %p169
    %p171 = scmp.ne.s32.totalorder %s159, %s160
    %p172 = scmp.eq.s32.totalorder %s19, 1
    %p173 = por %p171, %p172
    %p175 = scmp.ne.s32.totalorder %s160, %s174
    %p176 = scmp.eq.s32.totalorder %s19, 0
    %p177 = por %p175, %p176
    %s178 = ssub.s32 %s13, %s20
    %p179 = scmp.eq.s32.totalorder %s178, 0
    %s181 = sadd.s32 %s180, 1
    %s182 = scalar_select %p179, %s180, %s181
    %p185 = pneg %p179
    %p186 = scmp.eq.s32.totalorder %s13, 1
    %p187 = por %p185, %p186
    %p188 = scmp.ne.s32.totalorder %s180, %s183
    %p189 = scmp.eq.s32.totalorder %s13, 0
    %p190 = por %p188, %p189
    %p191 = scmp.ne.s32.totalorder %s180, %s183
    %p192 = scmp.eq.s32.totalorder %s18, 1
    %p193 = por %p191, %p192
    %p194 = scmp.ne.s32.totalorder %s183, %s184
    %p195 = scmp.eq.s32.totalorder %s18, 0
    %p196 = por %p194, %p195
    %p197 = scmp.ne.s32.totalorder %s183, %s184
    %p198 = scmp.eq.s32.totalorder %s19, 1
    %p199 = por %p197, %p198
    %p201 = scmp.ne.s32.totalorder %s184, %s200
    %p202 = scmp.eq.s32.totalorder %s19, 0
    %p203 = por %p201, %p202
    %p204 = scmp.le.s32.totalorder 1, %s13
    %p205 = scmp.lt.s32.totalorder %s13, 3
    %p206 = pnand %p204, %p205
    %p207 = pneg %p206
    // Predicated region
    $region9: #{resblock_pallas.5} parent=5 // pred_check
      _
    $region10: #{resblock_pallas.5} parent=5 // pred_check_branch
      %209 = sbr.rel (%p206) target = $region12
    $region11: #{resblock_pallas.5} parent=5 // pred_region
      %s210 = ssub.s32 %s13, 1
      // Predicated region
      $region13: #{resblock_pallas.5} parent=11 // pred_check
        %p211 = pneg %p86
      $region14: #{resblock_pallas.5} parent=11 // pred_check_branch
        %213 = sbr.rel (%p211) target = $region16
      $region15: #{resblock_pallas.5} parent=11 // pred_region
        _
      $region16: #{resblock_pallas.5} parent=11 // pred_fallthru
        _
      // Predicated region
      $region17: #{resblock_pallas.5} parent=11 // pred_check
        %p214 = pneg %p107
      $region18: #{resblock_pallas.5} parent=11 // pred_check_branch
        %216 = sbr.rel (%p214) target = $region20
      $region19: #{resblock_pallas.5} parent=11 // pred_region
        _
      $region20: #{resblock_pallas.5} parent=11 // pred_fallthru
        _
      // Predicated region
      $region21: #{resblock_pallas.5} parent=11 // pred_check
        %p217 = pneg %p128
      $region22: #{resblock_pallas.5} parent=11 // pred_check_branch
        %219 = sbr.rel (%p217) target = $region24
      $region23: #{resblock_pallas.5} parent=11 // pred_region
        _
      $region24: #{resblock_pallas.5} parent=11 // pred_fallthru
        _
      // Predicated region
      $region25: #{resblock_pallas.5} parent=11 // pred_check
        %p220 = pneg %p149
      $region26: #{resblock_pallas.5} parent=11 // pred_check_branch
        %222 = sbr.rel (%p220) target = $region28
      $region27: #{resblock_pallas.5} parent=11 // pred_region
        _
      $region28: #{resblock_pallas.5} parent=11 // pred_fallthru
        _
      // Predicated region
      $region29: #{resblock_pallas.5} parent=11 // pred_check
        %p223 = pneg %p170
      $region30: #{resblock_pallas.5} parent=11 // pred_check_branch
        %225 = sbr.rel (%p223) target = $region32
      $region31: #{resblock_pallas.5} parent=11 // pred_region
        _
      $region32: #{resblock_pallas.5} parent=11 // pred_fallthru
        _
    $region12: #{resblock_pallas.5} parent=5 // pred_fallthru
      _
    %p226 = scmp.lt.s32.totalorder %s13, 2
    // Predicated region
    $region33: #{resblock_pallas.5} parent=5 // pred_check
      %p227 = pneg %p226
    $region34: #{resblock_pallas.5} parent=5 // pred_check_branch
      %229 = sbr.rel (%p227) target = $region36
    $region35: #{resblock_pallas.5} parent=5 // pred_region
      // Predicated region
      $region37: #{resblock_pallas.5} parent=35 // pred_check
        %p230 = pneg %p33
      $region38: #{resblock_pallas.5} parent=35 // pred_check_branch
        %232 = sbr.rel (%p230) target = $region40
      $region39: #{resblock_pallas.5} parent=35 // pred_region
        %p233 = scmp.lt.s32.totalorder %s13, 1
        %s234 = scalar_select %p233, %s13, 1
        %s235 = smul.addr %s234, 4
        %s236 = smul.addr %s235, 8
        %s237 = scalar_lea.vmem %s0, %s236
      $region40: #{resblock_pallas.5} parent=35 // pred_fallthru
        _
      // Predicated region
      $region41: #{resblock_pallas.5} parent=35 // pred_check
        %p238 = pneg %p59
      $region42: #{resblock_pallas.5} parent=35 // pred_check_branch
        %240 = sbr.rel (%p238) target = $region44
      $region43: #{resblock_pallas.5} parent=35 // pred_region
        %p241 = scmp.lt.s32.totalorder %s13, 1
        %s242 = scalar_select %p241, %s13, 1
        %s243 = smul.addr %s242, 8
        %s244 = smul.addr %s243, 8
        %s245 = scalar_lea.vmem %s1, %s244
      $region44: #{resblock_pallas.5} parent=35 // pred_fallthru
        _
    $region36: #{resblock_pallas.5} parent=5 // pred_fallthru
      _
    %p246 = scmp.le.s32.totalorder 1, %s13
    %p247 = scmp.lt.s32.totalorder %s13, 3
    %p248 = pnand %p246, %p247
    %p249 = pneg %p248
    // Predicated region
    $region45: #{resblock_pallas.5} parent=5 // pred_check
      _
    $region46: #{resblock_pallas.5} parent=5 // pred_check_branch
      %251 = sbr.rel (%p248) target = $region48
    $region47: #{resblock_pallas.5} parent=5 // pred_region
      %s252 = ssub.s32 %s13, 1
      %p253 = scmp.lt.s32.totalorder %s18, 1
      %s254 = scalar_select %p253, %s18, 1
      %s255 = smul.addr %s254, 4
      %s256 = smul.addr %s255, 8
      %s257 = scalar_lea.vmem %s0, %s256
      %p258 = pneg %p39
      %p259 = pneg %p36
      %p260 = scmp.lt.s32.totalorder %s18, 1
      %s261 = scalar_select %p260, %s18, 1
      %s262 = smul.addr %s261, 8
      %s263 = smul.addr %s262, 8
      %s264 = scalar_lea.vmem %s1, %s263
      %p265 = pneg %p65
      %p266 = pneg %p62
      %p267 = pneg %p86
      %p268 = pneg %p83
      %p269 = pneg %p107
      %p270 = pneg %p104
      %p271 = pneg %p128
      %p272 = pneg %p125
      %p273 = pneg %p149
      %p274 = pneg %p146
      %p275 = pneg %p170
      %p276 = pneg %p167
      %p277 = pneg %p196
      %p278 = pneg %p193
      %p279 = scmp.lt.s32.totalorder %s18, 1
      %s280 = scalar_select %p279, %s18, 1
      %s281 = smul.addr %s280, 8
      %s282 = scalar_lea.vmem %s7, %s281
      %p283 = scmp.lt.s32.totalorder %s18, 1
      %s284 = scalar_select %p283, %s18, 1
      %s285 = smul.addr %s284, 4
      %s286 = smul.addr %s285, 8
      %s287 = scalar_lea.vmem %s0, %s286
      %p288 = scmp.lt.s32.totalorder %s18, 1
      %s289 = scalar_select %p288, %s18, 1
      %s290 = smul.addr %s289, 8
      %s291 = smul.addr %s290, 8
      %s292 = scalar_lea.vmem %s1, %s291
      %p293 = scmp.lt.s32.totalorder %s18, 1
      %s294 = scalar_select %p293, %s18, 1
      %s295 = smul.addr %s294, 8
      %s296 = scalar_lea.vmem %s7, %s295
      %v297 = vld [vmem:[%s292] sm:$0xff]
      %v298 = vld [vmem:[%s292 + $0x8] sm:$0xff]
      %v299 = vld [vmem:[%s292 + $0x10] sm:$0xff]
      %v300 = vld [vmem:[%s292 + $0x18] sm:$0xff]
      %v301 = vld [vmem:[%s292 + $0x20] sm:$0xff]
      %v302 = vld [vmem:[%s292 + $0x28] sm:$0xff]
      %v303 = vld [vmem:[%s292 + $0x30] sm:$0xff]
      %v304 = vld [vmem:[%s292 + $0x38] sm:$0xff]
      %v305 = vld [vmem:[%s2] sm:$0x1]
      %v306 = vld [vmem:[%s3] sm:$0x1]
      %v307 = vlaneseq
      %v308 = vshrl.u32 %v307, 7
      %v309 = vsub.s32 0, %v308
      %v310 = vrot.slane %v305, %v309
      %312 = vbcast.lane.b32.xlu0 %v310, 256
      %v313 = vpop.permute.xlu0 %312
      %v314 = vlaneseq
      %v315 = vshrl.u32 %v314, 7
      %v316 = vsub.s32 0, %v315
      %v317 = vrot.slane %v313, %v316
      %v318 = vlaneseq
      %v319 = vshrl.u32 %v318, 7
      %v320 = vsub.s32 1, %v319
      %v321 = vrot.slane %v313, %v320
      %v322 = vlaneseq
      %v323 = vshrl.u32 %v322, 7
      %v324 = vsub.s32 2, %v323
      %v325 = vrot.slane %v313, %v324
      %v326 = vlaneseq
      %v327 = vshrl.u32 %v326, 7
      %v328 = vsub.s32 3, %v327
      %v329 = vrot.slane %v313, %v328
      %v330 = vlaneseq
      %v331 = vshrl.u32 %v330, 7
      %v332 = vsub.s32 4, %v331
      %v333 = vrot.slane %v313, %v332
      %v334 = vlaneseq
      %v335 = vshrl.u32 %v334, 7
      %v336 = vsub.s32 5, %v335
      %v337 = vrot.slane %v313, %v336
      %v338 = vlaneseq
      %v339 = vshrl.u32 %v338, 7
      %v340 = vsub.s32 6, %v339
      %v341 = vrot.slane %v313, %v340
      %v342 = vlaneseq
      %v343 = vshrl.u32 %v342, 7
      %v344 = vsub.s32 7, %v343
      %v345 = vrot.slane %v313, %v344
      %v346 = vmul.f32 %v297, %v317
      %v347 = vmul.f32 %v298, %v321
      %v348 = vmul.f32 %v299, %v325
      %v349 = vmul.f32 %v300, %v329
      %v350 = vmul.f32 %v301, %v333
      %v351 = vmul.f32 %v302, %v337
      %v352 = vmul.f32 %v303, %v341
      %v353 = vmul.f32 %v304, %v345
      %v354 = vlaneseq
      %v355 = vshrl.u32 %v354, 7
      %v356 = vsub.s32 0, %v355
      %v357 = vrot.slane %v306, %v356
      %359 = vbcast.lane.b32.xlu0 %v357, 256
      %v360 = vpop.permute.xlu0 %359
      %v361 = vlaneseq
      %v362 = vshrl.u32 %v361, 7
      %v363 = vsub.s32 0, %v362
      %v364 = vrot.slane %v360, %v363
      %v365 = vlaneseq
      %v366 = vshrl.u32 %v365, 7
      %v367 = vsub.s32 1, %v366
      %v368 = vrot.slane %v360, %v367
      %v369 = vlaneseq
      %v370 = vshrl.u32 %v369, 7
      %v371 = vsub.s32 2, %v370
      %v372 = vrot.slane %v360, %v371
      %v373 = vlaneseq
      %v374 = vshrl.u32 %v373, 7
      %v375 = vsub.s32 3, %v374
      %v376 = vrot.slane %v360, %v375
      %v377 = vlaneseq
      %v378 = vshrl.u32 %v377, 7
      %v379 = vsub.s32 4, %v378
      %v380 = vrot.slane %v360, %v379
      %v381 = vlaneseq
      %v382 = vshrl.u32 %v381, 7
      %v383 = vsub.s32 5, %v382
      %v384 = vrot.slane %v360, %v383
      %v385 = vlaneseq
      %v386 = vshrl.u32 %v385, 7
      %v387 = vsub.s32 6, %v386
      %v388 = vrot.slane %v360, %v387
      %v389 = vlaneseq
      %v390 = vshrl.u32 %v389, 7
      %v391 = vsub.s32 7, %v390
      %v392 = vrot.slane %v360, %v391
      %v393 = vadd.f32 %v346, %v364
      %v394 = vadd.f32 %v347, %v368
      %v395 = vadd.f32 %v348, %v372
      %v396 = vadd.f32 %v349, %v376
      %v397 = vadd.f32 %v350, %v380
      %v398 = vadd.f32 %v351, %v384
      %v399 = vadd.f32 %v352, %v388
      %v400 = vadd.f32 %v353, %v392
      %v401 = vmax.f32 %v393, 0.0
      %v402 = vmax.f32 %v394, 0.0
      %v403 = vmax.f32 %v395, 0.0
      %v404 = vmax.f32 %v396, 0.0
      %v405 = vmax.f32 %v397, 0.0
      %v406 = vmax.f32 %v398, 0.0
      %v407 = vmax.f32 %v399, 0.0
      %v408 = vmax.f32 %v400, 0.0
      %v409 = vld [vmem:[%s4] sm:$0xff]
      %v410 = vld [vmem:[%s5] sm:$0xff]
      %v419 = vrot.slane %v401, 7
      %v420 = vrot.slane %v402, 7
      %v421 = vrot.slane %v403, 7
      %v422 = vrot.slane %v404, 7
      %v423 = vrot.slane %v405, 7
      %v424 = vrot.slane %v406, 7
      %v425 = vrot.slane %v407, 7
      %v426 = vrot.slane %v408, 7
      %vm435 = vcmask 1040384
      %v436 = vsel %vm435, 0.0, %v419
      %v437 = vsel %vm435, 0.0, %v420
      %v438 = vsel %vm435, 0.0, %v421
      %v439 = vsel %vm435, 0.0, %v422
      %v440 = vsel %vm435, 0.0, %v423
      %v441 = vsel %vm435, 0.0, %v424
      %v442 = vsel %vm435, 0.0, %v425
      %v443 = vsel %vm435, 0.0, %v426
      %v444 = vsel %vm435, %v419, 0.0
      %v445 = vsel %vm435, %v420, 0.0
      %v446 = vsel %vm435, %v421, 0.0
      %v447 = vsel %vm435, %v422, 0.0
      %v448 = vsel %vm435, %v423, 0.0
      %v449 = vsel %vm435, %v424, 0.0
      %v450 = vsel %vm435, %v425, 0.0
      %v451 = vsel %vm435, %v426, 0.0
      %460 = vrot.lane.b32.xlu0 %v436, 127
      %v461 = vpop.permute.xlu0 %460
      %462 = vrot.lane.b32.xlu0 %v437, 127
      %v463 = vpop.permute.xlu0 %462
      %464 = vrot.lane.b32.xlu0 %v438, 127
      %v465 = vpop.permute.xlu0 %464
      %466 = vrot.lane.b32.xlu0 %v439, 127
      %v467 = vpop.permute.xlu0 %466
      %468 = vrot.lane.b32.xlu0 %v440, 127
      %v469 = vpop.permute.xlu0 %468
      %470 = vrot.lane.b32.xlu0 %v441, 127
      %v471 = vpop.permute.xlu0 %470
      %472 = vrot.lane.b32.xlu0 %v442, 127
      %v473 = vpop.permute.xlu0 %472
      %474 = vrot.lane.b32.xlu0 %v443, 127
      %v475 = vpop.permute.xlu0 %474
      %484 = vrot.lane.b32.xlu0 %v436, 126
      %v485 = vpop.permute.xlu0 %484
      %486 = vrot.lane.b32.xlu0 %v437, 126
      %v487 = vpop.permute.xlu0 %486
      %488 = vrot.lane.b32.xlu0 %v438, 126
      %v489 = vpop.permute.xlu0 %488
      %490 = vrot.lane.b32.xlu0 %v439, 126
      %v491 = vpop.permute.xlu0 %490
      %492 = vrot.lane.b32.xlu0 %v440, 126
      %v493 = vpop.permute.xlu0 %492
      %494 = vrot.lane.b32.xlu0 %v441, 126
      %v495 = vpop.permute.xlu0 %494
      %496 = vrot.lane.b32.xlu0 %v442, 126
      %v497 = vpop.permute.xlu0 %496
      %498 = vrot.lane.b32.xlu0 %v443, 126
      %v499 = vpop.permute.xlu0 %498
      %vm516 = vcmask 1046528
      %v517 = vrot.slane %v436, 1
      %v518 = vrot.slane %v444, 1
      %v519 = vsel %vm516, %v517, %v518
      %v520 = vrot.slane %v437, 1
      %v521 = vrot.slane %v445, 1
      %v522 = vsel %vm516, %v520, %v521
      %v523 = vrot.slane %v438, 1
      %v524 = vrot.slane %v446, 1
      %v525 = vsel %vm516, %v523, %v524
      %v526 = vrot.slane %v439, 1
      %v527 = vrot.slane %v447, 1
      %v528 = vsel %vm516, %v526, %v527
      %v529 = vrot.slane %v440, 1
      %v530 = vrot.slane %v448, 1
      %v531 = vsel %vm516, %v529, %v530
      %v532 = vrot.slane %v441, 1
      %v533 = vrot.slane %v449, 1
      %v534 = vsel %vm516, %v532, %v533
      %v535 = vrot.slane %v442, 1
      %v536 = vrot.slane %v450, 1
      %v537 = vsel %vm516, %v535, %v536
      %v538 = vrot.slane %v443, 1
      %v539 = vrot.slane %v451, 1
      %v540 = vsel %vm516, %v538, %v539
      %549 = vrot.lane.b32.xlu0 %v519, 127
      %v550 = vpop.permute.xlu0 %549
      %551 = vrot.lane.b32.xlu0 %v522, 127
      %v552 = vpop.permute.xlu0 %551
      %553 = vrot.lane.b32.xlu0 %v525, 127
      %v554 = vpop.permute.xlu0 %553
      %555 = vrot.lane.b32.xlu0 %v528, 127
      %v556 = vpop.permute.xlu0 %555
      %557 = vrot.lane.b32.xlu0 %v531, 127
      %v558 = vpop.permute.xlu0 %557
      %559 = vrot.lane.b32.xlu0 %v534, 127
      %v560 = vpop.permute.xlu0 %559
      %561 = vrot.lane.b32.xlu0 %v537, 127
      %v562 = vpop.permute.xlu0 %561
      %563 = vrot.lane.b32.xlu0 %v540, 127
      %v564 = vpop.permute.xlu0 %563
      %573 = vrot.lane.b32.xlu0 %v519, 126
      %v574 = vpop.permute.xlu0 %573
      %575 = vrot.lane.b32.xlu0 %v522, 126
      %v576 = vpop.permute.xlu0 %575
      %577 = vrot.lane.b32.xlu0 %v525, 126
      %v578 = vpop.permute.xlu0 %577
      %579 = vrot.lane.b32.xlu0 %v528, 126
      %v580 = vpop.permute.xlu0 %579
      %581 = vrot.lane.b32.xlu0 %v531, 126
      %v582 = vpop.permute.xlu0 %581
      %583 = vrot.lane.b32.xlu0 %v534, 126
      %v584 = vpop.permute.xlu0 %583
      %585 = vrot.lane.b32.xlu0 %v537, 126
      %v586 = vpop.permute.xlu0 %585
      %587 = vrot.lane.b32.xlu0 %v540, 126
      %v588 = vpop.permute.xlu0 %587
      %vm597 = vcmask 1045504
      %v598 = vrot.slane %v436, 2
      %v599 = vrot.slane %v444, 2
      %v600 = vsel %vm597, %v598, %v599
      %v601 = vrot.slane %v437, 2
      %v602 = vrot.slane %v445, 2
      %v603 = vsel %vm597, %v601, %v602
      %v604 = vrot.slane %v438, 2
      %v605 = vrot.slane %v446, 2
      %v606 = vsel %vm597, %v604, %v605
      %v607 = vrot.slane %v439, 2
      %v608 = vrot.slane %v447, 2
      %v609 = vsel %vm597, %v607, %v608
      %v610 = vrot.slane %v440, 2
      %v611 = vrot.slane %v448, 2
      %v612 = vsel %vm597, %v610, %v611
      %v613 = vrot.slane %v441, 2
      %v614 = vrot.slane %v449, 2
      %v615 = vsel %vm597, %v613, %v614
      %v616 = vrot.slane %v442, 2
      %v617 = vrot.slane %v450, 2
      %v618 = vsel %vm597, %v616, %v617
      %v619 = vrot.slane %v443, 2
      %v620 = vrot.slane %v451, 2
      %v621 = vsel %vm597, %v619, %v620
      %630 = vrot.lane.b32.xlu0 %v600, 127
      %v631 = vpop.permute.xlu0 %630
      %632 = vrot.lane.b32.xlu0 %v603, 127
      %v633 = vpop.permute.xlu0 %632
      %634 = vrot.lane.b32.xlu0 %v606, 127
      %v635 = vpop.permute.xlu0 %634
      %636 = vrot.lane.b32.xlu0 %v609, 127
      %v637 = vpop.permute.xlu0 %636
      %638 = vrot.lane.b32.xlu0 %v612, 127
      %v639 = vpop.permute.xlu0 %638
      %640 = vrot.lane.b32.xlu0 %v615, 127
      %v641 = vpop.permute.xlu0 %640
      %642 = vrot.lane.b32.xlu0 %v618, 127
      %v643 = vpop.permute.xlu0 %642
      %644 = vrot.lane.b32.xlu0 %v621, 127
      %v645 = vpop.permute.xlu0 %644
      %654 = vrot.lane.b32.xlu0 %v600, 126
      %v655 = vpop.permute.xlu0 %654
      %656 = vrot.lane.b32.xlu0 %v603, 126
      %v657 = vpop.permute.xlu0 %656
      %658 = vrot.lane.b32.xlu0 %v606, 126
      %v659 = vpop.permute.xlu0 %658
      %660 = vrot.lane.b32.xlu0 %v609, 126
      %v661 = vpop.permute.xlu0 %660
      %662 = vrot.lane.b32.xlu0 %v612, 126
      %v663 = vpop.permute.xlu0 %662
      %664 = vrot.lane.b32.xlu0 %v615, 126
      %v665 = vpop.permute.xlu0 %664
      %666 = vrot.lane.b32.xlu0 %v618, 126
      %v667 = vpop.permute.xlu0 %666
      %668 = vrot.lane.b32.xlu0 %v621, 126
      %v669 = vpop.permute.xlu0 %668
      %v678 = vcombine.low %v436, %v438
      %v679 = vcombine.high %v436, %v438
      %v681 = vunpack.c.l.s4 1983009808
      %v682 = vunpack.c.0.s8 %v681
      %v683 = vlaneseq
      %v684 = vshrl.u32 %v683, 7
      %v685 = vsub.s32 %v682, %v684
      %v686 = vrot.slane %v678, %v685
      %v688 = vunpack.c.l.s4 1983009808
      %v689 = vunpack.c.0.s8 %v688
      %v690 = vlaneseq
      %v691 = vshrl.u32 %v690, 7
      %v692 = vsub.s32 %v689, %v691
      %v693 = vrot.slane %v679, %v692
      %v694 = vcombine.low %v437, %v439
      %v695 = vcombine.high %v437, %v439
      %v697 = vunpack.c.l.s4 1983009808
      %v698 = vunpack.c.0.s8 %v697
      %v699 = vlaneseq
      %v700 = vshrl.u32 %v699, 7
      %v701 = vsub.s32 %v698, %v700
      %v702 = vrot.slane %v694, %v701
      %v704 = vunpack.c.l.s4 1983009808
      %v705 = vunpack.c.0.s8 %v704
      %v706 = vlaneseq
      %v707 = vshrl.u32 %v706, 7
      %v708 = vsub.s32 %v705, %v707
      %v709 = vrot.slane %v695, %v708
      %v710 = vcombine.low %v440, %v442
      %v711 = vcombine.high %v440, %v442
      %v713 = vunpack.c.l.s4 1983009808
      %v714 = vunpack.c.0.s8 %v713
      %v715 = vlaneseq
      %v716 = vshrl.u32 %v715, 7
      %v717 = vsub.s32 %v714, %v716
      %v718 = vrot.slane %v710, %v717
      %v720 = vunpack.c.l.s4 1983009808
      %v721 = vunpack.c.0.s8 %v720
      %v722 = vlaneseq
      %v723 = vshrl.u32 %v722, 7
      %v724 = vsub.s32 %v721, %v723
      %v725 = vrot.slane %v711, %v724
      %v726 = vcombine.low %v441, %v443
      %v727 = vcombine.high %v441, %v443
      %v729 = vunpack.c.l.s4 1983009808
      %v730 = vunpack.c.0.s8 %v729
      %v731 = vlaneseq
      %v732 = vshrl.u32 %v731, 7
      %v733 = vsub.s32 %v730, %v732
      %v734 = vrot.slane %v726, %v733
      %v736 = vunpack.c.l.s4 1983009808
      %v737 = vunpack.c.0.s8 %v736
      %v738 = vlaneseq
      %v739 = vshrl.u32 %v738, 7
      %v740 = vsub.s32 %v737, %v739
      %v741 = vrot.slane %v727, %v740
      %v742 = vcombine.low %v686, %v702
      %v743 = vcombine.high %v686, %v702
      %v745 = vunpack.c.l.s4 1934713408
      %v746 = vunpack.c.0.s8 %v745
      %v747 = vlaneseq
      %v748 = vshrl.u32 %v747, 7
      %v749 = vsub.s32 %v746, %v748
      %v750 = vrot.slane %v742, %v749
      %v752 = vunpack.c.l.s4 1934713408
      %v753 = vunpack.c.0.s8 %v752
      %v754 = vlaneseq
      %v755 = vshrl.u32 %v754, 7
      %v756 = vsub.s32 %v753, %v755
      %v757 = vrot.slane %v743, %v756
      %v758 = vcombine.low %v693, %v709
      %v759 = vcombine.high %v693, %v709
      %v761 = vunpack.c.l.s4 1934713408
      %v762 = vunpack.c.0.s8 %v761
      %v763 = vlaneseq
      %v764 = vshrl.u32 %v763, 7
      %v765 = vsub.s32 %v762, %v764
      %v766 = vrot.slane %v758, %v765
      %v768 = vunpack.c.l.s4 1934713408
      %v769 = vunpack.c.0.s8 %v768
      %v770 = vlaneseq
      %v771 = vshrl.u32 %v770, 7
      %v772 = vsub.s32 %v769, %v771
      %v773 = vrot.slane %v759, %v772
      %v774 = vcombine.low %v718, %v734
      %v775 = vcombine.high %v718, %v734
      %v777 = vunpack.c.l.s4 1934713408
      %v778 = vunpack.c.0.s8 %v777
      %v779 = vlaneseq
      %v780 = vshrl.u32 %v779, 7
      %v781 = vsub.s32 %v778, %v780
      %v782 = vrot.slane %v774, %v781
      %v784 = vunpack.c.l.s4 1934713408
      %v785 = vunpack.c.0.s8 %v784
      %v786 = vlaneseq
      %v787 = vshrl.u32 %v786, 7
      %v788 = vsub.s32 %v785, %v787
      %v789 = vrot.slane %v775, %v788
      %v790 = vcombine.low %v725, %v741
      %v791 = vcombine.high %v725, %v741
      %v793 = vunpack.c.l.s4 1934713408
      %v794 = vunpack.c.0.s8 %v793
      %v795 = vlaneseq
      %v796 = vshrl.u32 %v795, 7
      %v797 = vsub.s32 %v794, %v796
      %v798 = vrot.slane %v790, %v797
      %v800 = vunpack.c.l.s4 1934713408
      %v801 = vunpack.c.0.s8 %v800
      %v802 = vlaneseq
      %v803 = vshrl.u32 %v802, 7
      %v804 = vsub.s32 %v801, %v803
      %v805 = vrot.slane %v791, %v804
      %v806 = vcombine.low %v750, %v782
      %v807 = vcombine.high %v750, %v782
      %v808 = vcombine.low %v757, %v789
      %v809 = vcombine.high %v757, %v789
      %v810 = vcombine.low %v766, %v798
      %v811 = vcombine.high %v766, %v798
      %v812 = vcombine.low %v773, %v805
      %v813 = vcombine.high %v773, %v805
      %v814 = vcombine.low %v461, %v465
      %v815 = vcombine.high %v461, %v465
      %v817 = vunpack.c.l.s4 1983009808
      %v818 = vunpack.c.0.s8 %v817
      %v819 = vlaneseq
      %v820 = vshrl.u32 %v819, 7
      %v821 = vsub.s32 %v818, %v820
      %v822 = vrot.slane %v814, %v821
      %v824 = vunpack.c.l.s4 1983009808
      %v825 = vunpack.c.0.s8 %v824
      %v826 = vlaneseq
      %v827 = vshrl.u32 %v826, 7
      %v828 = vsub.s32 %v825, %v827
      %v829 = vrot.slane %v815, %v828
      %v830 = vcombine.low %v463, %v467
      %v831 = vcombine.high %v463, %v467
      %v833 = vunpack.c.l.s4 1983009808
      %v834 = vunpack.c.0.s8 %v833
      %v835 = vlaneseq
      %v836 = vshrl.u32 %v835, 7
      %v837 = vsub.s32 %v834, %v836
      %v838 = vrot.slane %v830, %v837
      %v840 = vunpack.c.l.s4 1983009808
      %v841 = vunpack.c.0.s8 %v840
      %v842 = vlaneseq
      %v843 = vshrl.u32 %v842, 7
      %v844 = vsub.s32 %v841, %v843
      %v845 = vrot.slane %v831, %v844
      %v846 = vcombine.low %v469, %v473
      %v847 = vcombine.high %v469, %v473
      %v849 = vunpack.c.l.s4 1983009808
      %v850 = vunpack.c.0.s8 %v849
      %v851 = vlaneseq
      %v852 = vshrl.u32 %v851, 7
      %v853 = vsub.s32 %v850, %v852
      %v854 = vrot.slane %v846, %v853
      %v856 = vunpack.c.l.s4 1983009808
      %v857 = vunpack.c.0.s8 %v856
      %v858 = vlaneseq
      %v859 = vshrl.u32 %v858, 7
      %v860 = vsub.s32 %v857, %v859
      %v861 = vrot.slane %v847, %v860
      %v862 = vcombine.low %v471, %v475
      %v863 = vcombine.high %v471, %v475
      %v865 = vunpack.c.l.s4 1983009808
      %v866 = vunpack.c.0.s8 %v865
      %v867 = vlaneseq
      %v868 = vshrl.u32 %v867, 7
      %v869 = vsub.s32 %v866, %v868
      %v870 = vrot.slane %v862, %v869
      %v872 = vunpack.c.l.s4 1983009808
      %v873 = vunpack.c.0.s8 %v872
      %v874 = vlaneseq
      %v875 = vshrl.u32 %v874, 7
      %v876 = vsub.s32 %v873, %v875
      %v877 = vrot.slane %v863, %v876
      %v878 = vcombine.low %v822, %v838
      %v879 = vcombine.high %v822, %v838
      %v881 = vunpack.c.l.s4 1934713408
      %v882 = vunpack.c.0.s8 %v881
      %v883 = vlaneseq
      %v884 = vshrl.u32 %v883, 7
      %v885 = vsub.s32 %v882, %v884
      %v886 = vrot.slane %v878, %v885
      %v888 = vunpack.c.l.s4 1934713408
      %v889 = vunpack.c.0.s8 %v888
      %v890 = vlaneseq
      %v891 = vshrl.u32 %v890, 7
      %v892 = vsub.s32 %v889, %v891
      %v893 = vrot.slane %v879, %v892
      %v894 = vcombine.low %v829, %v845
      %v895 = vcombine.high %v829, %v845
      %v897 = vunpack.c.l.s4 1934713408
      %v898 = vunpack.c.0.s8 %v897
      %v899 = vlaneseq
      %v900 = vshrl.u32 %v899, 7
      %v901 = vsub.s32 %v898, %v900
      %v902 = vrot.slane %v894, %v901
      %v904 = vunpack.c.l.s4 1934713408
      %v905 = vunpack.c.0.s8 %v904
      %v906 = vlaneseq
      %v907 = vshrl.u32 %v906, 7
      %v908 = vsub.s32 %v905, %v907
      %v909 = vrot.slane %v895, %v908
      %v910 = vcombine.low %v854, %v870
      %v911 = vcombine.high %v854, %v870
      %v913 = vunpack.c.l.s4 1934713408
      %v914 = vunpack.c.0.s8 %v913
      %v915 = vlaneseq
      %v916 = vshrl.u32 %v915, 7
      %v917 = vsub.s32 %v914, %v916
      %v918 = vrot.slane %v910, %v917
      %v920 = vunpack.c.l.s4 1934713408
      %v921 = vunpack.c.0.s8 %v920
      %v922 = vlaneseq
      %v923 = vshrl.u32 %v922, 7
      %v924 = vsub.s32 %v921, %v923
      %v925 = vrot.slane %v911, %v924
      %v926 = vcombine.low %v861, %v877
      %v927 = vcombine.high %v861, %v877
      %v929 = vunpack.c.l.s4 1934713408
      %v930 = vunpack.c.0.s8 %v929
      %v931 = vlaneseq
      %v932 = vshrl.u32 %v931, 7
      %v933 = vsub.s32 %v930, %v932
      %v934 = vrot.slane %v926, %v933
      %v936 = vunpack.c.l.s4 1934713408
      %v937 = vunpack.c.0.s8 %v936
      %v938 = vlaneseq
      %v939 = vshrl.u32 %v938, 7
      %v940 = vsub.s32 %v937, %v939
      %v941 = vrot.slane %v927, %v940
      %v942 = vcombine.low %v886, %v918
      %v943 = vcombine.high %v886, %v918
      %v944 = vcombine.low %v893, %v925
      %v945 = vcombine.high %v893, %v925
      %v946 = vcombine.low %v902, %v934
      %v947 = vcombine.high %v902, %v934
      %v948 = vcombine.low %v909, %v941
      %v949 = vcombine.high %v909, %v941
      %v950 = vcombine.low %v485, %v489
      %v951 = vcombine.high %v485, %v489
      %v953 = vunpack.c.l.s4 1983009808
      %v954 = vunpack.c.0.s8 %v953
      %v955 = vlaneseq
      %v956 = vshrl.u32 %v955, 7
      %v957 = vsub.s32 %v954, %v956
      %v958 = vrot.slane %v950, %v957
      %v960 = vunpack.c.l.s4 1983009808
      %v961 = vunpack.c.0.s8 %v960
      %v962 = vlaneseq
      %v963 = vshrl.u32 %v962, 7
      %v964 = vsub.s32 %v961, %v963
      %v965 = vrot.slane %v951, %v964
      %v966 = vcombine.low %v487, %v491
      %v967 = vcombine.high %v487, %v491
      %v969 = vunpack.c.l.s4 1983009808
      %v970 = vunpack.c.0.s8 %v969
      %v971 = vlaneseq
      %v972 = vshrl.u32 %v971, 7
      %v973 = vsub.s32 %v970, %v972
      %v974 = vrot.slane %v966, %v973
      %v976 = vunpack.c.l.s4 1983009808
      %v977 = vunpack.c.0.s8 %v976
      %v978 = vlaneseq
      %v979 = vshrl.u32 %v978, 7
      %v980 = vsub.s32 %v977, %v979
      %v981 = vrot.slane %v967, %v980
      %v982 = vcombine.low %v493, %v497
      %v983 = vcombine.high %v493, %v497
      %v985 = vunpack.c.l.s4 1983009808
      %v986 = vunpack.c.0.s8 %v985
      %v987 = vlaneseq
      %v988 = vshrl.u32 %v987, 7
      %v989 = vsub.s32 %v986, %v988
      %v990 = vrot.slane %v982, %v989
      %v992 = vunpack.c.l.s4 1983009808
      %v993 = vunpack.c.0.s8 %v992
      %v994 = vlaneseq
      %v995 = vshrl.u32 %v994, 7
      %v996 = vsub.s32 %v993, %v995
      %v997 = vrot.slane %v983, %v996
      %v998 = vcombine.low %v495, %v499
      %v999 = vcombine.high %v495, %v499
      %v1001 = vunpack.c.l.s4 1983009808
      %v1002 = vunpack.c.0.s8 %v1001
      %v1003 = vlaneseq
      %v1004 = vshrl.u32 %v1003, 7
      %v1005 = vsub.s32 %v1002, %v1004
      %v1006 = vrot.slane %v998, %v1005
      %v1008 = vunpack.c.l.s4 1983009808
      %v1009 = vunpack.c.0.s8 %v1008
      %v1010 = vlaneseq
      %v1011 = vshrl.u32 %v1010, 7
      %v1012 = vsub.s32 %v1009, %v1011
      %v1013 = vrot.slane %v999, %v1012
      %v1014 = vcombine.low %v958, %v974
      %v1015 = vcombine.high %v958, %v974
      %v1017 = vunpack.c.l.s4 1934713408
      %v1018 = vunpack.c.0.s8 %v1017
      %v1019 = vlaneseq
      %v1020 = vshrl.u32 %v1019, 7
      %v1021 = vsub.s32 %v1018, %v1020
      %v1022 = vrot.slane %v1014, %v1021
      %v1024 = vunpack.c.l.s4 1934713408
      %v1025 = vunpack.c.0.s8 %v1024
      %v1026 = vlaneseq
      %v1027 = vshrl.u32 %v1026, 7
      %v1028 = vsub.s32 %v1025, %v1027
      %v1029 = vrot.slane %v1015, %v1028
      %v1030 = vcombine.low %v965, %v981
      %v1031 = vcombine.high %v965, %v981
      %v1033 = vunpack.c.l.s4 1934713408
      %v1034 = vunpack.c.0.s8 %v1033
      %v1035 = vlaneseq
      %v1036 = vshrl.u32 %v1035, 7
      %v1037 = vsub.s32 %v1034, %v1036
      %v1038 = vrot.slane %v1030, %v1037
      %v1040 = vunpack.c.l.s4 1934713408
      %v1041 = vunpack.c.0.s8 %v1040
      %v1042 = vlaneseq
      %v1043 = vshrl.u32 %v1042, 7
      %v1044 = vsub.s32 %v1041, %v1043
      %v1045 = vrot.slane %v1031, %v1044
      %v1046 = vcombine.low %v990, %v1006
      %v1047 = vcombine.high %v990, %v1006
      %v1049 = vunpack.c.l.s4 1934713408
      %v1050 = vunpack.c.0.s8 %v1049
      %v1051 = vlaneseq
      %v1052 = vshrl.u32 %v1051, 7
      %v1053 = vsub.s32 %v1050, %v1052
      %v1054 = vrot.slane %v1046, %v1053
      %v1056 = vunpack.c.l.s4 1934713408
      %v1057 = vunpack.c.0.s8 %v1056
      %v1058 = vlaneseq
      %v1059 = vshrl.u32 %v1058, 7
      %v1060 = vsub.s32 %v1057, %v1059
      %v1061 = vrot.slane %v1047, %v1060
      %v1062 = vcombine.low %v997, %v1013
      %v1063 = vcombine.high %v997, %v1013
      %v1065 = vunpack.c.l.s4 1934713408
      %v1066 = vunpack.c.0.s8 %v1065
      %v1067 = vlaneseq
      %v1068 = vshrl.u32 %v1067, 7
      %v1069 = vsub.s32 %v1066, %v1068
      %v1070 = vrot.slane %v1062, %v1069
      %v1072 = vunpack.c.l.s4 1934713408
      %v1073 = vunpack.c.0.s8 %v1072
      %v1074 = vlaneseq
      %v1075 = vshrl.u32 %v1074, 7
      %v1076 = vsub.s32 %v1073, %v1075
      %v1077 = vrot.slane %v1063, %v1076
      %v1078 = vcombine.low %v1022, %v1054
      %v1079 = vcombine.high %v1022, %v1054
      %v1080 = vcombine.low %v1029, %v1061
      %v1081 = vcombine.high %v1029, %v1061
      %v1082 = vcombine.low %v1038, %v1070
      %v1083 = vcombine.high %v1038, %v1070
      %v1084 = vcombine.low %v1045, %v1077
      %v1085 = vcombine.high %v1045, %v1077
      %v1086 = vcombine.low %v519, %v525
      %v1087 = vcombine.high %v519, %v525
      %v1089 = vunpack.c.l.s4 1983009808
      %v1090 = vunpack.c.0.s8 %v1089
      %v1091 = vlaneseq
      %v1092 = vshrl.u32 %v1091, 7
      %v1093 = vsub.s32 %v1090, %v1092
      %v1094 = vrot.slane %v1086, %v1093
      %v1096 = vunpack.c.l.s4 1983009808
      %v1097 = vunpack.c.0.s8 %v1096
      %v1098 = vlaneseq
      %v1099 = vshrl.u32 %v1098, 7
      %v1100 = vsub.s32 %v1097, %v1099
      %v1101 = vrot.slane %v1087, %v1100
      %v1102 = vcombine.low %v522, %v528
      %v1103 = vcombine.high %v522, %v528
      %v1105 = vunpack.c.l.s4 1983009808
      %v1106 = vunpack.c.0.s8 %v1105
      %v1107 = vlaneseq
      %v1108 = vshrl.u32 %v1107, 7
      %v1109 = vsub.s32 %v1106, %v1108
      %v1110 = vrot.slane %v1102, %v1109
      %v1112 = vunpack.c.l.s4 1983009808
      %v1113 = vunpack.c.0.s8 %v1112
      %v1114 = vlaneseq
      %v1115 = vshrl.u32 %v1114, 7
      %v1116 = vsub.s32 %v1113, %v1115
      %v1117 = vrot.slane %v1103, %v1116
      %v1118 = vcombine.low %v531, %v537
      %v1119 = vcombine.high %v531, %v537
      %v1121 = vunpack.c.l.s4 1983009808
      %v1122 = vunpack.c.0.s8 %v1121
      %v1123 = vlaneseq
      %v1124 = vshrl.u32 %v1123, 7
      %v1125 = vsub.s32 %v1122, %v1124
      %v1126 = vrot.slane %v1118, %v1125
      %v1128 = vunpack.c.l.s4 1983009808
      %v1129 = vunpack.c.0.s8 %v1128
      %v1130 = vlaneseq
      %v1131 = vshrl.u32 %v1130, 7
      %v1132 = vsub.s32 %v1129, %v1131
      %v1133 = vrot.slane %v1119, %v1132
      %v1134 = vcombine.low %v534, %v540
      %v1135 = vcombine.high %v534, %v540
      %v1137 = vunpack.c.l.s4 1983009808
      %v1138 = vunpack.c.0.s8 %v1137
      %v1139 = vlaneseq
      %v1140 = vshrl.u32 %v1139, 7
      %v1141 = vsub.s32 %v1138, %v1140
      %v1142 = vrot.slane %v1134, %v1141
      %v1144 = vunpack.c.l.s4 1983009808
      %v1145 = vunpack.c.0.s8 %v1144
      %v1146 = vlaneseq
      %v1147 = vshrl.u32 %v1146, 7
      %v1148 = vsub.s32 %v1145, %v1147
      %v1149 = vrot.slane %v1135, %v1148
      %v1150 = vcombine.low %v1094, %v1110
      %v1151 = vcombine.high %v1094, %v1110
      %v1153 = vunpack.c.l.s4 1934713408
      %v1154 = vunpack.c.0.s8 %v1153
      %v1155 = vlaneseq
      %v1156 = vshrl.u32 %v1155, 7
      %v1157 = vsub.s32 %v1154, %v1156
      %v1158 = vrot.slane %v1150, %v1157
      %v1160 = vunpack.c.l.s4 1934713408
      %v1161 = vunpack.c.0.s8 %v1160
      %v1162 = vlaneseq
      %v1163 = vshrl.u32 %v1162, 7
      %v1164 = vsub.s32 %v1161, %v1163
      %v1165 = vrot.slane %v1151, %v1164
      %v1166 = vcombine.low %v1101, %v1117
      %v1167 = vcombine.high %v1101, %v1117
      %v1169 = vunpack.c.l.s4 1934713408
      %v1170 = vunpack.c.0.s8 %v1169
      %v1171 = vlaneseq
      %v1172 = vshrl.u32 %v1171, 7
      %v1173 = vsub.s32 %v1170, %v1172
      %v1174 = vrot.slane %v1166, %v1173
      %v1176 = vunpack.c.l.s4 1934713408
      %v1177 = vunpack.c.0.s8 %v1176
      %v1178 = vlaneseq
      %v1179 = vshrl.u32 %v1178, 7
      %v1180 = vsub.s32 %v1177, %v1179
      %v1181 = vrot.slane %v1167, %v1180
      %v1182 = vcombine.low %v1126, %v1142
      %v1183 = vcombine.high %v1126, %v1142
      %v1185 = vunpack.c.l.s4 1934713408
      %v1186 = vunpack.c.0.s8 %v1185
      %v1187 = vlaneseq
      %v1188 = vshrl.u32 %v1187, 7
      %v1189 = vsub.s32 %v1186, %v1188
      %v1190 = vrot.slane %v1182, %v1189
      %v1192 = vunpack.c.l.s4 1934713408
      %v1193 = vunpack.c.0.s8 %v1192
      %v1194 = vlaneseq
      %v1195 = vshrl.u32 %v1194, 7
      %v1196 = vsub.s32 %v1193, %v1195
      %v1197 = vrot.slane %v1183, %v1196
      %v1198 = vcombine.low %v1133, %v1149
      %v1199 = vcombine.high %v1133, %v1149
      %v1201 = vunpack.c.l.s4 1934713408
      %v1202 = vunpack.c.0.s8 %v1201
      %v1203 = vlaneseq
      %v1204 = vshrl.u32 %v1203, 7
      %v1205 = vsub.s32 %v1202, %v1204
      %v1206 = vrot.slane %v1198, %v1205
      %v1208 = vunpack.c.l.s4 1934713408
      %v1209 = vunpack.c.0.s8 %v1208
      %v1210 = vlaneseq
      %v1211 = vshrl.u32 %v1210, 7
      %v1212 = vsub.s32 %v1209, %v1211
      %v1213 = vrot.slane %v1199, %v1212
      %v1214 = vcombine.low %v1158, %v1190
      %v1215 = vcombine.high %v1158, %v1190
      %v1216 = vcombine.low %v1165, %v1197
      %v1217 = vcombine.high %v1165, %v1197
      %v1218 = vcombine.low %v1174, %v1206
      %v1219 = vcombine.high %v1174, %v1206
      %v1220 = vcombine.low %v1181, %v1213
      %v1221 = vcombine.high %v1181, %v1213
      %v1222 = vcombine.low %v550, %v554
      %v1223 = vcombine.high %v550, %v554
      %v1225 = vunpack.c.l.s4 1983009808
      %v1226 = vunpack.c.0.s8 %v1225
      %v1227 = vlaneseq
      %v1228 = vshrl.u32 %v1227, 7
      %v1229 = vsub.s32 %v1226, %v1228
      %v1230 = vrot.slane %v1222, %v1229
      %v1232 = vunpack.c.l.s4 1983009808
      %v1233 = vunpack.c.0.s8 %v1232
      %v1234 = vlaneseq
      %v1235 = vshrl.u32 %v1234, 7
      %v1236 = vsub.s32 %v1233, %v1235
      %v1237 = vrot.slane %v1223, %v1236
      %v1238 = vcombine.low %v552, %v556
      %v1239 = vcombine.high %v552, %v556
      %v1241 = vunpack.c.l.s4 1983009808
      %v1242 = vunpack.c.0.s8 %v1241
      %v1243 = vlaneseq
      %v1244 = vshrl.u32 %v1243, 7
      %v1245 = vsub.s32 %v1242, %v1244
      %v1246 = vrot.slane %v1238, %v1245
      %v1248 = vunpack.c.l.s4 1983009808
      %v1249 = vunpack.c.0.s8 %v1248
      %v1250 = vlaneseq
      %v1251 = vshrl.u32 %v1250, 7
      %v1252 = vsub.s32 %v1249, %v1251
      %v1253 = vrot.slane %v1239, %v1252
      %v1254 = vcombine.low %v558, %v562
      %v1255 = vcombine.high %v558, %v562
      %v1257 = vunpack.c.l.s4 1983009808
      %v1258 = vunpack.c.0.s8 %v1257
      %v1259 = vlaneseq
      %v1260 = vshrl.u32 %v1259, 7
      %v1261 = vsub.s32 %v1258, %v1260
      %v1262 = vrot.slane %v1254, %v1261
      %v1264 = vunpack.c.l.s4 1983009808
      %v1265 = vunpack.c.0.s8 %v1264
      %v1266 = vlaneseq
      %v1267 = vshrl.u32 %v1266, 7
      %v1268 = vsub.s32 %v1265, %v1267
      %v1269 = vrot.slane %v1255, %v1268
      %v1270 = vcombine.low %v560, %v564
      %v1271 = vcombine.high %v560, %v564
      %v1273 = vunpack.c.l.s4 1983009808
      %v1274 = vunpack.c.0.s8 %v1273
      %v1275 = vlaneseq
      %v1276 = vshrl.u32 %v1275, 7
      %v1277 = vsub.s32 %v1274, %v1276
      %v1278 = vrot.slane %v1270, %v1277
      %v1280 = vunpack.c.l.s4 1983009808
      %v1281 = vunpack.c.0.s8 %v1280
      %v1282 = vlaneseq
      %v1283 = vshrl.u32 %v1282, 7
      %v1284 = vsub.s32 %v1281, %v1283
      %v1285 = vrot.slane %v1271, %v1284
      %v1286 = vcombine.low %v1230, %v1246
      %v1287 = vcombine.high %v1230, %v1246
      %v1289 = vunpack.c.l.s4 1934713408
      %v1290 = vunpack.c.0.s8 %v1289
      %v1291 = vlaneseq
      %v1292 = vshrl.u32 %v1291, 7
      %v1293 = vsub.s32 %v1290, %v1292
      %v1294 = vrot.slane %v1286, %v1293
      %v1296 = vunpack.c.l.s4 1934713408
      %v1297 = vunpack.c.0.s8 %v1296
      %v1298 = vlaneseq
      %v1299 = vshrl.u32 %v1298, 7
      %v1300 = vsub.s32 %v1297, %v1299
      %v1301 = vrot.slane %v1287, %v1300
      %v1302 = vcombine.low %v1237, %v1253
      %v1303 = vcombine.high %v1237, %v1253
      %v1305 = vunpack.c.l.s4 1934713408
      %v1306 = vunpack.c.0.s8 %v1305
      %v1307 = vlaneseq
      %v1308 = vshrl.u32 %v1307, 7
      %v1309 = vsub.s32 %v1306, %v1308
      %v1310 = vrot.slane %v1302, %v1309
      %v1312 = vunpack.c.l.s4 1934713408
      %v1313 = vunpack.c.0.s8 %v1312
      %v1314 = vlaneseq
      %v1315 = vshrl.u32 %v1314, 7
      %v1316 = vsub.s32 %v1313, %v1315
      %v1317 = vrot.slane %v1303, %v1316
      %v1318 = vcombine.low %v1262, %v1278
      %v1319 = vcombine.high %v1262, %v1278
      %v1321 = vunpack.c.l.s4 1934713408
      %v1322 = vunpack.c.0.s8 %v1321
      %v1323 = vlaneseq
      %v1324 = vshrl.u32 %v1323, 7
      %v1325 = vsub.s32 %v1322, %v1324
      %v1326 = vrot.slane %v1318, %v1325
      %v1328 = vunpack.c.l.s4 1934713408
      %v1329 = vunpack.c.0.s8 %v1328
      %v1330 = vlaneseq
      %v1331 = vshrl.u32 %v1330, 7
      %v1332 = vsub.s32 %v1329, %v1331
      %v1333 = vrot.slane %v1319, %v1332
      %v1334 = vcombine.low %v1269, %v1285
      %v1335 = vcombine.high %v1269, %v1285
      %v1337 = vunpack.c.l.s4 1934713408
      %v1338 = vunpack.c.0.s8 %v1337
      %v1339 = vlaneseq
      %v1340 = vshrl.u32 %v1339, 7
      %v1341 = vsub.s32 %v1338, %v1340
      %v1342 = vrot.slane %v1334, %v1341
      %v1344 = vunpack.c.l.s4 1934713408
      %v1345 = vunpack.c.0.s8 %v1344
      %v1346 = vlaneseq
      %v1347 = vshrl.u32 %v1346, 7
      %v1348 = vsub.s32 %v1345, %v1347
      %v1349 = vrot.slane %v1335, %v1348
      %v1350 = vcombine.low %v1294, %v1326
      %v1351 = vcombine.high %v1294, %v1326
      %v1352 = vcombine.low %v1301, %v1333
      %v1353 = vcombine.high %v1301, %v1333
      %v1354 = vcombine.low %v1310, %v1342
      %v1355 = vcombine.high %v1310, %v1342
      %v1356 = vcombine.low %v1317, %v1349
      %v1357 = vcombine.high %v1317, %v1349
      %v1358 = vcombine.low %v574, %v578
      %v1359 = vcombine.high %v574, %v578
      %v1361 = vunpack.c.l.s4 1983009808
      %v1362 = vunpack.c.0.s8 %v1361
      %v1363 = vlaneseq
      %v1364 = vshrl.u32 %v1363, 7
      %v1365 = vsub.s32 %v1362, %v1364
      %v1366 = vrot.slane %v1358, %v1365
      %v1368 = vunpack.c.l.s4 1983009808
      %v1369 = vunpack.c.0.s8 %v1368
      %v1370 = vlaneseq
      %v1371 = vshrl.u32 %v1370, 7
      %v1372 = vsub.s32 %v1369, %v1371
      %v1373 = vrot.slane %v1359, %v1372
      %v1374 = vcombine.low %v576, %v580
      %v1375 = vcombine.high %v576, %v580
      %v1377 = vunpack.c.l.s4 1983009808
      %v1378 = vunpack.c.0.s8 %v1377
      %v1379 = vlaneseq
      %v1380 = vshrl.u32 %v1379, 7
      %v1381 = vsub.s32 %v1378, %v1380
      %v1382 = vrot.slane %v1374, %v1381
      %v1384 = vunpack.c.l.s4 1983009808
      %v1385 = vunpack.c.0.s8 %v1384
      %v1386 = vlaneseq
      %v1387 = vshrl.u32 %v1386, 7
      %v1388 = vsub.s32 %v1385, %v1387
      %v1389 = vrot.slane %v1375, %v1388
      %v1390 = vcombine.low %v582, %v586
      %v1391 = vcombine.high %v582, %v586
      %v1393 = vunpack.c.l.s4 1983009808
      %v1394 = vunpack.c.0.s8 %v1393
      %v1395 = vlaneseq
      %v1396 = vshrl.u32 %v1395, 7
      %v1397 = vsub.s32 %v1394, %v1396
      %v1398 = vrot.slane %v1390, %v1397
      %v1400 = vunpack.c.l.s4 1983009808
      %v1401 = vunpack.c.0.s8 %v1400
      %v1402 = vlaneseq
      %v1403 = vshrl.u32 %v1402, 7
      %v1404 = vsub.s32 %v1401, %v1403
      %v1405 = vrot.slane %v1391, %v1404
      %v1406 = vcombine.low %v584, %v588
      %v1407 = vcombine.high %v584, %v588
      %v1409 = vunpack.c.l.s4 1983009808
      %v1410 = vunpack.c.0.s8 %v1409
      %v1411 = vlaneseq
      %v1412 = vshrl.u32 %v1411, 7
      %v1413 = vsub.s32 %v1410, %v1412
      %v1414 = vrot.slane %v1406, %v1413
      %v1416 = vunpack.c.l.s4 1983009808
      %v1417 = vunpack.c.0.s8 %v1416
      %v1418 = vlaneseq
      %v1419 = vshrl.u32 %v1418, 7
      %v1420 = vsub.s32 %v1417, %v1419
      %v1421 = vrot.slane %v1407, %v1420
      %v1422 = vcombine.low %v1366, %v1382
      %v1423 = vcombine.high %v1366, %v1382
      %v1425 = vunpack.c.l.s4 1934713408
      %v1426 = vunpack.c.0.s8 %v1425
      %v1427 = vlaneseq
      %v1428 = vshrl.u32 %v1427, 7
      %v1429 = vsub.s32 %v1426, %v1428
      %v1430 = vrot.slane %v1422, %v1429
      %v1432 = vunpack.c.l.s4 1934713408
      %v1433 = vunpack.c.0.s8 %v1432
      %v1434 = vlaneseq
      %v1435 = vshrl.u32 %v1434, 7
      %v1436 = vsub.s32 %v1433, %v1435
      %v1437 = vrot.slane %v1423, %v1436
      %v1438 = vcombine.low %v1373, %v1389
      %v1439 = vcombine.high %v1373, %v1389
      %v1441 = vunpack.c.l.s4 1934713408
      %v1442 = vunpack.c.0.s8 %v1441
      %v1443 = vlaneseq
      %v1444 = vshrl.u32 %v1443, 7
      %v1445 = vsub.s32 %v1442, %v1444
      %v1446 = vrot.slane %v1438, %v1445
      %v1448 = vunpack.c.l.s4 1934713408
      %v1449 = vunpack.c.0.s8 %v1448
      %v1450 = vlaneseq
      %v1451 = vshrl.u32 %v1450, 7
      %v1452 = vsub.s32 %v1449, %v1451
      %v1453 = vrot.slane %v1439, %v1452
      %v1454 = vcombine.low %v1398, %v1414
      %v1455 = vcombine.high %v1398, %v1414
      %v1457 = vunpack.c.l.s4 1934713408
      %v1458 = vunpack.c.0.s8 %v1457
      %v1459 = vlaneseq
      %v1460 = vshrl.u32 %v1459, 7
      %v1461 = vsub.s32 %v1458, %v1460
      %v1462 = vrot.slane %v1454, %v1461
      %v1464 = vunpack.c.l.s4 1934713408
      %v1465 = vunpack.c.0.s8 %v1464
      %v1466 = vlaneseq
      %v1467 = vshrl.u32 %v1466, 7
      %v1468 = vsub.s32 %v1465, %v1467
      %v1469 = vrot.slane %v1455, %v1468
      %v1470 = vcombine.low %v1405, %v1421
      %v1471 = vcombine.high %v1405, %v1421
      %v1473 = vunpack.c.l.s4 1934713408
      %v1474 = vunpack.c.0.s8 %v1473
      %v1475 = vlaneseq
      %v1476 = vshrl.u32 %v1475, 7
      %v1477 = vsub.s32 %v1474, %v1476
      %v1478 = vrot.slane %v1470, %v1477
      %v1480 = vunpack.c.l.s4 1934713408
      %v1481 = vunpack.c.0.s8 %v1480
      %v1482 = vlaneseq
      %v1483 = vshrl.u32 %v1482, 7
      %v1484 = vsub.s32 %v1481, %v1483
      %v1485 = vrot.slane %v1471, %v1484
      %v1486 = vcombine.low %v1430, %v1462
      %v1487 = vcombine.high %v1430, %v1462
      %v1488 = vcombine.low %v1437, %v1469
      %v1489 = vcombine.high %v1437, %v1469
      %v1490 = vcombine.low %v1446, %v1478
      %v1491 = vcombine.high %v1446, %v1478
      %v1492 = vcombine.low %v1453, %v1485
      %v1493 = vcombine.high %v1453, %v1485
      %v1494 = vcombine.low %v600, %v606
      %v1495 = vcombine.high %v600, %v606
      %v1497 = vunpack.c.l.s4 1983009808
      %v1498 = vunpack.c.0.s8 %v1497
      %v1499 = vlaneseq
      %v1500 = vshrl.u32 %v1499, 7
      %v1501 = vsub.s32 %v1498, %v1500
      %v1502 = vrot.slane %v1494, %v1501
      %v1504 = vunpack.c.l.s4 1983009808
      %v1505 = vunpack.c.0.s8 %v1504
      %v1506 = vlaneseq
      %v1507 = vshrl.u32 %v1506, 7
      %v1508 = vsub.s32 %v1505, %v1507
      %v1509 = vrot.slane %v1495, %v1508
      %v1510 = vcombine.low %v603, %v609
      %v1511 = vcombine.high %v603, %v609
      %v1513 = vunpack.c.l.s4 1983009808
      %v1514 = vunpack.c.0.s8 %v1513
      %v1515 = vlaneseq
      %v1516 = vshrl.u32 %v1515, 7
      %v1517 = vsub.s32 %v1514, %v1516
      %v1518 = vrot.slane %v1510, %v1517
      %v1520 = vunpack.c.l.s4 1983009808
      %v1521 = vunpack.c.0.s8 %v1520
      %v1522 = vlaneseq
      %v1523 = vshrl.u32 %v1522, 7
      %v1524 = vsub.s32 %v1521, %v1523
      %v1525 = vrot.slane %v1511, %v1524
      %v1526 = vcombine.low %v612, %v618
      %v1527 = vcombine.high %v612, %v618
      %v1529 = vunpack.c.l.s4 1983009808
      %v1530 = vunpack.c.0.s8 %v1529
      %v1531 = vlaneseq
      %v1532 = vshrl.u32 %v1531, 7
      %v1533 = vsub.s32 %v1530, %v1532
      %v1534 = vrot.slane %v1526, %v1533
      %v1536 = vunpack.c.l.s4 1983009808
      %v1537 = vunpack.c.0.s8 %v1536
      %v1538 = vlaneseq
      %v1539 = vshrl.u32 %v1538, 7
      %v1540 = vsub.s32 %v1537, %v1539
      %v1541 = vrot.slane %v1527, %v1540
      %v1542 = vcombine.low %v615, %v621
      %v1543 = vcombine.high %v615, %v621
      %v1545 = vunpack.c.l.s4 1983009808
      %v1546 = vunpack.c.0.s8 %v1545
      %v1547 = vlaneseq
      %v1548 = vshrl.u32 %v1547, 7
      %v1549 = vsub.s32 %v1546, %v1548
      %v1550 = vrot.slane %v1542, %v1549
      %v1552 = vunpack.c.l.s4 1983009808
      %v1553 = vunpack.c.0.s8 %v1552
      %v1554 = vlaneseq
      %v1555 = vshrl.u32 %v1554, 7
      %v1556 = vsub.s32 %v1553, %v1555
      %v1557 = vrot.slane %v1543, %v1556
      %v1558 = vcombine.low %v1502, %v1518
      %v1559 = vcombine.high %v1502, %v1518
      %v1561 = vunpack.c.l.s4 1934713408
      %v1562 = vunpack.c.0.s8 %v1561
      %v1563 = vlaneseq
      %v1564 = vshrl.u32 %v1563, 7
      %v1565 = vsub.s32 %v1562, %v1564
      %v1566 = vrot.slane %v1558, %v1565
      %v1568 = vunpack.c.l.s4 1934713408
      %v1569 = vunpack.c.0.s8 %v1568
      %v1570 = vlaneseq
      %v1571 = vshrl.u32 %v1570, 7
      %v1572 = vsub.s32 %v1569, %v1571
      %v1573 = vrot.slane %v1559, %v1572
      %v1574 = vcombine.low %v1509, %v1525
      %v1575 = vcombine.high %v1509, %v1525
      %v1577 = vunpack.c.l.s4 1934713408
      %v1578 = vunpack.c.0.s8 %v1577
      %v1579 = vlaneseq
      %v1580 = vshrl.u32 %v1579, 7
      %v1581 = vsub.s32 %v1578, %v1580
      %v1582 = vrot.slane %v1574, %v1581
      %v1584 = vunpack.c.l.s4 1934713408
      %v1585 = vunpack.c.0.s8 %v1584
      %v1586 = vlaneseq
      %v1587 = vshrl.u32 %v1586, 7
      %v1588 = vsub.s32 %v1585, %v1587
      %v1589 = vrot.slane %v1575, %v1588
      %v1590 = vcombine.low %v1534, %v1550
      %v1591 = vcombine.high %v1534, %v1550
      %v1593 = vunpack.c.l.s4 1934713408
      %v1594 = vunpack.c.0.s8 %v1593
      %v1595 = vlaneseq
      %v1596 = vshrl.u32 %v1595, 7
      %v1597 = vsub.s32 %v1594, %v1596
      %v1598 = vrot.slane %v1590, %v1597
      %v1600 = vunpack.c.l.s4 1934713408
      %v1601 = vunpack.c.0.s8 %v1600
      %v1602 = vlaneseq
      %v1603 = vshrl.u32 %v1602, 7
      %v1604 = vsub.s32 %v1601, %v1603
      %v1605 = vrot.slane %v1591, %v1604
      %v1606 = vcombine.low %v1541, %v1557
      %v1607 = vcombine.high %v1541, %v1557
      %v1609 = vunpack.c.l.s4 1934713408
      %v1610 = vunpack.c.0.s8 %v1609
      %v1611 = vlaneseq
      %v1612 = vshrl.u32 %v1611, 7
      %v1613 = vsub.s32 %v1610, %v1612
      %v1614 = vrot.slane %v1606, %v1613
      %v1616 = vunpack.c.l.s4 1934713408
      %v1617 = vunpack.c.0.s8 %v1616
      %v1618 = vlaneseq
      %v1619 = vshrl.u32 %v1618, 7
      %v1620 = vsub.s32 %v1617, %v1619
      %v1621 = vrot.slane %v1607, %v1620
      %v1622 = vcombine.low %v1566, %v1598
      %v1623 = vcombine.high %v1566, %v1598
      %v1624 = vcombine.low %v1573, %v1605
      %v1625 = vcombine.high %v1573, %v1605
      %v1626 = vcombine.low %v1582, %v1614
      %v1627 = vcombine.high %v1582, %v1614
      %v1628 = vcombine.low %v1589, %v1621
      %v1629 = vcombine.high %v1589, %v1621
      %v1630 = vcombine.low %v631, %v635
      %v1631 = vcombine.high %v631, %v635
      %v1633 = vunpack.c.l.s4 1983009808
      %v1634 = vunpack.c.0.s8 %v1633
      %v1635 = vlaneseq
      %v1636 = vshrl.u32 %v1635, 7
      %v1637 = vsub.s32 %v1634, %v1636
      %v1638 = vrot.slane %v1630, %v1637
      %v1640 = vunpack.c.l.s4 1983009808
      %v1641 = vunpack.c.0.s8 %v1640
      %v1642 = vlaneseq
      %v1643 = vshrl.u32 %v1642, 7
      %v1644 = vsub.s32 %v1641, %v1643
      %v1645 = vrot.slane %v1631, %v1644
      %v1646 = vcombine.low %v633, %v637
      %v1647 = vcombine.high %v633, %v637
      %v1649 = vunpack.c.l.s4 1983009808
      %v1650 = vunpack.c.0.s8 %v1649
      %v1651 = vlaneseq
      %v1652 = vshrl.u32 %v1651, 7
      %v1653 = vsub.s32 %v1650, %v1652
      %v1654 = vrot.slane %v1646, %v1653
      %v1656 = vunpack.c.l.s4 1983009808
      %v1657 = vunpack.c.0.s8 %v1656
      %v1658 = vlaneseq
      %v1659 = vshrl.u32 %v1658, 7
      %v1660 = vsub.s32 %v1657, %v1659
      %v1661 = vrot.slane %v1647, %v1660
      %v1662 = vcombine.low %v639, %v643
      %v1663 = vcombine.high %v639, %v643
      %v1665 = vunpack.c.l.s4 1983009808
      %v1666 = vunpack.c.0.s8 %v1665
      %v1667 = vlaneseq
      %v1668 = vshrl.u32 %v1667, 7
      %v1669 = vsub.s32 %v1666, %v1668
      %v1670 = vrot.slane %v1662, %v1669
      %v1672 = vunpack.c.l.s4 1983009808
      %v1673 = vunpack.c.0.s8 %v1672
      %v1674 = vlaneseq
      %v1675 = vshrl.u32 %v1674, 7
      %v1676 = vsub.s32 %v1673, %v1675
      %v1677 = vrot.slane %v1663, %v1676
      %v1678 = vcombine.low %v641, %v645
      %v1679 = vcombine.high %v641, %v645
      %v1681 = vunpack.c.l.s4 1983009808
      %v1682 = vunpack.c.0.s8 %v1681
      %v1683 = vlaneseq
      %v1684 = vshrl.u32 %v1683, 7
      %v1685 = vsub.s32 %v1682, %v1684
      %v1686 = vrot.slane %v1678, %v1685
      %v1688 = vunpack.c.l.s4 1983009808
      %v1689 = vunpack.c.0.s8 %v1688
      %v1690 = vlaneseq
      %v1691 = vshrl.u32 %v1690, 7
      %v1692 = vsub.s32 %v1689, %v1691
      %v1693 = vrot.slane %v1679, %v1692
      %v1694 = vcombine.low %v1638, %v1654
      %v1695 = vcombine.high %v1638, %v1654
      %v1697 = vunpack.c.l.s4 1934713408
      %v1698 = vunpack.c.0.s8 %v1697
      %v1699 = vlaneseq
      %v1700 = vshrl.u32 %v1699, 7
      %v1701 = vsub.s32 %v1698, %v1700
      %v1702 = vrot.slane %v1694, %v1701
      %v1704 = vunpack.c.l.s4 1934713408
      %v1705 = vunpack.c.0.s8 %v1704
      %v1706 = vlaneseq
      %v1707 = vshrl.u32 %v1706, 7
      %v1708 = vsub.s32 %v1705, %v1707
      %v1709 = vrot.slane %v1695, %v1708
      %v1710 = vcombine.low %v1645, %v1661
      %v1711 = vcombine.high %v1645, %v1661
      %v1713 = vunpack.c.l.s4 1934713408
      %v1714 = vunpack.c.0.s8 %v1713
      %v1715 = vlaneseq
      %v1716 = vshrl.u32 %v1715, 7
      %v1717 = vsub.s32 %v1714, %v1716
      %v1718 = vrot.slane %v1710, %v1717
      %v1720 = vunpack.c.l.s4 1934713408
      %v1721 = vunpack.c.0.s8 %v1720
      %v1722 = vlaneseq
      %v1723 = vshrl.u32 %v1722, 7
      %v1724 = vsub.s32 %v1721, %v1723
      %v1725 = vrot.slane %v1711, %v1724
      %v1726 = vcombine.low %v1670, %v1686
      %v1727 = vcombine.high %v1670, %v1686
      %v1729 = vunpack.c.l.s4 1934713408
      %v1730 = vunpack.c.0.s8 %v1729
      %v1731 = vlaneseq
      %v1732 = vshrl.u32 %v1731, 7
      %v1733 = vsub.s32 %v1730, %v1732
      %v1734 = vrot.slane %v1726, %v1733
      %v1736 = vunpack.c.l.s4 1934713408
      %v1737 = vunpack.c.0.s8 %v1736
      %v1738 = vlaneseq
      %v1739 = vshrl.u32 %v1738, 7
      %v1740 = vsub.s32 %v1737, %v1739
      %v1741 = vrot.slane %v1727, %v1740
      %v1742 = vcombine.low %v1677, %v1693
      %v1743 = vcombine.high %v1677, %v1693
      %v1745 = vunpack.c.l.s4 1934713408
      %v1746 = vunpack.c.0.s8 %v1745
      %v1747 = vlaneseq
      %v1748 = vshrl.u32 %v1747, 7
      %v1749 = vsub.s32 %v1746, %v1748
      %v1750 = vrot.slane %v1742, %v1749
      %v1752 = vunpack.c.l.s4 1934713408
      %v1753 = vunpack.c.0.s8 %v1752
      %v1754 = vlaneseq
      %v1755 = vshrl.u32 %v1754, 7
      %v1756 = vsub.s32 %v1753, %v1755
      %v1757 = vrot.slane %v1743, %v1756
      %v1758 = vcombine.low %v1702, %v1734
      %v1759 = vcombine.high %v1702, %v1734
      %v1760 = vcombine.low %v1709, %v1741
      %v1761 = vcombine.high %v1709, %v1741
      %v1762 = vcombine.low %v1718, %v1750
      %v1763 = vcombine.high %v1718, %v1750
      %v1764 = vcombine.low %v1725, %v1757
      %v1765 = vcombine.high %v1725, %v1757
      %v1766 = vcombine.low %v655, %v659
      %v1767 = vcombine.high %v655, %v659
      %v1769 = vunpack.c.l.s4 1983009808
      %v1770 = vunpack.c.0.s8 %v1769
      %v1771 = vlaneseq
      %v1772 = vshrl.u32 %v1771, 7
      %v1773 = vsub.s32 %v1770, %v1772
      %v1774 = vrot.slane %v1766, %v1773
      %v1776 = vunpack.c.l.s4 1983009808
      %v1777 = vunpack.c.0.s8 %v1776
      %v1778 = vlaneseq
      %v1779 = vshrl.u32 %v1778, 7
      %v1780 = vsub.s32 %v1777, %v1779
      %v1781 = vrot.slane %v1767, %v1780
      %v1782 = vcombine.low %v657, %v661
      %v1783 = vcombine.high %v657, %v661
      %v1785 = vunpack.c.l.s4 1983009808
      %v1786 = vunpack.c.0.s8 %v1785
      %v1787 = vlaneseq
      %v1788 = vshrl.u32 %v1787, 7
      %v1789 = vsub.s32 %v1786, %v1788
      %v1790 = vrot.slane %v1782, %v1789
      %v1792 = vunpack.c.l.s4 1983009808
      %v1793 = vunpack.c.0.s8 %v1792
      %v1794 = vlaneseq
      %v1795 = vshrl.u32 %v1794, 7
      %v1796 = vsub.s32 %v1793, %v1795
      %v1797 = vrot.slane %v1783, %v1796
      %v1798 = vcombine.low %v663, %v667
      %v1799 = vcombine.high %v663, %v667
      %v1801 = vunpack.c.l.s4 1983009808
      %v1802 = vunpack.c.0.s8 %v1801
      %v1803 = vlaneseq
      %v1804 = vshrl.u32 %v1803, 7
      %v1805 = vsub.s32 %v1802, %v1804
      %v1806 = vrot.slane %v1798, %v1805
      %v1808 = vunpack.c.l.s4 1983009808
      %v1809 = vunpack.c.0.s8 %v1808
      %v1810 = vlaneseq
      %v1811 = vshrl.u32 %v1810, 7
      %v1812 = vsub.s32 %v1809, %v1811
      %v1813 = vrot.slane %v1799, %v1812
      %v1814 = vcombine.low %v665, %v669
      %v1815 = vcombine.high %v665, %v669
      %v1817 = vunpack.c.l.s4 1983009808
      %v1818 = vunpack.c.0.s8 %v1817
      %v1819 = vlaneseq
      %v1820 = vshrl.u32 %v1819, 7
      %v1821 = vsub.s32 %v1818, %v1820
      %v1822 = vrot.slane %v1814, %v1821
      %v1824 = vunpack.c.l.s4 1983009808
      %v1825 = vunpack.c.0.s8 %v1824
      %v1826 = vlaneseq
      %v1827 = vshrl.u32 %v1826, 7
      %v1828 = vsub.s32 %v1825, %v1827
      %v1829 = vrot.slane %v1815, %v1828
      %v1830 = vcombine.low %v1774, %v1790
      %v1831 = vcombine.high %v1774, %v1790
      %v1833 = vunpack.c.l.s4 1934713408
      %v1834 = vunpack.c.0.s8 %v1833
      %v1835 = vlaneseq
      %v1836 = vshrl.u32 %v1835, 7
      %v1837 = vsub.s32 %v1834, %v1836
      %v1838 = vrot.slane %v1830, %v1837
      %v1840 = vunpack.c.l.s4 1934713408
      %v1841 = vunpack.c.0.s8 %v1840
      %v1842 = vlaneseq
      %v1843 = vshrl.u32 %v1842, 7
      %v1844 = vsub.s32 %v1841, %v1843
      %v1845 = vrot.slane %v1831, %v1844
      %v1846 = vcombine.low %v1781, %v1797
      %v1847 = vcombine.high %v1781, %v1797
      %v1849 = vunpack.c.l.s4 1934713408
      %v1850 = vunpack.c.0.s8 %v1849
      %v1851 = vlaneseq
      %v1852 = vshrl.u32 %v1851, 7
      %v1853 = vsub.s32 %v1850, %v1852
      %v1854 = vrot.slane %v1846, %v1853
      %v1856 = vunpack.c.l.s4 1934713408
      %v1857 = vunpack.c.0.s8 %v1856
      %v1858 = vlaneseq
      %v1859 = vshrl.u32 %v1858, 7
      %v1860 = vsub.s32 %v1857, %v1859
      %v1861 = vrot.slane %v1847, %v1860
      %v1862 = vcombine.low %v1806, %v1822
      %v1863 = vcombine.high %v1806, %v1822
      %v1865 = vunpack.c.l.s4 1934713408
      %v1866 = vunpack.c.0.s8 %v1865
      %v1867 = vlaneseq
      %v1868 = vshrl.u32 %v1867, 7
      %v1869 = vsub.s32 %v1866, %v1868
      %v1870 = vrot.slane %v1862, %v1869
      %v1872 = vunpack.c.l.s4 1934713408
      %v1873 = vunpack.c.0.s8 %v1872
      %v1874 = vlaneseq
      %v1875 = vshrl.u32 %v1874, 7
      %v1876 = vsub.s32 %v1873, %v1875
      %v1877 = vrot.slane %v1863, %v1876
      %v1878 = vcombine.low %v1813, %v1829
      %v1879 = vcombine.high %v1813, %v1829
      %v1881 = vunpack.c.l.s4 1934713408
      %v1882 = vunpack.c.0.s8 %v1881
      %v1883 = vlaneseq
      %v1884 = vshrl.u32 %v1883, 7
      %v1885 = vsub.s32 %v1882, %v1884
      %v1886 = vrot.slane %v1878, %v1885
      %v1888 = vunpack.c.l.s4 1934713408
      %v1889 = vunpack.c.0.s8 %v1888
      %v1890 = vlaneseq
      %v1891 = vshrl.u32 %v1890, 7
      %v1892 = vsub.s32 %v1889, %v1891
      %v1893 = vrot.slane %v1879, %v1892
      %v1894 = vcombine.low %v1838, %v1870
      %v1895 = vcombine.high %v1838, %v1870
      %v1896 = vcombine.low %v1845, %v1877
      %v1897 = vcombine.high %v1845, %v1877
      %v1898 = vcombine.low %v1854, %v1886
      %v1899 = vcombine.high %v1854, %v1886
      %v1900 = vcombine.low %v1861, %v1893
      %v1901 = vcombine.high %v1861, %v1893
      %1911 = vrot.lane.b32.xlu0 %v807, 10
      %v1912 = vpop.permute.xlu0 %1911
      %1913 = vrot.lane.b32.xlu0 %v943, 10
      %v1914 = vpop.permute.xlu0 %1913
      %1915 = vrot.lane.b32.xlu0 %v1079, 10
      %v1916 = vpop.permute.xlu0 %1915
      %1917 = vrot.lane.b32.xlu0 %v1215, 10
      %v1918 = vpop.permute.xlu0 %1917
      %1919 = vrot.lane.b32.xlu0 %v1351, 10
      %v1920 = vpop.permute.xlu0 %1919
      %1921 = vrot.lane.b32.xlu0 %v1487, 10
      %v1922 = vpop.permute.xlu0 %1921
      %1923 = vrot.lane.b32.xlu0 %v1623, 10
      %v1924 = vpop.permute.xlu0 %1923
      %1925 = vrot.lane.b32.xlu0 %v1759, 10
      %v1926 = vpop.permute.xlu0 %1925
      %1927 = vrot.lane.b32.xlu0 %v1895, 10
      %v1928 = vpop.permute.xlu0 %1927
      %1947 = vrot.lane.b32.xlu0 %v808, 20
      %v1948 = vpop.permute.xlu0 %1947
      %1949 = vrot.lane.b32.xlu0 %v944, 20
      %v1950 = vpop.permute.xlu0 %1949
      %1951 = vrot.lane.b32.xlu0 %v1080, 20
      %v1952 = vpop.permute.xlu0 %1951
      %1953 = vrot.lane.b32.xlu0 %v1216, 20
      %v1954 = vpop.permute.xlu0 %1953
      %1955 = vrot.lane.b32.xlu0 %v1352, 20
      %v1956 = vpop.permute.xlu0 %1955
      %1957 = vrot.lane.b32.xlu0 %v1488, 20
      %v1958 = vpop.permute.xlu0 %1957
      %1959 = vrot.lane.b32.xlu0 %v1624, 20
      %v1960 = vpop.permute.xlu0 %1959
      %1961 = vrot.lane.b32.xlu0 %v1760, 20
      %v1962 = vpop.permute.xlu0 %1961
      %1963 = vrot.lane.b32.xlu0 %v1896, 20
      %v1964 = vpop.permute.xlu0 %1963
      %1983 = vrot.lane.b32.xlu0 %v809, 30
      %v1984 = vpop.permute.xlu0 %1983
      %1985 = vrot.lane.b32.xlu0 %v945, 30
      %v1986 = vpop.permute.xlu0 %1985
      %1987 = vrot.lane.b32.xlu0 %v1081, 30
      %v1988 = vpop.permute.xlu0 %1987
      %1989 = vrot.lane.b32.xlu0 %v1217, 30
      %v1990 = vpop.permute.xlu0 %1989
      %1991 = vrot.lane.b32.xlu0 %v1353, 30
      %v1992 = vpop.permute.xlu0 %1991
      %1993 = vrot.lane.b32.xlu0 %v1489, 30
      %v1994 = vpop.permute.xlu0 %1993
      %1995 = vrot.lane.b32.xlu0 %v1625, 30
      %v1996 = vpop.permute.xlu0 %1995
      %1997 = vrot.lane.b32.xlu0 %v1761, 30
      %v1998 = vpop.permute.xlu0 %1997
      %1999 = vrot.lane.b32.xlu0 %v1897, 30
      %v2000 = vpop.permute.xlu0 %1999
      %2019 = vrot.lane.b32.xlu0 %v810, 40
      %v2020 = vpop.permute.xlu0 %2019
      %2021 = vrot.lane.b32.xlu0 %v946, 40
      %v2022 = vpop.permute.xlu0 %2021
      %2023 = vrot.lane.b32.xlu0 %v1082, 40
      %v2024 = vpop.permute.xlu0 %2023
      %2025 = vrot.lane.b32.xlu0 %v1218, 40
      %v2026 = vpop.permute.xlu0 %2025
      %2027 = vrot.lane.b32.xlu0 %v1354, 40
      %v2028 = vpop.permute.xlu0 %2027
      %2029 = vrot.lane.b32.xlu0 %v1490, 40
      %v2030 = vpop.permute.xlu0 %2029
      %2031 = vrot.lane.b32.xlu0 %v1626, 40
      %v2032 = vpop.permute.xlu0 %2031
      %2033 = vrot.lane.b32.xlu0 %v1762, 40
      %v2034 = vpop.permute.xlu0 %2033
      %2035 = vrot.lane.b32.xlu0 %v1898, 40
      %v2036 = vpop.permute.xlu0 %2035
      %2055 = vrot.lane.b32.xlu0 %v811, 50
      %v2056 = vpop.permute.xlu0 %2055
      %2057 = vrot.lane.b32.xlu0 %v947, 50
      %v2058 = vpop.permute.xlu0 %2057
      %2059 = vrot.lane.b32.xlu0 %v1083, 50
      %v2060 = vpop.permute.xlu0 %2059
      %2061 = vrot.lane.b32.xlu0 %v1219, 50
      %v2062 = vpop.permute.xlu0 %2061
      %2063 = vrot.lane.b32.xlu0 %v1355, 50
      %v2064 = vpop.permute.xlu0 %2063
      %2065 = vrot.lane.b32.xlu0 %v1491, 50
      %v2066 = vpop.permute.xlu0 %2065
      %2067 = vrot.lane.b32.xlu0 %v1627, 50
      %v2068 = vpop.permute.xlu0 %2067
      %2069 = vrot.lane.b32.xlu0 %v1763, 50
      %v2070 = vpop.permute.xlu0 %2069
      %2071 = vrot.lane.b32.xlu0 %v1899, 50
      %v2072 = vpop.permute.xlu0 %2071
      %2091 = vrot.lane.b32.xlu0 %v812, 60
      %v2092 = vpop.permute.xlu0 %2091
      %2093 = vrot.lane.b32.xlu0 %v948, 60
      %v2094 = vpop.permute.xlu0 %2093
      %2095 = vrot.lane.b32.xlu0 %v1084, 60
      %v2096 = vpop.permute.xlu0 %2095
      %2097 = vrot.lane.b32.xlu0 %v1220, 60
      %v2098 = vpop.permute.xlu0 %2097
      %2099 = vrot.lane.b32.xlu0 %v1356, 60
      %v2100 = vpop.permute.xlu0 %2099
      %2101 = vrot.lane.b32.xlu0 %v1492, 60
      %v2102 = vpop.permute.xlu0 %2101
      %2103 = vrot.lane.b32.xlu0 %v1628, 60
      %v2104 = vpop.permute.xlu0 %2103
      %2105 = vrot.lane.b32.xlu0 %v1764, 60
      %v2106 = vpop.permute.xlu0 %2105
      %2107 = vrot.lane.b32.xlu0 %v1900, 60
      %v2108 = vpop.permute.xlu0 %2107
      %2127 = vrot.lane.b32.xlu0 %v813, 70
      %v2128 = vpop.permute.xlu0 %2127
      %2129 = vrot.lane.b32.xlu0 %v949, 70
      %v2130 = vpop.permute.xlu0 %2129
      %2131 = vrot.lane.b32.xlu0 %v1085, 70
      %v2132 = vpop.permute.xlu0 %2131
      %2133 = vrot.lane.b32.xlu0 %v1221, 70
      %v2134 = vpop.permute.xlu0 %2133
      %2135 = vrot.lane.b32.xlu0 %v1357, 70
      %v2136 = vpop.permute.xlu0 %2135
      %2137 = vrot.lane.b32.xlu0 %v1493, 70
      %v2138 = vpop.permute.xlu0 %2137
      %2139 = vrot.lane.b32.xlu0 %v1629, 70
      %v2140 = vpop.permute.xlu0 %2139
      %2141 = vrot.lane.b32.xlu0 %v1765, 70
      %v2142 = vpop.permute.xlu0 %2141
      %2143 = vrot.lane.b32.xlu0 %v1901, 70
      %v2144 = vpop.permute.xlu0 %2143
      %vm2154 = vcmask 80896
      %v2155 = vsel %vm2154, %v806, %v1912
      %v2156 = vsel %vm2154, %v942, %v1914
      %v2157 = vsel %vm2154, %v1078, %v1916
      %v2158 = vsel %vm2154, %v1214, %v1918
      %v2159 = vsel %vm2154, %v1350, %v1920
      %v2160 = vsel %vm2154, %v1486, %v1922
      %v2161 = vsel %vm2154, %v1622, %v1924
      %v2162 = vsel %vm2154, %v1758, %v1926
      %v2163 = vsel %vm2154, %v1894, %v1928
      %vm2164 = vcmask 162816
      %v2165 = vsel %vm2164, %v2155, %v1948
      %v2166 = vsel %vm2164, %v2156, %v1950
      %v2167 = vsel %vm2164, %v2157, %v1952
      %v2168 = vsel %vm2164, %v2158, %v1954
      %v2169 = vsel %vm2164, %v2159, %v1956
      %v2170 = vsel %vm2164, %v2160, %v1958
      %v2171 = vsel %vm2164, %v2161, %v1960
      %v2172 = vsel %vm2164, %v2162, %v1962
      %v2173 = vsel %vm2164, %v2163, %v1964
      %vm2174 = vcmask 244736
      %v2175 = vsel %vm2174, %v2165, %v1984
      %v2176 = vsel %vm2174, %v2166, %v1986
      %v2177 = vsel %vm2174, %v2167, %v1988
      %v2178 = vsel %vm2174, %v2168, %v1990
      %v2179 = vsel %vm2174, %v2169, %v1992
      %v2180 = vsel %vm2174, %v2170, %v1994
      %v2181 = vsel %vm2174, %v2171, %v1996
      %v2182 = vsel %vm2174, %v2172, %v1998
      %v2183 = vsel %vm2174, %v2173, %v2000
      %vm2184 = vcmask 326656
      %v2185 = vsel %vm2184, %v2175, %v2020
      %v2186 = vsel %vm2184, %v2176, %v2022
      %v2187 = vsel %vm2184, %v2177, %v2024
      %v2188 = vsel %vm2184, %v2178, %v2026
      %v2189 = vsel %vm2184, %v2179, %v2028
      %v2190 = vsel %vm2184, %v2180, %v2030
      %v2191 = vsel %vm2184, %v2181, %v2032
      %v2192 = vsel %vm2184, %v2182, %v2034
      %v2193 = vsel %vm2184, %v2183, %v2036
      %vm2194 = vcmask 408576
      %v2195 = vsel %vm2194, %v2185, %v2056
      %v2196 = vsel %vm2194, %v2186, %v2058
      %v2197 = vsel %vm2194, %v2187, %v2060
      %v2198 = vsel %vm2194, %v2188, %v2062
      %v2199 = vsel %vm2194, %v2189, %v2064
      %v2200 = vsel %vm2194, %v2190, %v2066
      %v2201 = vsel %vm2194, %v2191, %v2068
      %v2202 = vsel %vm2194, %v2192, %v2070
      %v2203 = vsel %vm2194, %v2193, %v2072
      %vm2204 = vcmask 490496
      %v2205 = vsel %vm2204, %v2195, %v2092
      %v2206 = vsel %vm2204, %v2196, %v2094
      %v2207 = vsel %vm2204, %v2197, %v2096
      %v2208 = vsel %vm2204, %v2198, %v2098
      %v2209 = vsel %vm2204, %v2199, %v2100
      %v2210 = vsel %vm2204, %v2200, %v2102
      %v2211 = vsel %vm2204, %v2201, %v2104
      %v2212 = vsel %vm2204, %v2202, %v2106
      %v2213 = vsel %vm2204, %v2203, %v2108
      %vm2214 = vcmask 572416
      %v2215 = vsel %vm2214, %v2205, %v2128
      %v2216 = vsel %vm2214, %v2206, %v2130
      %v2217 = vsel %vm2214, %v2207, %v2132
      %v2218 = vsel %vm2214, %v2208, %v2134
      %v2219 = vsel %vm2214, %v2209, %v2136
      %v2220 = vsel %vm2214, %v2210, %v2138
      %v2221 = vsel %vm2214, %v2211, %v2140
      %v2222 = vsel %vm2214, %v2212, %v2142
      %v2223 = vsel %vm2214, %v2213, %v2144
      %2225 = vset.pattern.permute.xlu0 0
      %2226 = vperm.xlu0 %2225, %v410
      %v2227 = vpop.permute.xlu0 %2226
      %vm2229 = vcmask 588800
      %v2231 = vsel %vm2229, %v409, 0
      %2233 = vmatprep.subr.mxu0 0.0
      %2234 = vmatpush1.msra.mxu0 0.0
      %2235 = vmatprep.subr.mxu0 0.0
      %2236 = vmatpush1.msra.mxu0 0.0
      %2237 = vmatprep.subr.mxu0 0.0
      %2238 = vmatpush1.msra.mxu0 0.0
      %2239 = vmatprep.subr.mxu0 0.0
      %2240 = vmatpush1.msra.mxu0 0.0
      %2241 = vmatprep.subr.mxu0 0.0
      %2242 = vmatpush1.msra.mxu0 0.0
      %2243 = vmatprep.subr.mxu0 0.0
      %2244 = vmatpush1.msra.mxu0 0.0
      %2245 = vmatprep.subr.mxu0 0.0
      %2246 = vmatpush1.msra.mxu0 0.0
      %2247 = vmatprep.subr.mxu0 0.0
      %2248 = vmatpush1.msra.mxu0 %v2223
      %2249 = vmatprep.subr.mxu0 0.0
      %2250 = vmatpush1.msra.mxu0 %v2222
      %2251 = vmatprep.subr.mxu0 0.0
      %2252 = vmatpush1.msra.mxu0 %v2221
      %2253 = vmatprep.subr.mxu0 0.0
      %2254 = vmatpush1.msra.mxu0 %v2220
      %2255 = vmatprep.subr.mxu0 0.0
      %2256 = vmatpush1.msra.mxu0 %v2219
      %2257 = vmatprep.subr.mxu0 0.0
      %2258 = vmatpush1.msra.mxu0 %v2218
      %2259 = vmatprep.subr.mxu0 0.0
      %2260 = vmatpush1.msra.mxu0 %v2217
      %2261 = vmatprep.subr.mxu0 0.0
      %2262 = vmatpush1.msra.mxu0 %v2216
      %2263 = vmatprep.subr.mxu0 0.0
      %2264 = vmatpush1.msra.mxu0 %v2215
      %2265 = vmatprep.subr.mxu0 0.0
      %2266 = vmatpush2.msra.mxu0 0.0
      %2267 = vmatprep.subr.mxu0 0.0
      %2268 = vmatpush2.msra.mxu0 0.0
      %2269 = vmatprep.subr.mxu0 0.0
      %2270 = vmatpush2.msra.mxu0 0.0
      %2271 = vmatprep.subr.mxu0 0.0
      %2272 = vmatpush2.msra.mxu0 0.0
      %2273 = vmatprep.subr.mxu0 0.0
      %2274 = vmatpush2.msra.mxu0 0.0
      %2275 = vmatprep.subr.mxu0 0.0
      %2276 = vmatpush2.msra.mxu0 0.0
      %2277 = vmatprep.subr.mxu0 0.0
      %2278 = vmatpush2.msra.mxu0 0.0
      %2279 = vmatprep.subr.mxu0 0.0
      %2280 = vmatpush2.msra.mxu0 0.0
      %2281 = vmatprep.subr.mxu0 0.0
      %2282 = vmatpush2.msra.mxu0 0.0
      %2283 = vmatprep.subr.mxu0 0.0
      %2284 = vmatpush2.msra.mxu0 0.0
      %2285 = vmatprep.subr.mxu0 0.0
      %2286 = vmatpush2.msra.mxu0 0.0
      %2287 = vmatprep.subr.mxu0 0.0
      %2288 = vmatpush2.msra.mxu0 0.0
      %2289 = vmatprep.subr.mxu0 0.0
      %2290 = vmatpush2.msra.mxu0 0.0
      %2291 = vmatprep.subr.mxu0 0.0
      %2292 = vmatpush2.msra.mxu0 0.0
      %2293 = vmatprep.subr.mxu0 0.0
      %2294 = vmatpush2.msra.mxu0 0.0
      %2295 = vmatprep.subr.mxu0 0.0
      %2296 = vmatpush2.msra.mxu0 0.0
      %2297 = vmatprep.mubr.f32.mxu0 0.0
      %2298 = vmatmul.mubr.f32.gmra.mxu0 %v2231
      %v2299 = vpop.f32.mrf.mxu0
      %v2300 = vadd.f32 %v2227, %v2299
      %v2301 = vpop.f32.mrf.mxu0
      %2302 = vdwg.mxu0
      %v2303 = vld [vmem:[%s287] sm:$0xff]
      %v2304 = vld [vmem:[%s287 + $0x8] sm:$0xff]
      %v2305 = vld [vmem:[%s287 + $0x10] sm:$0xff]
      %v2306 = vld [vmem:[%s287 + $0x18] sm:$0xff]
      %v2307 = vcombine.low %v2303, %v2305
      %v2308 = vcombine.high %v2303, %v2305
      %v2310 = vunpack.c.l.s4 1983009808
      %v2311 = vunpack.c.0.s8 %v2310
      %v2312 = vlaneseq
      %v2313 = vshrl.u32 %v2312, 7
      %v2314 = vsub.s32 %v2311, %v2313
      %v2315 = vrot.slane %v2307, %v2314
      %v2317 = vunpack.c.l.s4 1983009808
      %v2318 = vunpack.c.0.s8 %v2317
      %v2319 = vlaneseq
      %v2320 = vshrl.u32 %v2319, 7
      %v2321 = vsub.s32 %v2318, %v2320
      %v2322 = vrot.slane %v2308, %v2321
      %v2323 = vcombine.low %v2304, %v2306
      %v2324 = vcombine.high %v2304, %v2306
      %v2326 = vunpack.c.l.s4 1983009808
      %v2327 = vunpack.c.0.s8 %v2326
      %v2328 = vlaneseq
      %v2329 = vshrl.u32 %v2328, 7
      %v2330 = vsub.s32 %v2327, %v2329
      %v2331 = vrot.slane %v2323, %v2330
      %v2333 = vunpack.c.l.s4 1983009808
      %v2334 = vunpack.c.0.s8 %v2333
      %v2335 = vlaneseq
      %v2336 = vshrl.u32 %v2335, 7
      %v2337 = vsub.s32 %v2334, %v2336
      %v2338 = vrot.slane %v2324, %v2337
      %v2339 = vcombine.low %v2315, %v2331
      %v2340 = vcombine.high %v2315, %v2331
      %v2342 = vunpack.c.l.s4 1934713408
      %v2343 = vunpack.c.0.s8 %v2342
      %v2344 = vlaneseq
      %v2345 = vshrl.u32 %v2344, 7
      %v2346 = vsub.s32 %v2343, %v2345
      %v2347 = vrot.slane %v2339, %v2346
      %v2349 = vunpack.c.l.s4 1934713408
      %v2350 = vunpack.c.0.s8 %v2349
      %v2351 = vlaneseq
      %v2352 = vshrl.u32 %v2351, 7
      %v2353 = vsub.s32 %v2350, %v2352
      %v2354 = vrot.slane %v2340, %v2353
      %v2355 = vcombine.low %v2322, %v2338
      %v2356 = vcombine.high %v2322, %v2338
      %v2358 = vunpack.c.l.s4 1934713408
      %v2359 = vunpack.c.0.s8 %v2358
      %v2360 = vlaneseq
      %v2361 = vshrl.u32 %v2360, 7
      %v2362 = vsub.s32 %v2359, %v2361
      %v2363 = vrot.slane %v2355, %v2362
      %v2365 = vunpack.c.l.s4 1934713408
      %v2366 = vunpack.c.0.s8 %v2365
      %v2367 = vlaneseq
      %v2368 = vshrl.u32 %v2367, 7
      %v2369 = vsub.s32 %v2366, %v2368
      %v2370 = vrot.slane %v2356, %v2369
      %v2371 = vcombine.high %v2347, 0.0
      %v2372 = vcombine.high %v2354, 0.0
      %v2373 = vcombine.high %v2363, 0.0
      %v2374 = vcombine.high %v2370, 0.0
      %2376 = vrot.lane.b32.xlu0 %v2371, 10
      %v2377 = vpop.permute.xlu0 %2376
      %2380 = vrot.lane.b32.xlu0 %v2354, 20
      %v2381 = vpop.permute.xlu0 %2380
      %2384 = vrot.lane.b32.xlu0 %v2372, 30
      %v2385 = vpop.permute.xlu0 %2384
      %2388 = vrot.lane.b32.xlu0 %v2363, 40
      %v2389 = vpop.permute.xlu0 %2388
      %2392 = vrot.lane.b32.xlu0 %v2373, 50
      %v2393 = vpop.permute.xlu0 %2392
      %2396 = vrot.lane.b32.xlu0 %v2370, 60
      %v2397 = vpop.permute.xlu0 %2396
      %2400 = vrot.lane.b32.xlu0 %v2374, 70
      %v2401 = vpop.permute.xlu0 %2400
      %v2403 = vsel %vm2154, %v2347, %v2377
      %v2404 = vsel %vm2164, %v2403, %v2381
      %v2405 = vsel %vm2174, %v2404, %v2385
      %v2406 = vsel %vm2184, %v2405, %v2389
      %v2407 = vsel %vm2194, %v2406, %v2393
      %v2408 = vsel %vm2204, %v2407, %v2397
      %v2409 = vsel %vm2214, %v2408, %v2401
      %v2410 = vld [vmem:[%s6] sm:$0xff]
      %vm2411 = vcmask 31744
      %v2413 = vsel %vm2411, %v2410, 0
      %vm2415 = vcmask 1043456
      %v2417 = vsel %vm2415, %v2409, 0
      %2419 = vmatprep.subr.mxu0 0.0
      %2420 = vmatpush1.msra.mxu0 0.0
      %2421 = vmatprep.subr.mxu0 0.0
      %2422 = vmatpush1.msra.mxu0 0.0
      %2423 = vmatprep.subr.mxu0 0.0
      %2424 = vmatpush1.msra.mxu0 0.0
      %2425 = vmatprep.subr.mxu0 0.0
      %2426 = vmatpush1.msra.mxu0 0.0
      %2427 = vmatprep.subr.mxu0 0.0
      %2428 = vmatpush1.msra.mxu0 0.0
      %2429 = vmatprep.subr.mxu0 0.0
      %2430 = vmatpush1.msra.mxu0 0.0
      %2431 = vmatprep.subr.mxu0 0.0
      %2432 = vmatpush1.msra.mxu0 0.0
      %2433 = vmatprep.subr.mxu0 0.0
      %2434 = vmatpush1.msra.mxu0 0.0
      %2435 = vmatprep.subr.mxu0 0.0
      %2436 = vmatpush1.msra.mxu0 0.0
      %2437 = vmatprep.subr.mxu0 0.0
      %2438 = vmatpush1.msra.mxu0 0.0
      %2439 = vmatprep.subr.mxu0 0.0
      %2440 = vmatpush1.msra.mxu0 0.0
      %2441 = vmatprep.subr.mxu0 0.0
      %2442 = vmatpush1.msra.mxu0 0.0
      %2443 = vmatprep.subr.mxu0 0.0
      %2444 = vmatpush1.msra.mxu0 0.0
      %2445 = vmatprep.subr.mxu0 0.0
      %2446 = vmatpush1.msra.mxu0 0.0
      %2447 = vmatprep.subr.mxu0 0.0
      %2448 = vmatpush1.msra.mxu0 0.0
      %2449 = vmatprep.subr.mxu0 0.0
      %2450 = vmatpush1.msra.mxu0 %v2417
      %2451 = vmatprep.subr.mxu0 0.0
      %2452 = vmatpush2.msra.mxu0 0.0
      %2453 = vmatprep.subr.mxu0 0.0
      %2454 = vmatpush2.msra.mxu0 0.0
      %2455 = vmatprep.subr.mxu0 0.0
      %2456 = vmatpush2.msra.mxu0 0.0
      %2457 = vmatprep.subr.mxu0 0.0
      %2458 = vmatpush2.msra.mxu0 0.0
      %2459 = vmatprep.subr.mxu0 0.0
      %2460 = vmatpush2.msra.mxu0 0.0
      %2461 = vmatprep.subr.mxu0 0.0
      %2462 = vmatpush2.msra.mxu0 0.0
      %2463 = vmatprep.subr.mxu0 0.0
      %2464 = vmatpush2.msra.mxu0 0.0
      %2465 = vmatprep.subr.mxu0 0.0
      %2466 = vmatpush2.msra.mxu0 0.0
      %2467 = vmatprep.subr.mxu0 0.0
      %2468 = vmatpush2.msra.mxu0 0.0
      %2469 = vmatprep.subr.mxu0 0.0
      %2470 = vmatpush2.msra.mxu0 0.0
      %2471 = vmatprep.subr.mxu0 0.0
      %2472 = vmatpush2.msra.mxu0 0.0
      %2473 = vmatprep.subr.mxu0 0.0
      %2474 = vmatpush2.msra.mxu0 0.0
      %2475 = vmatprep.subr.mxu0 0.0
      %2476 = vmatpush2.msra.mxu0 0.0
      %2477 = vmatprep.subr.mxu0 0.0
      %2478 = vmatpush2.msra.mxu0 0.0
      %2479 = vmatprep.subr.mxu0 0.0
      %2480 = vmatpush2.msra.mxu0 0.0
      %2481 = vmatprep.subr.mxu0 0.0
      %2482 = vmatpush2.msra.mxu0 0.0
      %2483 = vmatprep.mubr.f32.mxu0 0.0
      %2484 = vmatmul.mubr.f32.gmra.mxu0 %v2413
      %v2485 = vpop.f32.mrf.mxu0
      %v2486 = vadd.f32 0.0, %v2485
      %v2487 = vpop.f32.mrf.mxu0
      %2488 = vdwg.mxu0
      %v2489 = vadd.f32 %v2300, %v2486
      %vm2490 = vcmask 654336
      %2491 = vst.msk [vmem:[%s296] sm:$0xff] %vm2490, %v2489
      %p2492 = scmp.lt.s32.totalorder %s18, 1
      %s2493 = scalar_select %p2492, %s18, 1
      %s2494 = smul.addr %s2493, 8
      %s2495 = scalar_lea.vmem %s7, %s2494
      // Predicated region
      $region49: #{resblock_pallas.5} parent=47 // pred_check
        %p2496 = pneg %p193
      $region50: #{resblock_pallas.5} parent=47 // pred_check_branch
        %2498 = sbr.rel (%p2496) target = $region52
      $region51: #{resblock_pallas.5} parent=47 // pred_region
        _
      $region52: #{resblock_pallas.5} parent=47 // pred_fallthru
        _
    $region48: #{resblock_pallas.5} parent=5 // pred_fallthru
      _
    %p2499 = scmp.le.s32.totalorder 2, %s13
    // Predicated region
    $region53: #{resblock_pallas.5} parent=5 // pred_check
      %p2500 = pneg %p2499
    $region54: #{resblock_pallas.5} parent=5 // pred_check_branch
      %2502 = sbr.rel (%p2500) target = $region56
    $region55: #{resblock_pallas.5} parent=5 // pred_region
      %s2503 = ssub.s32 %s13, 2
      // Predicated region
      $region57: #{resblock_pallas.5} parent=55 // pred_check
        %p2504 = pneg %p199
      $region58: #{resblock_pallas.5} parent=55 // pred_check_branch
        %2506 = sbr.rel (%p2504) target = $region60
      $region59: #{resblock_pallas.5} parent=55 // pred_region
        %p2507 = scmp.lt.s32.totalorder %s19, 1
        %s2508 = scalar_select %p2507, %s19, 1
        %s2509 = smul.addr %s2508, 8
        %s2510 = scalar_lea.vmem %s7, %s2509
      $region60: #{resblock_pallas.5} parent=55 // pred_fallthru
        _
    $region56: #{resblock_pallas.5} parent=5 // pred_fallthru
      _
  $region6: #{resblock_pallas.5} parent=0 // loop_footer
    %s17 = sadd.s32 1, %s13
  $region7: #{resblock_pallas.5} parent=0 // loop_footer_branch
    %12 = sbr.rel target = $region3
  $region8: #{resblock_pallas.5} parent=0 // loop_exit
    _

</llo_original>
